<compile_context>
chip_gen: v7x
topology: tpu7x:2x2x1
jax: 0.10.0
libtpu: 0.0.40
codegen_flags: <defaults>
</compile_context>

<pallas_src>
import functools

import jax
import jax.numpy as jnp
from jax.experimental import pallas as pl
from jax.experimental.pallas import tpu as pltpu


def _round_up(x, m):
    return ((x + m - 1) // m) * m


def down_block_kernel(x_ref, w1_ref, b1_ref, w2_ref, b2_ref, mask_ref,
                      o_ref, p1_ref, p2_ref, patch_ref,
                      *, Hp, Wp, Cin, Cout, Nb):
    """Processes Nb images per grid step.

    x_ref    : (Nb, Hp, 2, Wp, 2*Cin)  raw input (2x2 pool window on dims 2 / last)
    w1_ref   : (9*Cin, Cout)   im2col-packed conv1 weights (BN scale folded in)
    b1_ref   : (1, Cout)       conv1 bias folded through BN
    w2_ref   : (9, Cout, Cout) per-tap conv2 weights (BN scale folded in)
    b2_ref   : (1, Cout)
    mask_ref : (L, 1)          1.0 on rows that are real conv outputs, else 0.0
    o_ref    : (1, L, Cout)    flat output rows (garbage rows sliced off in wrapper)
    p1_ref   : (R, Cin)        flat zero-padded pooled input   (persistent scratch)
    p2_ref   : (R, Cout)       flat zero-padded conv1 output   (persistent scratch)
    patch_ref: (L, 9*Cin)      im2col patch matrix             (scratch)
    """
    Wc = Wp + 2                 # padded row width
    Ci = (Hp + 2) * Wc          # flat rows per image (incl. halo)
    L = Nb * Ci

    # Halo rows/columns are never written inside the step loop, so zero them once.
    @pl.when(pl.program_id(0) == 0)
    def _init():
        p1_ref[...] = jnp.zeros_like(p1_ref)
        p2_ref[...] = jnp.zeros_like(p2_ref)

    # ---- fused MaxPool2d(2) + embedding into the padded flat buffer p1 ----
    for b in range(Nb):
        for y in range(Hp):
            m = jnp.maximum(x_ref[b, y, 0], x_ref[b, y, 1])        # (Wp, 2*Cin)
            row = jnp.maximum(m[:, :Cin], m[:, Cin:])              # (Wp, Cin)
            base = b * Ci + (y + 1) * Wc + 1
            p1_ref[base:base + Wp, :] = row

    # ---- conv1 (3x3, pad=1): single im2col matmul over the whole block ----
    for t in range(9):
        dy, dx = divmod(t, 3)
        off = dy * Wc + dx
        patch_ref[:, t * Cin:(t + 1) * Cin] = p1_ref[off:off + L, :]
    h1 = jnp.dot(patch_ref[...], w1_ref[...], preferred_element_type=jnp.float32)
    h1 = jnp.maximum(h1 + b1_ref[...], 0.0) * mask_ref[...]
    # Shifted masked store re-embeds the conv1 output into p2's padded interior
    # (masked rows write zeros into p2's halo columns / halo chunks).
    p2_ref[Wp + 3:Wp + 3 + L, :] = h1

    # ---- conv2 (3x3, pad=1): 9 whole-block matmuls accumulated in f32 ----
    acc = jnp.dot(p2_ref[0:L, :], w2_ref[0], preferred_element_type=jnp.float32)
    for t in range(1, 9):
        dy, dx = divmod(t, 3)
        off = dy * Wc + dx
        acc = acc + jnp.dot(p2_ref[off:off + L, :], w2_ref[t],
                            preferred_element_type=jnp.float32)
    o_ref[0] = jnp.maximum(acc + b2_ref[...], 0.0).astype(o_ref.dtype)


def down_forward(x_nchw, params, images_per_block=2):
    w1, s1, b1, w2, s2, b2 = params
    N, Cin, H, W = x_nchw.shape
    assert H % 2 == 0 and W % 2 == 0
    Hp, Wp = H // 2, W // 2
    Cout = w1.shape[-1]

    # Largest divisor of N not exceeding images_per_block (size to VMEM for big shapes).
    Nb = 1
    for d in range(1, min(N, images_per_block) + 1):
        if N % d == 0:
            Nb = d
    G = N // Nb

    Wc = Wp + 2
    Ci = (Hp + 2) * Wc
    L = Nb * Ci
    R = _round_up(L + 2 * Wc + 2, 8)

    # NCHW -> NHWC boundary transpose, then a metadata-only reshape exposing the
    # 2x2 pooling window (no extra HBM pass for pooling views).
    x = jnp.transpose(x_nchw, (0, 2, 3, 1)).astype(jnp.float32)
    x = x.reshape(N, Hp, 2, Wp, 2 * Cin)

    # Fold the BN scale into the conv weights once; only bias + ReLU stay in-kernel.
    w1f = (w1 * s1).reshape(9 * Cin, Cout).astype(jnp.float32)     # (9*Cin, Cout)
    w2f = (w2 * s2).reshape(9, Cout, Cout).astype(jnp.float32)     # (9, Cout, Cout)
    b1f = b1.reshape(1, Cout).astype(jnp.float32)
    b2f = b2.reshape(1, Cout).astype(jnp.float32)

    # Validity mask for the flat conv rows (1 = real output position).
    k = jnp.arange(L, dtype=jnp.int32)
    r = k % Ci
    valid = (r < Hp * Wc) & ((r % Wc) < Wp)
    mask = valid.astype(jnp.float32).reshape(L, 1)

    kernel = functools.partial(down_block_kernel,
                               Hp=Hp, Wp=Wp, Cin=Cin, Cout=Cout, Nb=Nb)

    grid_spec = pltpu.PrefetchScalarGridSpec(
        num_scalar_prefetch=0,
        grid=(G,),
        in_specs=[
            pl.BlockSpec((Nb, Hp, 2, Wp, 2 * Cin), lambda g: (g, 0, 0, 0, 0)),
            pl.BlockSpec((9 * Cin, Cout), lambda g: (0, 0)),
            pl.BlockSpec((1, Cout), lambda g: (0, 0)),
            pl.BlockSpec((9, Cout, Cout), lambda g: (0, 0, 0)),
            pl.BlockSpec((1, Cout), lambda g: (0, 0)),
            pl.BlockSpec((L, 1), lambda g: (0, 0)),
        ],
        out_specs=pl.BlockSpec((1, L, Cout), lambda g: (g, 0, 0)),
        scratch_shapes=[
            pltpu.VMEM((R, Cin), jnp.float32),        # p1: padded pooled input
            pltpu.VMEM((R, Cout), jnp.float32),       # p2: padded conv1 output
            pltpu.VMEM((L, 9 * Cin), jnp.float32),    # im2col patch matrix
        ],
    )

    out_flat = pl.pallas_call(
        kernel,
        out_shape=jax.ShapeDtypeStruct((G, L, Cout), jnp.float32),
        grid_spec=grid_spec,
        # "arbitrary": persistent zero-halo scratch is initialized at program_id==0.
        compiler_params=pltpu.CompilerParams(dimension_semantics=("arbitrary",)),
    )(x, w1f, b1f, w2f, b2f, mask)

    # (G, L, Cout) -> (N, Hp+2, Wp+2, Cout): drop garbage halo rows/cols, go NCHW.
    out = out_flat.reshape(N, Hp + 2, Wp + 2, Cout)[:, :Hp, :Wp, :]
    return jnp.transpose(out, (0, 3, 1, 2))


def init_down_params(key, in_ch, out_ch):
    """Deterministic synthetic parameters (conv weights HWIO, BN folded, inference mode)."""
    k1, k2, k3, k4 = jax.random.split(key, 4)
    w1 = jax.random.normal(k1, (3, 3, in_ch, out_ch), jnp.float32) * 0.2
    cb1 = jax.random.normal(k2, (out_ch,), jnp.float32) * 0.1
    w2 = jax.random.normal(k3, (3, 3, out_ch, out_ch), jnp.float32) * 0.2
    cb2 = jax.random.normal(k4, (out_ch,), jnp.float32) * 0.1

    r = jnp.arange(out_ch, dtype=jnp.float32)
    gamma1, beta1 = 1.0 + 0.05 * r, 0.02 * r - 0.1
    mean1, var1 = 0.01 * r, 1.0 + 0.03 * r
    gamma2, beta2 = 1.0 - 0.03 * r, 0.01 * r + 0.05
    mean2, var2 = -0.02 * r, 1.0 + 0.02 * r
    eps = 1e-5

    s1 = gamma1 / jnp.sqrt(var1 + eps)
    b1 = beta1 + s1 * (cb1 - mean1)      # conv bias folded through BN
    s2 = gamma2 / jnp.sqrt(var2 + eps)
    b2 = beta2 + s2 * (cb2 - mean2)
    return (w1, s1, b1, w2, s2, b2)


def down_reference(x_nchw, params):
    """Plain-JAX reference (same math, no Pallas) for a correctness check."""
    w1, s1, b1, w2, s2, b2 = params
    x = jnp.transpose(x_nchw, (0, 2, 3, 1)).astype(jnp.float32)
    p = jax.lax.reduce_window(x, -jnp.inf, jax.lax.max,
                              (1, 2, 2, 1), (1, 2, 2, 1), 'VALID')
    dn = ('NHWC', 'HWIO', 'NHWC')
    y = jax.lax.conv_general_dilated(p, w1, (1, 1), 'SAME',
                                     dimension_numbers=dn,
                                     precision=jax.lax.Precision.HIGHEST)
    y = jnp.maximum(y * s1 + b1, 0.0)
    y = jax.lax.conv_general_dilated(y, w2, (1, 1), 'SAME',
                                     dimension_numbers=dn,
                                     precision=jax.lax.Precision.HIGHEST)
    y = jnp.maximum(y * s2 + b2, 0.0)
    return jnp.transpose(y, (0, 3, 1, 2))


if __name__ == "__main__":
    key = jax.random.PRNGKey(0)
    kx, kp = jax.random.split(key)

    N, Cin, H, W, Cout = 2, 4, 16, 16, 8          # Down(in_ch=4, out_ch=8)
    x = jax.random.normal(kx, (N, Cin, H, W), jnp.float32)
    params = init_down_params(kp, Cin, Cout)

    out = jax.block_until_ready(down_forward(x, params))
    ref = jax.block_until_ready(down_reference(x, params))

    assert out.shape == (N, Cout, H // 2, W // 2), out.shape
    if not bool(jnp.allclose(out, ref, atol=1e-3, rtol=1e-3)):
        max_err = float(jnp.max(jnp.abs(out - ref)))
        raise AssertionError(f"mismatch vs reference, max abs err = {max_err}")
    print("KERNEL_OK")
</pallas_src>

<mosaic_0001>
module attributes {stable_mosaic.version = 11 : i64} {
  func.func @down_block_kernel(%arg0: i32, %arg1: memref<2x8x2x8x8xf32, #tpu.memory_space<vmem>>, %arg2: memref<36x8xf32, #tpu.memory_space<vmem>>, %arg3: memref<1x8xf32, #tpu.memory_space<vmem>>, %arg4: memref<9x8x8xf32, #tpu.memory_space<vmem>>, %arg5: memref<1x8xf32, #tpu.memory_space<vmem>>, %arg6: memref<200x1xf32, #tpu.memory_space<vmem>>, %arg7: memref<1x200x8xf32, #tpu.memory_space<vmem>>, %arg8: memref<224x4xf32, #tpu.memory_space<vmem>>, %arg9: memref<224x8xf32, #tpu.memory_space<vmem>>, %arg10: memref<200x36xf32, #tpu.memory_space<vmem>>) attributes {dimension_semantics = [#tpu.dimension_semantics<arbitrary>], iteration_bounds = array<i64: 1>, scalar_prefetch = 0 : i64, scratch_operands = 3 : i64, tpu.core_type = #tpu.core_type<tc>, window_params = [{transform_indices = @transform_0, window_bounds = array<i64: 2, 8, 2, 8, 8>}, {pipeline_mode = #tpu.pipeline_mode<synchronous>, transform_indices = @transform_1, window_bounds = array<i64: 36, 8>}, {pipeline_mode = #tpu.pipeline_mode<synchronous>, transform_indices = @transform_2, window_bounds = array<i64: 1, 8>}, {pipeline_mode = #tpu.pipeline_mode<synchronous>, transform_indices = @transform_3, window_bounds = array<i64: 9, 8, 8>}, {pipeline_mode = #tpu.pipeline_mode<synchronous>, transform_indices = @transform_4, window_bounds = array<i64: 1, 8>}, {pipeline_mode = #tpu.pipeline_mode<synchronous>, transform_indices = @transform_5, window_bounds = array<i64: 200, 1>}, {transform_indices = @transform_6, window_bounds = array<i64: 1, 200, 8>}]} {
    %c0_i32 = arith.constant 0 : i32
    %0 = arith.cmpi eq, %arg0, %c0_i32 : i32
    %1 = arith.extui %0 : i1 to i32
    %c0_i32_0 = arith.constant 0 : i32
    %2 = arith.cmpi ne, %1, %c0_i32_0 : i32
    scf.if %2 {
      %cst_267 = arith.constant 0.000000e+00 : f32
      %229 = vector.broadcast %cst_267 : f32 to vector<224x4xf32>
      %c0_268 = arith.constant 0 : index
      %c0_269 = arith.constant 0 : index
      %230 = vector.load %arg8[%c0_268, %c0_269] : memref<224x4xf32, #tpu.memory_space<vmem>>, vector<224x4xf32>
      tpu.vector_store %arg8[%c0_268, %c0_269], %229 {strides = array<i32>} : memref<224x4xf32, #tpu.memory_space<vmem>>, vector<224x4xf32>,
      %cst_270 = arith.constant 0.000000e+00 : f32
      %231 = vector.broadcast %cst_270 : f32 to vector<224x8xf32>
      %c0_271 = arith.constant 0 : index
      %c0_272 = arith.constant 0 : index
      %232 = vector.load %arg9[%c0_271, %c0_272] : memref<224x8xf32, #tpu.memory_space<vmem>>, vector<224x8xf32>
      tpu.vector_store %arg9[%c0_271, %c0_272], %231 {strides = array<i32>} : memref<224x8xf32, #tpu.memory_space<vmem>>, vector<224x8xf32>,
    } else {
    }
    %c0 = arith.constant 0 : index
    %c0_1 = arith.constant 0 : index
    %c0_2 = arith.constant 0 : index
    %c0_3 = arith.constant 0 : index
    %c0_4 = arith.constant 0 : index
    %3 = vector.load %arg1[%c0, %c0_1, %c0_2, %c0_3, %c0_4] : memref<2x8x2x8x8xf32, #tpu.memory_space<vmem>>, vector<1x1x1x8x8xf32>
    %4 = vector.shape_cast %3 : vector<1x1x1x8x8xf32> to vector<8x8xf32>
    %c0_5 = arith.constant 0 : index
    %c0_6 = arith.constant 0 : index
    %c1 = arith.constant 1 : index
    %c0_7 = arith.constant 0 : index
    %c0_8 = arith.constant 0 : index
    %5 = vector.load %arg1[%c0_5, %c0_6, %c1, %c0_7, %c0_8] : memref<2x8x2x8x8xf32, #tpu.memory_space<vmem>>, vector<1x1x1x8x8xf32>
    %6 = vector.shape_cast %5 : vector<1x1x1x8x8xf32> to vector<8x8xf32>
    %7 = arith.maximumf %4, %6 : vector<8x8xf32>
    %8 = vector.extract_strided_slice %7 {offsets = [0, 0], sizes = [8, 4], strides = [1, 1]} : vector<8x8xf32> to vector<8x4xf32>
    %9 = vector.extract_strided_slice %7 {offsets = [0, 4], sizes = [8, 4], strides = [1, 1]} : vector<8x8xf32> to vector<8x4xf32>
    %10 = arith.maximumf %8, %9 : vector<8x4xf32>
    %c11 = arith.constant 11 : index
    %c0_9 = arith.constant 0 : index
    %11 = vector.load %arg8[%c11, %c0_9] : memref<224x4xf32, #tpu.memory_space<vmem>>, vector<8x4xf32>
    tpu.vector_store %arg8[%c11, %c0_9], %10 {strides = array<i32>} : memref<224x4xf32, #tpu.memory_space<vmem>>, vector<8x4xf32>,
    %c0_10 = arith.constant 0 : index
    %c1_11 = arith.constant 1 : index
    %c0_12 = arith.constant 0 : index
    %c0_13 = arith.constant 0 : index
    %c0_14 = arith.constant 0 : index
    %12 = vector.load %arg1[%c0_10, %c1_11, %c0_12, %c0_13, %c0_14] : memref<2x8x2x8x8xf32, #tpu.memory_space<vmem>>, vector<1x1x1x8x8xf32>
    %13 = vector.shape_cast %12 : vector<1x1x1x8x8xf32> to vector<8x8xf32>
    %c0_15 = arith.constant 0 : index
    %c1_16 = arith.constant 1 : index
    %c1_17 = arith.constant 1 : index
    %c0_18 = arith.constant 0 : index
    %c0_19 = arith.constant 0 : index
    %14 = vector.load %arg1[%c0_15, %c1_16, %c1_17, %c0_18, %c0_19] : memref<2x8x2x8x8xf32, #tpu.memory_space<vmem>>, vector<1x1x1x8x8xf32>
    %15 = vector.shape_cast %14 : vector<1x1x1x8x8xf32> to vector<8x8xf32>
    %16 = arith.maximumf %13, %15 : vector<8x8xf32>
    %17 = vector.extract_strided_slice %16 {offsets = [0, 0], sizes = [8, 4], strides = [1, 1]} : vector<8x8xf32> to vector<8x4xf32>
    %18 = vector.extract_strided_slice %16 {offsets = [0, 4], sizes = [8, 4], strides = [1, 1]} : vector<8x8xf32> to vector<8x4xf32>
    %19 = arith.maximumf %17, %18 : vector<8x4xf32>
    %c21 = arith.constant 21 : index
    %c0_20 = arith.constant 0 : index
    %20 = vector.load %arg8[%c21, %c0_20] : memref<224x4xf32, #tpu.memory_space<vmem>>, vector<8x4xf32>
    tpu.vector_store %arg8[%c21, %c0_20], %19 {strides = array<i32>} : memref<224x4xf32, #tpu.memory_space<vmem>>, vector<8x4xf32>,
    %c0_21 = arith.constant 0 : index
    %c2 = arith.constant 2 : index
    %c0_22 = arith.constant 0 : index
    %c0_23 = arith.constant 0 : index
    %c0_24 = arith.constant 0 : index
    %21 = vector.load %arg1[%c0_21, %c2, %c0_22, %c0_23, %c0_24] : memref<2x8x2x8x8xf32, #tpu.memory_space<vmem>>, vector<1x1x1x8x8xf32>
    %22 = vector.shape_cast %21 : vector<1x1x1x8x8xf32> to vector<8x8xf32>
    %c0_25 = arith.constant 0 : index
    %c2_26 = arith.constant 2 : index
    %c1_27 = arith.constant 1 : index
    %c0_28 = arith.constant 0 : index
    %c0_29 = arith.constant 0 : index
    %23 = vector.load %arg1[%c0_25, %c2_26, %c1_27, %c0_28, %c0_29] : memref<2x8x2x8x8xf32, #tpu.memory_space<vmem>>, vector<1x1x1x8x8xf32>
    %24 = vector.shape_cast %23 : vector<1x1x1x8x8xf32> to vector<8x8xf32>
    %25 = arith.maximumf %22, %24 : vector<8x8xf32>
    %26 = vector.extract_strided_slice %25 {offsets = [0, 0], sizes = [8, 4], strides = [1, 1]} : vector<8x8xf32> to vector<8x4xf32>
    %27 = vector.extract_strided_slice %25 {offsets = [0, 4], sizes = [8, 4], strides = [1, 1]} : vector<8x8xf32> to vector<8x4xf32>
    %28 = arith.maximumf %26, %27 : vector<8x4xf32>
    %c31 = arith.constant 31 : index
    %c0_30 = arith.constant 0 : index
    %29 = vector.load %arg8[%c31, %c0_30] : memref<224x4xf32, #tpu.memory_space<vmem>>, vector<8x4xf32>
    tpu.vector_store %arg8[%c31, %c0_30], %28 {strides = array<i32>} : memref<224x4xf32, #tpu.memory_space<vmem>>, vector<8x4xf32>,
    %c0_31 = arith.constant 0 : index
    %c3 = arith.constant 3 : index
    %c0_32 = arith.constant 0 : index
    %c0_33 = arith.constant 0 : index
    %c0_34 = arith.constant 0 : index
    %30 = vector.load %arg1[%c0_31, %c3, %c0_32, %c0_33, %c0_34] : memref<2x8x2x8x8xf32, #tpu.memory_space<vmem>>, vector<1x1x1x8x8xf32>
    %31 = vector.shape_cast %30 : vector<1x1x1x8x8xf32> to vector<8x8xf32>
    %c0_35 = arith.constant 0 : index
    %c3_36 = arith.constant 3 : index
    %c1_37 = arith.constant 1 : index
    %c0_38 = arith.constant 0 : index
    %c0_39 = arith.constant 0 : index
    %32 = vector.load %arg1[%c0_35, %c3_36, %c1_37, %c0_38, %c0_39] : memref<2x8x2x8x8xf32, #tpu.memory_space<vmem>>, vector<1x1x1x8x8xf32>
    %33 = vector.shape_cast %32 : vector<1x1x1x8x8xf32> to vector<8x8xf32>
    %34 = arith.maximumf %31, %33 : vector<8x8xf32>
    %35 = vector.extract_strided_slice %34 {offsets = [0, 0], sizes = [8, 4], strides = [1, 1]} : vector<8x8xf32> to vector<8x4xf32>
    %36 = vector.extract_strided_slice %34 {offsets = [0, 4], sizes = [8, 4], strides = [1, 1]} : vector<8x8xf32> to vector<8x4xf32>
    %37 = arith.maximumf %35, %36 : vector<8x4xf32>
    %c41 = arith.constant 41 : index
    %c0_40 = arith.constant 0 : index
    %38 = vector.load %arg8[%c41, %c0_40] : memref<224x4xf32, #tpu.memory_space<vmem>>, vector<8x4xf32>
    tpu.vector_store %arg8[%c41, %c0_40], %37 {strides = array<i32>} : memref<224x4xf32, #tpu.memory_space<vmem>>, vector<8x4xf32>,
    %c0_41 = arith.constant 0 : index
    %c4 = arith.constant 4 : index
    %c0_42 = arith.constant 0 : index
    %c0_43 = arith.constant 0 : index
    %c0_44 = arith.constant 0 : index
    %39 = vector.load %arg1[%c0_41, %c4, %c0_42, %c0_43, %c0_44] : memref<2x8x2x8x8xf32, #tpu.memory_space<vmem>>, vector<1x1x1x8x8xf32>
    %40 = vector.shape_cast %39 : vector<1x1x1x8x8xf32> to vector<8x8xf32>
    %c0_45 = arith.constant 0 : index
    %c4_46 = arith.constant 4 : index
    %c1_47 = arith.constant 1 : index
    %c0_48 = arith.constant 0 : index
    %c0_49 = arith.constant 0 : index
    %41 = vector.load %arg1[%c0_45, %c4_46, %c1_47, %c0_48, %c0_49] : memref<2x8x2x8x8xf32, #tpu.memory_space<vmem>>, vector<1x1x1x8x8xf32>
    %42 = vector.shape_cast %41 : vector<1x1x1x8x8xf32> to vector<8x8xf32>
    %43 = arith.maximumf %40, %42 : vector<8x8xf32>
    %44 = vector.extract_strided_slice %43 {offsets = [0, 0], sizes = [8, 4], strides = [1, 1]} : vector<8x8xf32> to vector<8x4xf32>
    %45 = vector.extract_strided_slice %43 {offsets = [0, 4], sizes = [8, 4], strides = [1, 1]} : vector<8x8xf32> to vector<8x4xf32>
    %46 = arith.maximumf %44, %45 : vector<8x4xf32>
    %c51 = arith.constant 51 : index
    %c0_50 = arith.constant 0 : index
    %47 = vector.load %arg8[%c51, %c0_50] : memref<224x4xf32, #tpu.memory_space<vmem>>, vector<8x4xf32>
    tpu.vector_store %arg8[%c51, %c0_50], %46 {strides = array<i32>} : memref<224x4xf32, #tpu.memory_space<vmem>>, vector<8x4xf32>,
    %c0_51 = arith.constant 0 : index
    %c5 = arith.constant 5 : index
    %c0_52 = arith.constant 0 : index
    %c0_53 = arith.constant 0 : index
    %c0_54 = arith.constant 0 : index
    %48 = vector.load %arg1[%c0_51, %c5, %c0_52, %c0_53, %c0_54] : memref<2x8x2x8x8xf32, #tpu.memory_space<vmem>>, vector<1x1x1x8x8xf32>
    %49 = vector.shape_cast %48 : vector<1x1x1x8x8xf32> to vector<8x8xf32>
    %c0_55 = arith.constant 0 : index
    %c5_56 = arith.constant 5 : index
    %c1_57 = arith.constant 1 : index
    %c0_58 = arith.constant 0 : index
    %c0_59 = arith.constant 0 : index
    %50 = vector.load %arg1[%c0_55, %c5_56, %c1_57, %c0_58, %c0_59] : memref<2x8x2x8x8xf32, #tpu.memory_space<vmem>>, vector<1x1x1x8x8xf32>
    %51 = vector.shape_cast %50 : vector<1x1x1x8x8xf32> to vector<8x8xf32>
    %52 = arith.maximumf %49, %51 : vector<8x8xf32>
    %53 = vector.extract_strided_slice %52 {offsets = [0, 0], sizes = [8, 4], strides = [1, 1]} : vector<8x8xf32> to vector<8x4xf32>
    %54 = vector.extract_strided_slice %52 {offsets = [0, 4], sizes = [8, 4], strides = [1, 1]} : vector<8x8xf32> to vector<8x4xf32>
    %55 = arith.maximumf %53, %54 : vector<8x4xf32>
    %c61 = arith.constant 61 : index
    %c0_60 = arith.constant 0 : index
    %56 = vector.load %arg8[%c61, %c0_60] : memref<224x4xf32, #tpu.memory_space<vmem>>, vector<8x4xf32>
    tpu.vector_store %arg8[%c61, %c0_60], %55 {strides = array<i32>} : memref<224x4xf32, #tpu.memory_space<vmem>>, vector<8x4xf32>,
    %c0_61 = arith.constant 0 : index
    %c6 = arith.constant 6 : index
    %c0_62 = arith.constant 0 : index
    %c0_63 = arith.constant 0 : index
    %c0_64 = arith.constant 0 : index
    %57 = vector.load %arg1[%c0_61, %c6, %c0_62, %c0_63, %c0_64] : memref<2x8x2x8x8xf32, #tpu.memory_space<vmem>>, vector<1x1x1x8x8xf32>
    %58 = vector.shape_cast %57 : vector<1x1x1x8x8xf32> to vector<8x8xf32>
    %c0_65 = arith.constant 0 : index
    %c6_66 = arith.constant 6 : index
    %c1_67 = arith.constant 1 : index
    %c0_68 = arith.constant 0 : index
    %c0_69 = arith.constant 0 : index
    %59 = vector.load %arg1[%c0_65, %c6_66, %c1_67, %c0_68, %c0_69] : memref<2x8x2x8x8xf32, #tpu.memory_space<vmem>>, vector<1x1x1x8x8xf32>
    %60 = vector.shape_cast %59 : vector<1x1x1x8x8xf32> to vector<8x8xf32>
    %61 = arith.maximumf %58, %60 : vector<8x8xf32>
    %62 = vector.extract_strided_slice %61 {offsets = [0, 0], sizes = [8, 4], strides = [1, 1]} : vector<8x8xf32> to vector<8x4xf32>
    %63 = vector.extract_strided_slice %61 {offsets = [0, 4], sizes = [8, 4], strides = [1, 1]} : vector<8x8xf32> to vector<8x4xf32>
    %64 = arith.maximumf %62, %63 : vector<8x4xf32>
    %c71 = arith.constant 71 : index
    %c0_70 = arith.constant 0 : index
    %65 = vector.load %arg8[%c71, %c0_70] : memref<224x4xf32, #tpu.memory_space<vmem>>, vector<8x4xf32>
    tpu.vector_store %arg8[%c71, %c0_70], %64 {strides = array<i32>} : memref<224x4xf32, #tpu.memory_space<vmem>>, vector<8x4xf32>,
    %c0_71 = arith.constant 0 : index
    %c7 = arith.constant 7 : index
    %c0_72 = arith.constant 0 : index
    %c0_73 = arith.constant 0 : index
    %c0_74 = arith.constant 0 : index
    %66 = vector.load %arg1[%c0_71, %c7, %c0_72, %c0_73, %c0_74] : memref<2x8x2x8x8xf32, #tpu.memory_space<vmem>>, vector<1x1x1x8x8xf32>
    %67 = vector.shape_cast %66 : vector<1x1x1x8x8xf32> to vector<8x8xf32>
    %c0_75 = arith.constant 0 : index
    %c7_76 = arith.constant 7 : index
    %c1_77 = arith.constant 1 : index
    %c0_78 = arith.constant 0 : index
    %c0_79 = arith.constant 0 : index
    %68 = vector.load %arg1[%c0_75, %c7_76, %c1_77, %c0_78, %c0_79] : memref<2x8x2x8x8xf32, #tpu.memory_space<vmem>>, vector<1x1x1x8x8xf32>
    %69 = vector.shape_cast %68 : vector<1x1x1x8x8xf32> to vector<8x8xf32>
    %70 = arith.maximumf %67, %69 : vector<8x8xf32>
    %71 = vector.extract_strided_slice %70 {offsets = [0, 0], sizes = [8, 4], strides = [1, 1]} : vector<8x8xf32> to vector<8x4xf32>
    %72 = vector.extract_strided_slice %70 {offsets = [0, 4], sizes = [8, 4], strides = [1, 1]} : vector<8x8xf32> to vector<8x4xf32>
    %73 = arith.maximumf %71, %72 : vector<8x4xf32>
    %c81 = arith.constant 81 : index
    %c0_80 = arith.constant 0 : index
    %74 = vector.load %arg8[%c81, %c0_80] : memref<224x4xf32, #tpu.memory_space<vmem>>, vector<8x4xf32>
    tpu.vector_store %arg8[%c81, %c0_80], %73 {strides = array<i32>} : memref<224x4xf32, #tpu.memory_space<vmem>>, vector<8x4xf32>,
    %c1_81 = arith.constant 1 : index
    %c0_82 = arith.constant 0 : index
    %c0_83 = arith.constant 0 : index
    %c0_84 = arith.constant 0 : index
    %c0_85 = arith.constant 0 : index
    %75 = vector.load %arg1[%c1_81, %c0_82, %c0_83, %c0_84, %c0_85] : memref<2x8x2x8x8xf32, #tpu.memory_space<vmem>>, vector<1x1x1x8x8xf32>
    %76 = vector.shape_cast %75 : vector<1x1x1x8x8xf32> to vector<8x8xf32>
    %c1_86 = arith.constant 1 : index
    %c0_87 = arith.constant 0 : index
    %c1_88 = arith.constant 1 : index
    %c0_89 = arith.constant 0 : index
    %c0_90 = arith.constant 0 : index
    %77 = vector.load %arg1[%c1_86, %c0_87, %c1_88, %c0_89, %c0_90] : memref<2x8x2x8x8xf32, #tpu.memory_space<vmem>>, vector<1x1x1x8x8xf32>
    %78 = vector.shape_cast %77 : vector<1x1x1x8x8xf32> to vector<8x8xf32>
    %79 = arith.maximumf %76, %78 : vector<8x8xf32>
    %80 = vector.extract_strided_slice %79 {offsets = [0, 0], sizes = [8, 4], strides = [1, 1]} : vector<8x8xf32> to vector<8x4xf32>
    %81 = vector.extract_strided_slice %79 {offsets = [0, 4], sizes = [8, 4], strides = [1, 1]} : vector<8x8xf32> to vector<8x4xf32>
    %82 = arith.maximumf %80, %81 : vector<8x4xf32>
    %c111 = arith.constant 111 : index
    %c0_91 = arith.constant 0 : index
    %83 = vector.load %arg8[%c111, %c0_91] : memref<224x4xf32, #tpu.memory_space<vmem>>, vector<8x4xf32>
    tpu.vector_store %arg8[%c111, %c0_91], %82 {strides = array<i32>} : memref<224x4xf32, #tpu.memory_space<vmem>>, vector<8x4xf32>,
    %c1_92 = arith.constant 1 : index
    %c1_93 = arith.constant 1 : index
    %c0_94 = arith.constant 0 : index
    %c0_95 = arith.constant 0 : index
    %c0_96 = arith.constant 0 : index
    %84 = vector.load %arg1[%c1_92, %c1_93, %c0_94, %c0_95, %c0_96] : memref<2x8x2x8x8xf32, #tpu.memory_space<vmem>>, vector<1x1x1x8x8xf32>
    %85 = vector.shape_cast %84 : vector<1x1x1x8x8xf32> to vector<8x8xf32>
    %c1_97 = arith.constant 1 : index
    %c1_98 = arith.constant 1 : index
    %c1_99 = arith.constant 1 : index
    %c0_100 = arith.constant 0 : index
    %c0_101 = arith.constant 0 : index
    %86 = vector.load %arg1[%c1_97, %c1_98, %c1_99, %c0_100, %c0_101] : memref<2x8x2x8x8xf32, #tpu.memory_space<vmem>>, vector<1x1x1x8x8xf32>
    %87 = vector.shape_cast %86 : vector<1x1x1x8x8xf32> to vector<8x8xf32>
    %88 = arith.maximumf %85, %87 : vector<8x8xf32>
    %89 = vector.extract_strided_slice %88 {offsets = [0, 0], sizes = [8, 4], strides = [1, 1]} : vector<8x8xf32> to vector<8x4xf32>
    %90 = vector.extract_strided_slice %88 {offsets = [0, 4], sizes = [8, 4], strides = [1, 1]} : vector<8x8xf32> to vector<8x4xf32>
    %91 = arith.maximumf %89, %90 : vector<8x4xf32>
    %c121 = arith.constant 121 : index
    %c0_102 = arith.constant 0 : index
    %92 = vector.load %arg8[%c121, %c0_102] : memref<224x4xf32, #tpu.memory_space<vmem>>, vector<8x4xf32>
    tpu.vector_store %arg8[%c121, %c0_102], %91 {strides = array<i32>} : memref<224x4xf32, #tpu.memory_space<vmem>>, vector<8x4xf32>,
    %c1_103 = arith.constant 1 : index
    %c2_104 = arith.constant 2 : index
    %c0_105 = arith.constant 0 : index
    %c0_106 = arith.constant 0 : index
    %c0_107 = arith.constant 0 : index
    %93 = vector.load %arg1[%c1_103, %c2_104, %c0_105, %c0_106, %c0_107] : memref<2x8x2x8x8xf32, #tpu.memory_space<vmem>>, vector<1x1x1x8x8xf32>
    %94 = vector.shape_cast %93 : vector<1x1x1x8x8xf32> to vector<8x8xf32>
    %c1_108 = arith.constant 1 : index
    %c2_109 = arith.constant 2 : index
    %c1_110 = arith.constant 1 : index
    %c0_111 = arith.constant 0 : index
    %c0_112 = arith.constant 0 : index
    %95 = vector.load %arg1[%c1_108, %c2_109, %c1_110, %c0_111, %c0_112] : memref<2x8x2x8x8xf32, #tpu.memory_space<vmem>>, vector<1x1x1x8x8xf32>
    %96 = vector.shape_cast %95 : vector<1x1x1x8x8xf32> to vector<8x8xf32>
    %97 = arith.maximumf %94, %96 : vector<8x8xf32>
    %98 = vector.extract_strided_slice %97 {offsets = [0, 0], sizes = [8, 4], strides = [1, 1]} : vector<8x8xf32> to vector<8x4xf32>
    %99 = vector.extract_strided_slice %97 {offsets = [0, 4], sizes = [8, 4], strides = [1, 1]} : vector<8x8xf32> to vector<8x4xf32>
    %100 = arith.maximumf %98, %99 : vector<8x4xf32>
    %c131 = arith.constant 131 : index
    %c0_113 = arith.constant 0 : index
    %101 = vector.load %arg8[%c131, %c0_113] : memref<224x4xf32, #tpu.memory_space<vmem>>, vector<8x4xf32>
    tpu.vector_store %arg8[%c131, %c0_113], %100 {strides = array<i32>} : memref<224x4xf32, #tpu.memory_space<vmem>>, vector<8x4xf32>,
    %c1_114 = arith.constant 1 : index
    %c3_115 = arith.constant 3 : index
    %c0_116 = arith.constant 0 : index
    %c0_117 = arith.constant 0 : index
    %c0_118 = arith.constant 0 : index
    %102 = vector.load %arg1[%c1_114, %c3_115, %c0_116, %c0_117, %c0_118] : memref<2x8x2x8x8xf32, #tpu.memory_space<vmem>>, vector<1x1x1x8x8xf32>
    %103 = vector.shape_cast %102 : vector<1x1x1x8x8xf32> to vector<8x8xf32>
    %c1_119 = arith.constant 1 : index
    %c3_120 = arith.constant 3 : index
    %c1_121 = arith.constant 1 : index
    %c0_122 = arith.constant 0 : index
    %c0_123 = arith.constant 0 : index
    %104 = vector.load %arg1[%c1_119, %c3_120, %c1_121, %c0_122, %c0_123] : memref<2x8x2x8x8xf32, #tpu.memory_space<vmem>>, vector<1x1x1x8x8xf32>
    %105 = vector.shape_cast %104 : vector<1x1x1x8x8xf32> to vector<8x8xf32>
    %106 = arith.maximumf %103, %105 : vector<8x8xf32>
    %107 = vector.extract_strided_slice %106 {offsets = [0, 0], sizes = [8, 4], strides = [1, 1]} : vector<8x8xf32> to vector<8x4xf32>
    %108 = vector.extract_strided_slice %106 {offsets = [0, 4], sizes = [8, 4], strides = [1, 1]} : vector<8x8xf32> to vector<8x4xf32>
    %109 = arith.maximumf %107, %108 : vector<8x4xf32>
    %c141 = arith.constant 141 : index
    %c0_124 = arith.constant 0 : index
    %110 = vector.load %arg8[%c141, %c0_124] : memref<224x4xf32, #tpu.memory_space<vmem>>, vector<8x4xf32>
    tpu.vector_store %arg8[%c141, %c0_124], %109 {strides = array<i32>} : memref<224x4xf32, #tpu.memory_space<vmem>>, vector<8x4xf32>,
    %c1_125 = arith.constant 1 : index
    %c4_126 = arith.constant 4 : index
    %c0_127 = arith.constant 0 : index
    %c0_128 = arith.constant 0 : index
    %c0_129 = arith.constant 0 : index
    %111 = vector.load %arg1[%c1_125, %c4_126, %c0_127, %c0_128, %c0_129] : memref<2x8x2x8x8xf32, #tpu.memory_space<vmem>>, vector<1x1x1x8x8xf32>
    %112 = vector.shape_cast %111 : vector<1x1x1x8x8xf32> to vector<8x8xf32>
    %c1_130 = arith.constant 1 : index
    %c4_131 = arith.constant 4 : index
    %c1_132 = arith.constant 1 : index
    %c0_133 = arith.constant 0 : index
    %c0_134 = arith.constant 0 : index
    %113 = vector.load %arg1[%c1_130, %c4_131, %c1_132, %c0_133, %c0_134] : memref<2x8x2x8x8xf32, #tpu.memory_space<vmem>>, vector<1x1x1x8x8xf32>
    %114 = vector.shape_cast %113 : vector<1x1x1x8x8xf32> to vector<8x8xf32>
    %115 = arith.maximumf %112, %114 : vector<8x8xf32>
    %116 = vector.extract_strided_slice %115 {offsets = [0, 0], sizes = [8, 4], strides = [1, 1]} : vector<8x8xf32> to vector<8x4xf32>
    %117 = vector.extract_strided_slice %115 {offsets = [0, 4], sizes = [8, 4], strides = [1, 1]} : vector<8x8xf32> to vector<8x4xf32>
    %118 = arith.maximumf %116, %117 : vector<8x4xf32>
    %c151 = arith.constant 151 : index
    %c0_135 = arith.constant 0 : index
    %119 = vector.load %arg8[%c151, %c0_135] : memref<224x4xf32, #tpu.memory_space<vmem>>, vector<8x4xf32>
    tpu.vector_store %arg8[%c151, %c0_135], %118 {strides = array<i32>} : memref<224x4xf32, #tpu.memory_space<vmem>>, vector<8x4xf32>,
    %c1_136 = arith.constant 1 : index
    %c5_137 = arith.constant 5 : index
    %c0_138 = arith.constant 0 : index
    %c0_139 = arith.constant 0 : index
    %c0_140 = arith.constant 0 : index
    %120 = vector.load %arg1[%c1_136, %c5_137, %c0_138, %c0_139, %c0_140] : memref<2x8x2x8x8xf32, #tpu.memory_space<vmem>>, vector<1x1x1x8x8xf32>
    %121 = vector.shape_cast %120 : vector<1x1x1x8x8xf32> to vector<8x8xf32>
    %c1_141 = arith.constant 1 : index
    %c5_142 = arith.constant 5 : index
    %c1_143 = arith.constant 1 : index
    %c0_144 = arith.constant 0 : index
    %c0_145 = arith.constant 0 : index
    %122 = vector.load %arg1[%c1_141, %c5_142, %c1_143, %c0_144, %c0_145] : memref<2x8x2x8x8xf32, #tpu.memory_space<vmem>>, vector<1x1x1x8x8xf32>
    %123 = vector.shape_cast %122 : vector<1x1x1x8x8xf32> to vector<8x8xf32>
    %124 = arith.maximumf %121, %123 : vector<8x8xf32>
    %125 = vector.extract_strided_slice %124 {offsets = [0, 0], sizes = [8, 4], strides = [1, 1]} : vector<8x8xf32> to vector<8x4xf32>
    %126 = vector.extract_strided_slice %124 {offsets = [0, 4], sizes = [8, 4], strides = [1, 1]} : vector<8x8xf32> to vector<8x4xf32>
    %127 = arith.maximumf %125, %126 : vector<8x4xf32>
    %c161 = arith.constant 161 : index
    %c0_146 = arith.constant 0 : index
    %128 = vector.load %arg8[%c161, %c0_146] : memref<224x4xf32, #tpu.memory_space<vmem>>, vector<8x4xf32>
    tpu.vector_store %arg8[%c161, %c0_146], %127 {strides = array<i32>} : memref<224x4xf32, #tpu.memory_space<vmem>>, vector<8x4xf32>,
    %c1_147 = arith.constant 1 : index
    %c6_148 = arith.constant 6 : index
    %c0_149 = arith.constant 0 : index
    %c0_150 = arith.constant 0 : index
    %c0_151 = arith.constant 0 : index
    %129 = vector.load %arg1[%c1_147, %c6_148, %c0_149, %c0_150, %c0_151] : memref<2x8x2x8x8xf32, #tpu.memory_space<vmem>>, vector<1x1x1x8x8xf32>
    %130 = vector.shape_cast %129 : vector<1x1x1x8x8xf32> to vector<8x8xf32>
    %c1_152 = arith.constant 1 : index
    %c6_153 = arith.constant 6 : index
    %c1_154 = arith.constant 1 : index
    %c0_155 = arith.constant 0 : index
    %c0_156 = arith.constant 0 : index
    %131 = vector.load %arg1[%c1_152, %c6_153, %c1_154, %c0_155, %c0_156] : memref<2x8x2x8x8xf32, #tpu.memory_space<vmem>>, vector<1x1x1x8x8xf32>
    %132 = vector.shape_cast %131 : vector<1x1x1x8x8xf32> to vector<8x8xf32>
    %133 = arith.maximumf %130, %132 : vector<8x8xf32>
    %134 = vector.extract_strided_slice %133 {offsets = [0, 0], sizes = [8, 4], strides = [1, 1]} : vector<8x8xf32> to vector<8x4xf32>
    %135 = vector.extract_strided_slice %133 {offsets = [0, 4], sizes = [8, 4], strides = [1, 1]} : vector<8x8xf32> to vector<8x4xf32>
    %136 = arith.maximumf %134, %135 : vector<8x4xf32>
    %c171 = arith.constant 171 : index
    %c0_157 = arith.constant 0 : index
    %137 = vector.load %arg8[%c171, %c0_157] : memref<224x4xf32, #tpu.memory_space<vmem>>, vector<8x4xf32>
    tpu.vector_store %arg8[%c171, %c0_157], %136 {strides = array<i32>} : memref<224x4xf32, #tpu.memory_space<vmem>>, vector<8x4xf32>,
    %c1_158 = arith.constant 1 : index
    %c7_159 = arith.constant 7 : index
    %c0_160 = arith.constant 0 : index
    %c0_161 = arith.constant 0 : index
    %c0_162 = arith.constant 0 : index
    %138 = vector.load %arg1[%c1_158, %c7_159, %c0_160, %c0_161, %c0_162] : memref<2x8x2x8x8xf32, #tpu.memory_space<vmem>>, vector<1x1x1x8x8xf32>
    %139 = vector.shape_cast %138 : vector<1x1x1x8x8xf32> to vector<8x8xf32>
    %c1_163 = arith.constant 1 : index
    %c7_164 = arith.constant 7 : index
    %c1_165 = arith.constant 1 : index
    %c0_166 = arith.constant 0 : index
    %c0_167 = arith.constant 0 : index
    %140 = vector.load %arg1[%c1_163, %c7_164, %c1_165, %c0_166, %c0_167] : memref<2x8x2x8x8xf32, #tpu.memory_space<vmem>>, vector<1x1x1x8x8xf32>
    %141 = vector.shape_cast %140 : vector<1x1x1x8x8xf32> to vector<8x8xf32>
    %142 = arith.maximumf %139, %141 : vector<8x8xf32>
    %143 = vector.extract_strided_slice %142 {offsets = [0, 0], sizes = [8, 4], strides = [1, 1]} : vector<8x8xf32> to vector<8x4xf32>
    %144 = vector.extract_strided_slice %142 {offsets = [0, 4], sizes = [8, 4], strides = [1, 1]} : vector<8x8xf32> to vector<8x4xf32>
    %145 = arith.maximumf %143, %144 : vector<8x4xf32>
    %c181 = arith.constant 181 : index
    %c0_168 = arith.constant 0 : index
    %146 = vector.load %arg8[%c181, %c0_168] : memref<224x4xf32, #tpu.memory_space<vmem>>, vector<8x4xf32>
    tpu.vector_store %arg8[%c181, %c0_168], %145 {strides = array<i32>} : memref<224x4xf32, #tpu.memory_space<vmem>>, vector<8x4xf32>,
    %c0_169 = arith.constant 0 : index
    %c0_170 = arith.constant 0 : index
    %147 = vector.load %arg8[%c0_169, %c0_170] : memref<224x4xf32, #tpu.memory_space<vmem>>, vector<200x4xf32>
    %c0_171 = arith.constant 0 : index
    %c0_172 = arith.constant 0 : index
    %148 = vector.load %arg10[%c0_171, %c0_172] : memref<200x36xf32, #tpu.memory_space<vmem>>, vector<200x4xf32>
    tpu.vector_store %arg10[%c0_171, %c0_172], %147 {strides = array<i32>} : memref<200x36xf32, #tpu.memory_space<vmem>>, vector<200x4xf32>,
    %c1_173 = arith.constant 1 : index
    %c0_174 = arith.constant 0 : index
    %149 = vector.load %arg8[%c1_173, %c0_174] : memref<224x4xf32, #tpu.memory_space<vmem>>, vector<200x4xf32>
    %c0_175 = arith.constant 0 : index
    %c4_176 = arith.constant 4 : index
    %150 = vector.load %arg10[%c0_175, %c4_176] : memref<200x36xf32, #tpu.memory_space<vmem>>, vector<200x4xf32>
    tpu.vector_store %arg10[%c0_175, %c4_176], %149 {strides = array<i32>} : memref<200x36xf32, #tpu.memory_space<vmem>>, vector<200x4xf32>,
    %c2_177 = arith.constant 2 : index
    %c0_178 = arith.constant 0 : index
    %151 = vector.load %arg8[%c2_177, %c0_178] : memref<224x4xf32, #tpu.memory_space<vmem>>, vector<200x4xf32>
    %c0_179 = arith.constant 0 : index
    %c8 = arith.constant 8 : index
    %152 = vector.load %arg10[%c0_179, %c8] : memref<200x36xf32, #tpu.memory_space<vmem>>, vector<200x4xf32>
    tpu.vector_store %arg10[%c0_179, %c8], %151 {strides = array<i32>} : memref<200x36xf32, #tpu.memory_space<vmem>>, vector<200x4xf32>,
    %c10 = arith.constant 10 : index
    %c0_180 = arith.constant 0 : index
    %153 = vector.load %arg8[%c10, %c0_180] : memref<224x4xf32, #tpu.memory_space<vmem>>, vector<200x4xf32>
    %c0_181 = arith.constant 0 : index
    %c12 = arith.constant 12 : index
    %154 = vector.load %arg10[%c0_181, %c12] : memref<200x36xf32, #tpu.memory_space<vmem>>, vector<200x4xf32>
    tpu.vector_store %arg10[%c0_181, %c12], %153 {strides = array<i32>} : memref<200x36xf32, #tpu.memory_space<vmem>>, vector<200x4xf32>,
    %c11_182 = arith.constant 11 : index
    %c0_183 = arith.constant 0 : index
    %155 = vector.load %arg8[%c11_182, %c0_183] : memref<224x4xf32, #tpu.memory_space<vmem>>, vector<200x4xf32>
    %c0_184 = arith.constant 0 : index
    %c16 = arith.constant 16 : index
    %156 = vector.load %arg10[%c0_184, %c16] : memref<200x36xf32, #tpu.memory_space<vmem>>, vector<200x4xf32>
    tpu.vector_store %arg10[%c0_184, %c16], %155 {strides = array<i32>} : memref<200x36xf32, #tpu.memory_space<vmem>>, vector<200x4xf32>,
    %c12_185 = arith.constant 12 : index
    %c0_186 = arith.constant 0 : index
    %157 = vector.load %arg8[%c12_185, %c0_186] : memref<224x4xf32, #tpu.memory_space<vmem>>, vector<200x4xf32>
    %c0_187 = arith.constant 0 : index
    %c20 = arith.constant 20 : index
    %158 = vector.load %arg10[%c0_187, %c20] : memref<200x36xf32, #tpu.memory_space<vmem>>, vector<200x4xf32>
    tpu.vector_store %arg10[%c0_187, %c20], %157 {strides = array<i32>} : memref<200x36xf32, #tpu.memory_space<vmem>>, vector<200x4xf32>,
    %c20_188 = arith.constant 20 : index
    %c0_189 = arith.constant 0 : index
    %159 = vector.load %arg8[%c20_188, %c0_189] : memref<224x4xf32, #tpu.memory_space<vmem>>, vector<200x4xf32>
    %c0_190 = arith.constant 0 : index
    %c24 = arith.constant 24 : index
    %160 = vector.load %arg10[%c0_190, %c24] : memref<200x36xf32, #tpu.memory_space<vmem>>, vector<200x4xf32>
    tpu.vector_store %arg10[%c0_190, %c24], %159 {strides = array<i32>} : memref<200x36xf32, #tpu.memory_space<vmem>>, vector<200x4xf32>,
    %c21_191 = arith.constant 21 : index
    %c0_192 = arith.constant 0 : index
    %161 = vector.load %arg8[%c21_191, %c0_192] : memref<224x4xf32, #tpu.memory_space<vmem>>, vector<200x4xf32>
    %c0_193 = arith.constant 0 : index
    %c28 = arith.constant 28 : index
    %162 = vector.load %arg10[%c0_193, %c28] : memref<200x36xf32, #tpu.memory_space<vmem>>, vector<200x4xf32>
    tpu.vector_store %arg10[%c0_193, %c28], %161 {strides = array<i32>} : memref<200x36xf32, #tpu.memory_space<vmem>>, vector<200x4xf32>,
    %c22 = arith.constant 22 : index
    %c0_194 = arith.constant 0 : index
    %163 = vector.load %arg8[%c22, %c0_194] : memref<224x4xf32, #tpu.memory_space<vmem>>, vector<200x4xf32>
    %c0_195 = arith.constant 0 : index
    %c32 = arith.constant 32 : index
    %164 = vector.load %arg10[%c0_195, %c32] : memref<200x36xf32, #tpu.memory_space<vmem>>, vector<200x4xf32>
    tpu.vector_store %arg10[%c0_195, %c32], %163 {strides = array<i32>} : memref<200x36xf32, #tpu.memory_space<vmem>>, vector<200x4xf32>,
    %c0_196 = arith.constant 0 : index
    %c0_197 = arith.constant 0 : index
    %165 = vector.load %arg10[%c0_196, %c0_197] : memref<200x36xf32, #tpu.memory_space<vmem>>, vector<200x36xf32>
    %c0_198 = arith.constant 0 : index
    %c0_199 = arith.constant 0 : index
    %166 = vector.load %arg2[%c0_198, %c0_199] : memref<36x8xf32, #tpu.memory_space<vmem>>, vector<36x8xf32>
    %cst = arith.constant dense<0.000000e+00> : vector<200x8xf32>
    %167 = tpu.matmul %165, %166, %cst {dimension_numbers = #tpu.dot_dimension_numbers<[1], [0], [0], [1], [0, 0, 1, 1], [], []>} : vector<200x36xf32>, vector<36x8xf32>, vector<200x8xf32> -> vector<200x8xf32>
    %c0_200 = arith.constant 0 : index
    %c0_201 = arith.constant 0 : index
    %168 = vector.load %arg3[%c0_200, %c0_201] : memref<1x8xf32, #tpu.memory_space<vmem>>, vector<1x8xf32>
    %169 = vector.broadcast %168 : vector<1x8xf32> to vector<200x8xf32>
    %170 = arith.addf %167, %169 : vector<200x8xf32>
    %cst_202 = arith.constant 0.000000e+00 : f32
    %171 = vector.broadcast %cst_202 : f32 to vector<200x8xf32>
    %172 = arith.maximumf %170, %171 : vector<200x8xf32>
    %c0_203 = arith.constant 0 : index
    %c0_204 = arith.constant 0 : index
    %173 = vector.load %arg6[%c0_203, %c0_204] : memref<200x1xf32, #tpu.memory_space<vmem>>, vector<200x1xf32>
    %174 = vector.broadcast %173 : vector<200x1xf32> to vector<200x8xf32>
    %175 = arith.mulf %172, %174 : vector<200x8xf32>
    %c11_205 = arith.constant 11 : index
    %c0_206 = arith.constant 0 : index
    %176 = vector.load %arg9[%c11_205, %c0_206] : memref<224x8xf32, #tpu.memory_space<vmem>>, vector<200x8xf32>
    tpu.vector_store %arg9[%c11_205, %c0_206], %175 {strides = array<i32>} : memref<224x8xf32, #tpu.memory_space<vmem>>, vector<200x8xf32>,
    %c0_207 = arith.constant 0 : index
    %c0_208 = arith.constant 0 : index
    %177 = vector.load %arg9[%c0_207, %c0_208] : memref<224x8xf32, #tpu.memory_space<vmem>>, vector<200x8xf32>
    %c0_209 = arith.constant 0 : index
    %c0_210 = arith.constant 0 : index
    %c0_211 = arith.constant 0 : index
    %178 = vector.load %arg4[%c0_209, %c0_210, %c0_211] : memref<9x8x8xf32, #tpu.memory_space<vmem>>, vector<1x8x8xf32>
    %179 = vector.shape_cast %178 : vector<1x8x8xf32> to vector<8x8xf32>
    %cst_212 = arith.constant dense<0.000000e+00> : vector<200x8xf32>
    %180 = tpu.matmul %177, %179, %cst_212 {dimension_numbers = #tpu.dot_dimension_numbers<[1], [0], [0], [1], [0, 0, 1, 1], [], []>} : vector<200x8xf32>, vector<8x8xf32>, vector<200x8xf32> -> vector<200x8xf32>
    %c1_213 = arith.constant 1 : index
    %c0_214 = arith.constant 0 : index
    %181 = vector.load %arg9[%c1_213, %c0_214] : memref<224x8xf32, #tpu.memory_space<vmem>>, vector<200x8xf32>
    %c1_215 = arith.constant 1 : index
    %c0_216 = arith.constant 0 : index
    %c0_217 = arith.constant 0 : index
    %182 = vector.load %arg4[%c1_215, %c0_216, %c0_217] : memref<9x8x8xf32, #tpu.memory_space<vmem>>, vector<1x8x8xf32>
    %183 = vector.shape_cast %182 : vector<1x8x8xf32> to vector<8x8xf32>
    %cst_218 = arith.constant dense<0.000000e+00> : vector<200x8xf32>
    %184 = tpu.matmul %181, %183, %cst_218 {dimension_numbers = #tpu.dot_dimension_numbers<[1], [0], [0], [1], [0, 0, 1, 1], [], []>} : vector<200x8xf32>, vector<8x8xf32>, vector<200x8xf32> -> vector<200x8xf32>
    %185 = arith.addf %180, %184 : vector<200x8xf32>
    %c2_219 = arith.constant 2 : index
    %c0_220 = arith.constant 0 : index
    %186 = vector.load %arg9[%c2_219, %c0_220] : memref<224x8xf32, #tpu.memory_space<vmem>>, vector<200x8xf32>
    %c2_221 = arith.constant 2 : index
    %c0_222 = arith.constant 0 : index
    %c0_223 = arith.constant 0 : index
    %187 = vector.load %arg4[%c2_221, %c0_222, %c0_223] : memref<9x8x8xf32, #tpu.memory_space<vmem>>, vector<1x8x8xf32>
    %188 = vector.shape_cast %187 : vector<1x8x8xf32> to vector<8x8xf32>
    %cst_224 = arith.constant dense<0.000000e+00> : vector<200x8xf32>
    %189 = tpu.matmul %186, %188, %cst_224 {dimension_numbers = #tpu.dot_dimension_numbers<[1], [0], [0], [1], [0, 0, 1, 1], [], []>} : vector<200x8xf32>, vector<8x8xf32>, vector<200x8xf32> -> vector<200x8xf32>
    %190 = arith.addf %185, %189 : vector<200x8xf32>
    %c10_225 = arith.constant 10 : index
    %c0_226 = arith.constant 0 : index
    %191 = vector.load %arg9[%c10_225, %c0_226] : memref<224x8xf32, #tpu.memory_space<vmem>>, vector<200x8xf32>
    %c3_227 = arith.constant 3 : index
    %c0_228 = arith.constant 0 : index
    %c0_229 = arith.constant 0 : index
    %192 = vector.load %arg4[%c3_227, %c0_228, %c0_229] : memref<9x8x8xf32, #tpu.memory_space<vmem>>, vector<1x8x8xf32>
    %193 = vector.shape_cast %192 : vector<1x8x8xf32> to vector<8x8xf32>
    %cst_230 = arith.constant dense<0.000000e+00> : vector<200x8xf32>
    %194 = tpu.matmul %191, %193, %cst_230 {dimension_numbers = #tpu.dot_dimension_numbers<[1], [0], [0], [1], [0, 0, 1, 1], [], []>} : vector<200x8xf32>, vector<8x8xf32>, vector<200x8xf32> -> vector<200x8xf32>
    %195 = arith.addf %190, %194 : vector<200x8xf32>
    %c11_231 = arith.constant 11 : index
    %c0_232 = arith.constant 0 : index
    %196 = vector.load %arg9[%c11_231, %c0_232] : memref<224x8xf32, #tpu.memory_space<vmem>>, vector<200x8xf32>
    %c4_233 = arith.constant 4 : index
    %c0_234 = arith.constant 0 : index
    %c0_235 = arith.constant 0 : index
    %197 = vector.load %arg4[%c4_233, %c0_234, %c0_235] : memref<9x8x8xf32, #tpu.memory_space<vmem>>, vector<1x8x8xf32>
    %198 = vector.shape_cast %197 : vector<1x8x8xf32> to vector<8x8xf32>
    %cst_236 = arith.constant dense<0.000000e+00> : vector<200x8xf32>
    %199 = tpu.matmul %196, %198, %cst_236 {dimension_numbers = #tpu.dot_dimension_numbers<[1], [0], [0], [1], [0, 0, 1, 1], [], []>} : vector<200x8xf32>, vector<8x8xf32>, vector<200x8xf32> -> vector<200x8xf32>
    %200 = arith.addf %195, %199 : vector<200x8xf32>
    %c12_237 = arith.constant 12 : index
    %c0_238 = arith.constant 0 : index
    %201 = vector.load %arg9[%c12_237, %c0_238] : memref<224x8xf32, #tpu.memory_space<vmem>>, vector<200x8xf32>
    %c5_239 = arith.constant 5 : index
    %c0_240 = arith.constant 0 : index
    %c0_241 = arith.constant 0 : index
    %202 = vector.load %arg4[%c5_239, %c0_240, %c0_241] : memref<9x8x8xf32, #tpu.memory_space<vmem>>, vector<1x8x8xf32>
    %203 = vector.shape_cast %202 : vector<1x8x8xf32> to vector<8x8xf32>
    %cst_242 = arith.constant dense<0.000000e+00> : vector<200x8xf32>
    %204 = tpu.matmul %201, %203, %cst_242 {dimension_numbers = #tpu.dot_dimension_numbers<[1], [0], [0], [1], [0, 0, 1, 1], [], []>} : vector<200x8xf32>, vector<8x8xf32>, vector<200x8xf32> -> vector<200x8xf32>
    %205 = arith.addf %200, %204 : vector<200x8xf32>
    %c20_243 = arith.constant 20 : index
    %c0_244 = arith.constant 0 : index
    %206 = vector.load %arg9[%c20_243, %c0_244] : memref<224x8xf32, #tpu.memory_space<vmem>>, vector<200x8xf32>
    %c6_245 = arith.constant 6 : index
    %c0_246 = arith.constant 0 : index
    %c0_247 = arith.constant 0 : index
    %207 = vector.load %arg4[%c6_245, %c0_246, %c0_247] : memref<9x8x8xf32, #tpu.memory_space<vmem>>, vector<1x8x8xf32>
    %208 = vector.shape_cast %207 : vector<1x8x8xf32> to vector<8x8xf32>
    %cst_248 = arith.constant dense<0.000000e+00> : vector<200x8xf32>
    %209 = tpu.matmul %206, %208, %cst_248 {dimension_numbers = #tpu.dot_dimension_numbers<[1], [0], [0], [1], [0, 0, 1, 1], [], []>} : vector<200x8xf32>, vector<8x8xf32>, vector<200x8xf32> -> vector<200x8xf32>
    %210 = arith.addf %205, %209 : vector<200x8xf32>
    %c21_249 = arith.constant 21 : index
    %c0_250 = arith.constant 0 : index
    %211 = vector.load %arg9[%c21_249, %c0_250] : memref<224x8xf32, #tpu.memory_space<vmem>>, vector<200x8xf32>
    %c7_251 = arith.constant 7 : index
    %c0_252 = arith.constant 0 : index
    %c0_253 = arith.constant 0 : index
    %212 = vector.load %arg4[%c7_251, %c0_252, %c0_253] : memref<9x8x8xf32, #tpu.memory_space<vmem>>, vector<1x8x8xf32>
    %213 = vector.shape_cast %212 : vector<1x8x8xf32> to vector<8x8xf32>
    %cst_254 = arith.constant dense<0.000000e+00> : vector<200x8xf32>
    %214 = tpu.matmul %211, %213, %cst_254 {dimension_numbers = #tpu.dot_dimension_numbers<[1], [0], [0], [1], [0, 0, 1, 1], [], []>} : vector<200x8xf32>, vector<8x8xf32>, vector<200x8xf32> -> vector<200x8xf32>
    %215 = arith.addf %210, %214 : vector<200x8xf32>
    %c22_255 = arith.constant 22 : index
    %c0_256 = arith.constant 0 : index
    %216 = vector.load %arg9[%c22_255, %c0_256] : memref<224x8xf32, #tpu.memory_space<vmem>>, vector<200x8xf32>
    %c8_257 = arith.constant 8 : index
    %c0_258 = arith.constant 0 : index
    %c0_259 = arith.constant 0 : index
    %217 = vector.load %arg4[%c8_257, %c0_258, %c0_259] : memref<9x8x8xf32, #tpu.memory_space<vmem>>, vector<1x8x8xf32>
    %218 = vector.shape_cast %217 : vector<1x8x8xf32> to vector<8x8xf32>
    %cst_260 = arith.constant dense<0.000000e+00> : vector<200x8xf32>
    %219 = tpu.matmul %216, %218, %cst_260 {dimension_numbers = #tpu.dot_dimension_numbers<[1], [0], [0], [1], [0, 0, 1, 1], [], []>} : vector<200x8xf32>, vector<8x8xf32>, vector<200x8xf32> -> vector<200x8xf32>
    %220 = arith.addf %215, %219 : vector<200x8xf32>
    %c0_261 = arith.constant 0 : index
    %c0_262 = arith.constant 0 : index
    %221 = vector.load %arg5[%c0_261, %c0_262] : memref<1x8xf32, #tpu.memory_space<vmem>>, vector<1x8xf32>
    %222 = vector.broadcast %221 : vector<1x8xf32> to vector<200x8xf32>
    %223 = arith.addf %220, %222 : vector<200x8xf32>
    %cst_263 = arith.constant 0.000000e+00 : f32
    %224 = vector.broadcast %cst_263 : f32 to vector<200x8xf32>
    %225 = arith.maximumf %223, %224 : vector<200x8xf32>
    %c0_264 = arith.constant 0 : index
    %c0_265 = arith.constant 0 : index
    %c0_266 = arith.constant 0 : index
    %226 = vector.load %arg7[%c0_264, %c0_265, %c0_266] : memref<1x200x8xf32, #tpu.memory_space<vmem>>, vector<1x200x8xf32>
    %227 = vector.shape_cast %226 : vector<1x200x8xf32> to vector<200x8xf32>
    %228 = vector.shape_cast %225 : vector<200x8xf32> to vector<1x200x8xf32>
    tpu.vector_store %arg7[%c0_264, %c0_265, %c0_266], %228 {strides = array<i32>} : memref<1x200x8xf32, #tpu.memory_space<vmem>>, vector<1x200x8xf32>,
    return
  }
  func.func @transform_0(%arg0: i32) -> (i32, i32, i32, i32, i32) {
    %c0_i32 = arith.constant 0 : i32
    %c0_i32_0 = arith.constant 0 : i32
    %c0_i32_1 = arith.constant 0 : i32
    %c0_i32_2 = arith.constant 0 : i32
    %c0_i32_3 = arith.constant 0 : i32
    return %arg0, %c0_i32, %c0_i32_0, %c0_i32_1, %c0_i32_2 : i32, i32, i32, i32, i32
  }
  func.func @transform_1(%arg0: i32) -> (i32, i32) {
    %c0_i32 = arith.constant 0 : i32
    %c0_i32_0 = arith.constant 0 : i32
    %c0_i32_1 = arith.constant 0 : i32
    return %c0_i32, %c0_i32_0 : i32, i32
  }
  func.func @transform_2(%arg0: i32) -> (i32, i32) {
    %c0_i32 = arith.constant 0 : i32
    %c0_i32_0 = arith.constant 0 : i32
    %c0_i32_1 = arith.constant 0 : i32
    return %c0_i32, %c0_i32_0 : i32, i32
  }
  func.func @transform_3(%arg0: i32) -> (i32, i32, i32) {
    %c0_i32 = arith.constant 0 : i32
    %c0_i32_0 = arith.constant 0 : i32
    %c0_i32_1 = arith.constant 0 : i32
    %c0_i32_2 = arith.constant 0 : i32
    return %c0_i32, %c0_i32_0, %c0_i32_1 : i32, i32, i32
  }
  func.func @transform_4(%arg0: i32) -> (i32, i32) {
    %c0_i32 = arith.constant 0 : i32
    %c0_i32_0 = arith.constant 0 : i32
    %c0_i32_1 = arith.constant 0 : i32
    return %c0_i32, %c0_i32_0 : i32, i32
  }
  func.func @transform_5(%arg0: i32) -> (i32, i32) {
    %c0_i32 = arith.constant 0 : i32
    %c0_i32_0 = arith.constant 0 : i32
    %c0_i32_1 = arith.constant 0 : i32
    return %c0_i32, %c0_i32_0 : i32, i32
  }
  func.func @transform_6(%arg0: i32) -> (i32, i32, i32) {
    %c0_i32 = arith.constant 0 : i32
    %c0_i32_0 = arith.constant 0 : i32
    %c0_i32_1 = arith.constant 0 : i32
    return %arg0, %c0_i32, %c0_i32_0 : i32, i32, i32
  }
}

</mosaic_0001>

<llo_original>
// kernel: tpu_custom_call.1
$region0: #{tpu_custom_call.1}
  #allocation0 [shape = 'u32[]', space=smem, size = 0x4, offset = 0x4, fixed_abs, tag = 'smem constant byte address 0x4 - core index']
  #allocation1 [shape = 'u32[144,128]{1,0:T(1,128)}', space=vmem, size = 0x12000, scoped, tag = 'internal scratch']
  #allocation2 [shape = 'f32[224,4]{1,0:T(8,128)}', space=vmem, size = 0x1c000, scoped, tag = 'scratch operand']
  #allocation3 [shape = 'f32[224,8]{1,0:T(8,128)}', space=vmem, size = 0x1c000, scoped, tag = 'scratch operand']
  #allocation4 [shape = 'f32[200,36]{1,0:T(8,128)}', space=vmem, size = 0x19000, scoped, tag = 'scratch operand']
  %s0 = inlined_call_operand.vmem [shape: f32[2,8,2,8,8], index: 0, kind: input, shape index: {}]
  %s1 = inlined_call_operand.vmem [shape: f32[36,8], index: 1, kind: input, shape index: {}]
  %s2 = inlined_call_operand.vmem [shape: f32[1,8], index: 2, kind: input, shape index: {}]
  %s3 = inlined_call_operand.vmem [shape: f32[9,8,8], index: 3, kind: input, shape index: {}]
  %s4 = inlined_call_operand.vmem [shape: f32[1,8], index: 4, kind: input, shape index: {}]
  %s5 = inlined_call_operand.vmem [shape: f32[200,1], index: 5, kind: input, shape index: {}]
  %s6 = inlined_call_operand.vmem [shape: f32[1,200,8], index: 6, kind: output, shape index: {}]
  %s7 = sld [smem:[#allocation0]]
  $region38: #{tpu_custom_call.1} parent=0
    _
  %s9 = ssub.s32 1, %s7
  %s10 = scalar_select 0, %s9, %s7
  // Predicated region
  $region2: #{tpu_custom_call.1} parent=0 // pred_check
    _
  $region3: #{tpu_custom_call.1} parent=0 // pred_check_branch
    %12 = sbr.rel (0) target = $region5
  $region4: #{tpu_custom_call.1} parent=0 // pred_region
    _
  $region5: #{tpu_custom_call.1} parent=0 // pred_fallthru
    _
  // Predicated region
  $region6: #{tpu_custom_call.1} parent=0 // pred_check
    _
  $region7: #{tpu_custom_call.1} parent=0 // pred_check_branch
    %14 = sbr.rel (0) target = $region9
  $region8: #{tpu_custom_call.1} parent=0 // pred_region
    _
  $region9: #{tpu_custom_call.1} parent=0 // pred_fallthru
    _
  // Predicated region
  $region10: #{tpu_custom_call.1} parent=0 // pred_check
    _
  $region11: #{tpu_custom_call.1} parent=0 // pred_check_branch
    %16 = sbr.rel (0) target = $region13
  $region12: #{tpu_custom_call.1} parent=0 // pred_region
    _
  $region13: #{tpu_custom_call.1} parent=0 // pred_fallthru
    _
  // Predicated region
  $region14: #{tpu_custom_call.1} parent=0 // pred_check
    _
  $region15: #{tpu_custom_call.1} parent=0 // pred_check_branch
    %18 = sbr.rel (0) target = $region17
  $region16: #{tpu_custom_call.1} parent=0 // pred_region
    _
  $region17: #{tpu_custom_call.1} parent=0 // pred_fallthru
    _
  // Predicated region
  $region18: #{tpu_custom_call.1} parent=0 // pred_check
    _
  $region19: #{tpu_custom_call.1} parent=0 // pred_check_branch
    %20 = sbr.rel (0) target = $region21
  $region20: #{tpu_custom_call.1} parent=0 // pred_region
    _
  $region21: #{tpu_custom_call.1} parent=0 // pred_fallthru
    _
  // Predicated region
  $region22: #{tpu_custom_call.1} parent=0 // pred_check
    _
  $region23: #{tpu_custom_call.1} parent=0 // pred_check_branch
    %22 = sbr.rel (0) target = $region25
  $region24: #{tpu_custom_call.1} parent=0 // pred_region
    _
  $region25: #{tpu_custom_call.1} parent=0 // pred_fallthru
    _
  %p23 = scmp.eq.s32.totalorder 0, 0
  // Predicated region
  $region26: #{tpu_custom_call.1} parent=0 // pred_check
    %p24 = pneg %p23
  $region27: #{tpu_custom_call.1} parent=0 // pred_check_branch
    %26 = sbr.rel (%p24) target = $region29
  $region28: #{tpu_custom_call.1} parent=0 // pred_region
    %vm27 = vcmask 31744
    %28 = vst.msk [vmem:[#allocation2] sm:$0xff] %vm27, 0.0
    %29 = vst.msk [vmem:[#allocation2 + $0x8] sm:$0xff] %vm27, 0.0
    %30 = vst.msk [vmem:[#allocation2 + $0x10] sm:$0xff] %vm27, 0.0
    %31 = vst.msk [vmem:[#allocation2 + $0x18] sm:$0xff] %vm27, 0.0
    %32 = vst.msk [vmem:[#allocation2 + $0x20] sm:$0xff] %vm27, 0.0
    %33 = vst.msk [vmem:[#allocation2 + $0x28] sm:$0xff] %vm27, 0.0
    %34 = vst.msk [vmem:[#allocation2 + $0x30] sm:$0xff] %vm27, 0.0
    %35 = vst.msk [vmem:[#allocation2 + $0x38] sm:$0xff] %vm27, 0.0
    %36 = vst.msk [vmem:[#allocation2 + $0x40] sm:$0xff] %vm27, 0.0
    %37 = vst.msk [vmem:[#allocation2 + $0x48] sm:$0xff] %vm27, 0.0
    %38 = vst.msk [vmem:[#allocation2 + $0x50] sm:$0xff] %vm27, 0.0
    %39 = vst.msk [vmem:[#allocation2 + $0x58] sm:$0xff] %vm27, 0.0
    %40 = vst.msk [vmem:[#allocation2 + $0x60] sm:$0xff] %vm27, 0.0
    %41 = vst.msk [vmem:[#allocation2 + $0x68] sm:$0xff] %vm27, 0.0
    %42 = vst.msk [vmem:[#allocation2 + $0x70] sm:$0xff] %vm27, 0.0
    %43 = vst.msk [vmem:[#allocation2 + $0x78] sm:$0xff] %vm27, 0.0
    %44 = vst.msk [vmem:[#allocation2 + $0x80] sm:$0xff] %vm27, 0.0
    %45 = vst.msk [vmem:[#allocation2 + $0x88] sm:$0xff] %vm27, 0.0
    %46 = vst.msk [vmem:[#allocation2 + $0x90] sm:$0xff] %vm27, 0.0
    %47 = vst.msk [vmem:[#allocation2 + $0x98] sm:$0xff] %vm27, 0.0
    %48 = vst.msk [vmem:[#allocation2 + $0xa0] sm:$0xff] %vm27, 0.0
    %49 = vst.msk [vmem:[#allocation2 + $0xa8] sm:$0xff] %vm27, 0.0
    %50 = vst.msk [vmem:[#allocation2 + $0xb0] sm:$0xff] %vm27, 0.0
    %51 = vst.msk [vmem:[#allocation2 + $0xb8] sm:$0xff] %vm27, 0.0
    %52 = vst.msk [vmem:[#allocation2 + $0xc0] sm:$0xff] %vm27, 0.0
    %53 = vst.msk [vmem:[#allocation2 + $0xc8] sm:$0xff] %vm27, 0.0
    %54 = vst.msk [vmem:[#allocation2 + $0xd0] sm:$0xff] %vm27, 0.0
    %55 = vst.msk [vmem:[#allocation2 + $0xd8] sm:$0xff] %vm27, 0.0
    %vm56 = vcmask 64512
    %57 = vst.msk [vmem:[#allocation3] sm:$0xff] %vm56, 0.0
    %58 = vst.msk [vmem:[#allocation3 + $0x8] sm:$0xff] %vm56, 0.0
    %59 = vst.msk [vmem:[#allocation3 + $0x10] sm:$0xff] %vm56, 0.0
    %60 = vst.msk [vmem:[#allocation3 + $0x18] sm:$0xff] %vm56, 0.0
    %61 = vst.msk [vmem:[#allocation3 + $0x20] sm:$0xff] %vm56, 0.0
    %62 = vst.msk [vmem:[#allocation3 + $0x28] sm:$0xff] %vm56, 0.0
    %63 = vst.msk [vmem:[#allocation3 + $0x30] sm:$0xff] %vm56, 0.0
    %64 = vst.msk [vmem:[#allocation3 + $0x38] sm:$0xff] %vm56, 0.0
    %65 = vst.msk [vmem:[#allocation3 + $0x40] sm:$0xff] %vm56, 0.0
    %66 = vst.msk [vmem:[#allocation3 + $0x48] sm:$0xff] %vm56, 0.0
    %67 = vst.msk [vmem:[#allocation3 + $0x50] sm:$0xff] %vm56, 0.0
    %68 = vst.msk [vmem:[#allocation3 + $0x58] sm:$0xff] %vm56, 0.0
    %69 = vst.msk [vmem:[#allocation3 + $0x60] sm:$0xff] %vm56, 0.0
    %70 = vst.msk [vmem:[#allocation3 + $0x68] sm:$0xff] %vm56, 0.0
    %71 = vst.msk [vmem:[#allocation3 + $0x70] sm:$0xff] %vm56, 0.0
    %72 = vst.msk [vmem:[#allocation3 + $0x78] sm:$0xff] %vm56, 0.0
    %73 = vst.msk [vmem:[#allocation3 + $0x80] sm:$0xff] %vm56, 0.0
    %74 = vst.msk [vmem:[#allocation3 + $0x88] sm:$0xff] %vm56, 0.0
    %75 = vst.msk [vmem:[#allocation3 + $0x90] sm:$0xff] %vm56, 0.0
    %76 = vst.msk [vmem:[#allocation3 + $0x98] sm:$0xff] %vm56, 0.0
    %77 = vst.msk [vmem:[#allocation3 + $0xa0] sm:$0xff] %vm56, 0.0
    %78 = vst.msk [vmem:[#allocation3 + $0xa8] sm:$0xff] %vm56, 0.0
    %79 = vst.msk [vmem:[#allocation3 + $0xb0] sm:$0xff] %vm56, 0.0
    %80 = vst.msk [vmem:[#allocation3 + $0xb8] sm:$0xff] %vm56, 0.0
    %81 = vst.msk [vmem:[#allocation3 + $0xc0] sm:$0xff] %vm56, 0.0
    %82 = vst.msk [vmem:[#allocation3 + $0xc8] sm:$0xff] %vm56, 0.0
    %83 = vst.msk [vmem:[#allocation3 + $0xd0] sm:$0xff] %vm56, 0.0
    %84 = vst.msk [vmem:[#allocation3 + $0xd8] sm:$0xff] %vm56, 0.0
  $region29: #{tpu_custom_call.1} parent=0 // pred_fallthru
    _
  %v85 = vld [vmem:[%s0] sm:$0xff]
  %s86 = scalar_lea.vmem %s0, 8
  %v87 = vld [vmem:[%s86] sm:$0xff]
  %v88 = vmax.f32 %v85, %v87
  %90 = vrot.lane.b32.xlu0 %v88, 124
  %v91 = vpop.permute.xlu0 %90
  %v93 = vmax.f32 %v88, %v91
  %vm94 = vcmask 31744
  %95 = vst.msk [vmem:[#allocation2 + $0xb] sm:$0xff] %vm94, %v93
  %s96 = scalar_lea.vmem %s0, 16
  %v97 = vld [vmem:[%s96] sm:$0xff]
  %s98 = scalar_lea.vmem %s0, 24
  %v99 = vld [vmem:[%s98] sm:$0xff]
  %v100 = vmax.f32 %v97, %v99
  %102 = vrot.lane.b32.xlu0 %v100, 124
  %v103 = vpop.permute.xlu0 %102
  %v105 = vmax.f32 %v100, %v103
  %106 = vst.msk [vmem:[#allocation2 + $0x15] sm:$0xff] %vm94, %v105
  %s107 = scalar_lea.vmem %s0, 32
  %v108 = vld [vmem:[%s107] sm:$0xff]
  %s109 = scalar_lea.vmem %s0, 40
  %v110 = vld [vmem:[%s109] sm:$0xff]
  %v111 = vmax.f32 %v108, %v110
  %113 = vrot.lane.b32.xlu0 %v111, 124
  %v114 = vpop.permute.xlu0 %113
  %v116 = vmax.f32 %v111, %v114
  %117 = vst.msk [vmem:[#allocation2 + $0x1f] sm:$0xff] %vm94, %v116
  %s118 = scalar_lea.vmem %s0, 48
  %v119 = vld [vmem:[%s118] sm:$0xff]
  %s120 = scalar_lea.vmem %s0, 56
  %v121 = vld [vmem:[%s120] sm:$0xff]
  %v122 = vmax.f32 %v119, %v121
  %124 = vrot.lane.b32.xlu0 %v122, 124
  %v125 = vpop.permute.xlu0 %124
  %v127 = vmax.f32 %v122, %v125
  %128 = vst.msk [vmem:[#allocation2 + $0x29] sm:$0xff] %vm94, %v127
  %s129 = scalar_lea.vmem %s0, 64
  %v130 = vld [vmem:[%s129] sm:$0xff]
  %s131 = scalar_lea.vmem %s0, 72
  %v132 = vld [vmem:[%s131] sm:$0xff]
  %v133 = vmax.f32 %v130, %v132
  %135 = vrot.lane.b32.xlu0 %v133, 124
  %v136 = vpop.permute.xlu0 %135
  %v138 = vmax.f32 %v133, %v136
  %139 = vst.msk [vmem:[#allocation2 + $0x33] sm:$0xff] %vm94, %v138
  %s140 = scalar_lea.vmem %s0, 80
  %v141 = vld [vmem:[%s140] sm:$0xff]
  %s142 = scalar_lea.vmem %s0, 88
  %v143 = vld [vmem:[%s142] sm:$0xff]
  %v144 = vmax.f32 %v141, %v143
  %146 = vrot.lane.b32.xlu0 %v144, 124
  %v147 = vpop.permute.xlu0 %146
  %v149 = vmax.f32 %v144, %v147
  %150 = vst.msk [vmem:[#allocation2 + $0x3d] sm:$0xff] %vm94, %v149
  %s151 = scalar_lea.vmem %s0, 96
  %v152 = vld [vmem:[%s151] sm:$0xff]
  %s153 = scalar_lea.vmem %s0, 104
  %v154 = vld [vmem:[%s153] sm:$0xff]
  %v155 = vmax.f32 %v152, %v154
  %157 = vrot.lane.b32.xlu0 %v155, 124
  %v158 = vpop.permute.xlu0 %157
  %v160 = vmax.f32 %v155, %v158
  %161 = vst.msk [vmem:[#allocation2 + $0x47] sm:$0xff] %vm94, %v160
  %s162 = scalar_lea.vmem %s0, 112
  %v163 = vld [vmem:[%s162] sm:$0xff]
  %s164 = scalar_lea.vmem %s0, 120
  %v165 = vld [vmem:[%s164] sm:$0xff]
  %v166 = vmax.f32 %v163, %v165
  %168 = vrot.lane.b32.xlu0 %v166, 124
  %v169 = vpop.permute.xlu0 %168
  %v171 = vmax.f32 %v166, %v169
  %172 = vst.msk [vmem:[#allocation2 + $0x51] sm:$0xff] %vm94, %v171
  %s173 = scalar_lea.vmem %s0, 128
  %v174 = vld [vmem:[%s173] sm:$0xff]
  %s175 = scalar_lea.vmem %s0, 136
  %v176 = vld [vmem:[%s175] sm:$0xff]
  %v177 = vmax.f32 %v174, %v176
  %179 = vrot.lane.b32.xlu0 %v177, 124
  %v180 = vpop.permute.xlu0 %179
  %v182 = vmax.f32 %v177, %v180
  %183 = vst.msk [vmem:[#allocation2 + $0x6f] sm:$0xff] %vm94, %v182
  %s184 = scalar_lea.vmem %s0, 144
  %v185 = vld [vmem:[%s184] sm:$0xff]
  %s186 = scalar_lea.vmem %s0, 152
  %v187 = vld [vmem:[%s186] sm:$0xff]
  %v188 = vmax.f32 %v185, %v187
  %190 = vrot.lane.b32.xlu0 %v188, 124
  %v191 = vpop.permute.xlu0 %190
  %v193 = vmax.f32 %v188, %v191
  %194 = vst.msk [vmem:[#allocation2 + $0x79] sm:$0xff] %vm94, %v193
  %s195 = scalar_lea.vmem %s0, 160
  %v196 = vld [vmem:[%s195] sm:$0xff]
  %s197 = scalar_lea.vmem %s0, 168
  %v198 = vld [vmem:[%s197] sm:$0xff]
  %v199 = vmax.f32 %v196, %v198
  %201 = vrot.lane.b32.xlu0 %v199, 124
  %v202 = vpop.permute.xlu0 %201
  %v204 = vmax.f32 %v199, %v202
  %205 = vst.msk [vmem:[#allocation2 + $0x83] sm:$0xff] %vm94, %v204
  %s206 = scalar_lea.vmem %s0, 176
  %v207 = vld [vmem:[%s206] sm:$0xff]
  %s208 = scalar_lea.vmem %s0, 184
  %v209 = vld [vmem:[%s208] sm:$0xff]
  %v210 = vmax.f32 %v207, %v209
  %212 = vrot.lane.b32.xlu0 %v210, 124
  %v213 = vpop.permute.xlu0 %212
  %v215 = vmax.f32 %v210, %v213
  %216 = vst.msk [vmem:[#allocation2 + $0x8d] sm:$0xff] %vm94, %v215
  %s217 = scalar_lea.vmem %s0, 192
  %v218 = vld [vmem:[%s217] sm:$0xff]
  %s219 = scalar_lea.vmem %s0, 200
  %v220 = vld [vmem:[%s219] sm:$0xff]
  %v221 = vmax.f32 %v218, %v220
  %223 = vrot.lane.b32.xlu0 %v221, 124
  %v224 = vpop.permute.xlu0 %223
  %v226 = vmax.f32 %v221, %v224
  %227 = vst.msk [vmem:[#allocation2 + $0x97] sm:$0xff] %vm94, %v226
  %s228 = scalar_lea.vmem %s0, 208
  %v229 = vld [vmem:[%s228] sm:$0xff]
  %s230 = scalar_lea.vmem %s0, 216
  %v231 = vld [vmem:[%s230] sm:$0xff]
  %v232 = vmax.f32 %v229, %v231
  %234 = vrot.lane.b32.xlu0 %v232, 124
  %v235 = vpop.permute.xlu0 %234
  %v237 = vmax.f32 %v232, %v235
  %238 = vst.msk [vmem:[#allocation2 + $0xa1] sm:$0xff] %vm94, %v237
  %s239 = scalar_lea.vmem %s0, 224
  %v240 = vld [vmem:[%s239] sm:$0xff]
  %s241 = scalar_lea.vmem %s0, 232
  %v242 = vld [vmem:[%s241] sm:$0xff]
  %v243 = vmax.f32 %v240, %v242
  %245 = vrot.lane.b32.xlu0 %v243, 124
  %v246 = vpop.permute.xlu0 %245
  %v248 = vmax.f32 %v243, %v246
  %249 = vst.msk [vmem:[#allocation2 + $0xab] sm:$0xff] %vm94, %v248
  %s250 = scalar_lea.vmem %s0, 240
  %v251 = vld [vmem:[%s250] sm:$0xff]
  %s252 = scalar_lea.vmem %s0, 248
  %v253 = vld [vmem:[%s252] sm:$0xff]
  %v254 = vmax.f32 %v251, %v253
  %256 = vrot.lane.b32.xlu0 %v254, 124
  %v257 = vpop.permute.xlu0 %256
  %v259 = vmax.f32 %v254, %v257
  %260 = vst.msk [vmem:[#allocation2 + $0xb5] sm:$0xff] %vm94, %v259
  %v261 = vld [vmem:[#allocation2] sm:$0xff]
  %v262 = vld [vmem:[#allocation2 + $0x8] sm:$0xff]
  %v263 = vld [vmem:[#allocation2 + $0x10] sm:$0xff]
  %v264 = vld [vmem:[#allocation2 + $0x18] sm:$0xff]
  %v265 = vld [vmem:[#allocation2 + $0x20] sm:$0xff]
  %v266 = vld [vmem:[#allocation2 + $0x28] sm:$0xff]
  %v267 = vld [vmem:[#allocation2 + $0x30] sm:$0xff]
  %v268 = vld [vmem:[#allocation2 + $0x38] sm:$0xff]
  %v269 = vld [vmem:[#allocation2 + $0x40] sm:$0xff]
  %v270 = vld [vmem:[#allocation2 + $0x48] sm:$0xff]
  %v271 = vld [vmem:[#allocation2 + $0x50] sm:$0xff]
  %v272 = vld [vmem:[#allocation2 + $0x58] sm:$0xff]
  %v273 = vld [vmem:[#allocation2 + $0x60] sm:$0xff]
  %v274 = vld [vmem:[#allocation2 + $0x68] sm:$0xff]
  %v275 = vld [vmem:[#allocation2 + $0x70] sm:$0xff]
  %v276 = vld [vmem:[#allocation2 + $0x78] sm:$0xff]
  %v277 = vld [vmem:[#allocation2 + $0x80] sm:$0xff]
  %v278 = vld [vmem:[#allocation2 + $0x88] sm:$0xff]
  %v279 = vld [vmem:[#allocation2 + $0x90] sm:$0xff]
  %v280 = vld [vmem:[#allocation2 + $0x98] sm:$0xff]
  %v281 = vld [vmem:[#allocation2 + $0xa0] sm:$0xff]
  %v282 = vld [vmem:[#allocation2 + $0xa8] sm:$0xff]
  %v283 = vld [vmem:[#allocation2 + $0xb0] sm:$0xff]
  %v284 = vld [vmem:[#allocation2 + $0xb8] sm:$0xff]
  %v285 = vld [vmem:[#allocation2 + $0xc0] sm:$0xff]
  %286 = vst.msk [vmem:[#allocation4] sm:$0xff] %vm94, %v261
  %287 = vst.msk [vmem:[#allocation4 + $0x8] sm:$0xff] %vm94, %v262
  %288 = vst.msk [vmem:[#allocation4 + $0x10] sm:$0xff] %vm94, %v263
  %289 = vst.msk [vmem:[#allocation4 + $0x18] sm:$0xff] %vm94, %v264
  %290 = vst.msk [vmem:[#allocation4 + $0x20] sm:$0xff] %vm94, %v265
  %291 = vst.msk [vmem:[#allocation4 + $0x28] sm:$0xff] %vm94, %v266
  %292 = vst.msk [vmem:[#allocation4 + $0x30] sm:$0xff] %vm94, %v267
  %293 = vst.msk [vmem:[#allocation4 + $0x38] sm:$0xff] %vm94, %v268
  %294 = vst.msk [vmem:[#allocation4 + $0x40] sm:$0xff] %vm94, %v269
  %295 = vst.msk [vmem:[#allocation4 + $0x48] sm:$0xff] %vm94, %v270
  %296 = vst.msk [vmem:[#allocation4 + $0x50] sm:$0xff] %vm94, %v271
  %297 = vst.msk [vmem:[#allocation4 + $0x58] sm:$0xff] %vm94, %v272
  %298 = vst.msk [vmem:[#allocation4 + $0x60] sm:$0xff] %vm94, %v273
  %299 = vst.msk [vmem:[#allocation4 + $0x68] sm:$0xff] %vm94, %v274
  %300 = vst.msk [vmem:[#allocation4 + $0x70] sm:$0xff] %vm94, %v275
  %301 = vst.msk [vmem:[#allocation4 + $0x78] sm:$0xff] %vm94, %v276
  %302 = vst.msk [vmem:[#allocation4 + $0x80] sm:$0xff] %vm94, %v277
  %303 = vst.msk [vmem:[#allocation4 + $0x88] sm:$0xff] %vm94, %v278
  %304 = vst.msk [vmem:[#allocation4 + $0x90] sm:$0xff] %vm94, %v279
  %305 = vst.msk [vmem:[#allocation4 + $0x98] sm:$0xff] %vm94, %v280
  %306 = vst.msk [vmem:[#allocation4 + $0xa0] sm:$0xff] %vm94, %v281
  %307 = vst.msk [vmem:[#allocation4 + $0xa8] sm:$0xff] %vm94, %v282
  %308 = vst.msk [vmem:[#allocation4 + $0xb0] sm:$0xff] %vm94, %v283
  %309 = vst.msk [vmem:[#allocation4 + $0xb8] sm:$0xff] %vm94, %v284
  %310 = vst.msk [vmem:[#allocation4 + $0xc0] sm:$0xff] %vm94, %v285
  %v311 = vld [vmem:[#allocation2 + $0x1] sm:$0xff]
  %v312 = vld [vmem:[#allocation2 + $0x9] sm:$0xff]
  %v313 = vld [vmem:[#allocation2 + $0x11] sm:$0xff]
  %v314 = vld [vmem:[#allocation2 + $0x19] sm:$0xff]
  %v315 = vld [vmem:[#allocation2 + $0x21] sm:$0xff]
  %v316 = vld [vmem:[#allocation2 + $0x29] sm:$0xff]
  %v317 = vld [vmem:[#allocation2 + $0x31] sm:$0xff]
  %v318 = vld [vmem:[#allocation2 + $0x39] sm:$0xff]
  %v319 = vld [vmem:[#allocation2 + $0x41] sm:$0xff]
  %v320 = vld [vmem:[#allocation2 + $0x49] sm:$0xff]
  %v321 = vld [vmem:[#allocation2 + $0x51] sm:$0xff]
  %v322 = vld [vmem:[#allocation2 + $0x59] sm:$0xff]
  %v323 = vld [vmem:[#allocation2 + $0x61] sm:$0xff]
  %v324 = vld [vmem:[#allocation2 + $0x69] sm:$0xff]
  %v325 = vld [vmem:[#allocation2 + $0x71] sm:$0xff]
  %v326 = vld [vmem:[#allocation2 + $0x79] sm:$0xff]
  %v327 = vld [vmem:[#allocation2 + $0x81] sm:$0xff]
  %v328 = vld [vmem:[#allocation2 + $0x89] sm:$0xff]
  %v329 = vld [vmem:[#allocation2 + $0x91] sm:$0xff]
  %v330 = vld [vmem:[#allocation2 + $0x99] sm:$0xff]
  %v331 = vld [vmem:[#allocation2 + $0xa1] sm:$0xff]
  %v332 = vld [vmem:[#allocation2 + $0xa9] sm:$0xff]
  %v333 = vld [vmem:[#allocation2 + $0xb1] sm:$0xff]
  %v334 = vld [vmem:[#allocation2 + $0xb9] sm:$0xff]
  %v335 = vld [vmem:[#allocation2 + $0xc1] sm:$0xff]
  %361 = vrot.lane.b32.xlu0 %v311, 4
  %v362 = vpop.permute.xlu0 %361
  %363 = vrot.lane.b32.xlu0 %v312, 4
  %v364 = vpop.permute.xlu0 %363
  %365 = vrot.lane.b32.xlu0 %v313, 4
  %v366 = vpop.permute.xlu0 %365
  %367 = vrot.lane.b32.xlu0 %v314, 4
  %v368 = vpop.permute.xlu0 %367
  %369 = vrot.lane.b32.xlu0 %v315, 4
  %v370 = vpop.permute.xlu0 %369
  %371 = vrot.lane.b32.xlu0 %v316, 4
  %v372 = vpop.permute.xlu0 %371
  %373 = vrot.lane.b32.xlu0 %v317, 4
  %v374 = vpop.permute.xlu0 %373
  %375 = vrot.lane.b32.xlu0 %v318, 4
  %v376 = vpop.permute.xlu0 %375
  %377 = vrot.lane.b32.xlu0 %v319, 4
  %v378 = vpop.permute.xlu0 %377
  %379 = vrot.lane.b32.xlu0 %v320, 4
  %v380 = vpop.permute.xlu0 %379
  %381 = vrot.lane.b32.xlu0 %v321, 4
  %v382 = vpop.permute.xlu0 %381
  %383 = vrot.lane.b32.xlu0 %v322, 4
  %v384 = vpop.permute.xlu0 %383
  %385 = vrot.lane.b32.xlu0 %v323, 4
  %v386 = vpop.permute.xlu0 %385
  %387 = vrot.lane.b32.xlu0 %v324, 4
  %v388 = vpop.permute.xlu0 %387
  %389 = vrot.lane.b32.xlu0 %v325, 4
  %v390 = vpop.permute.xlu0 %389
  %391 = vrot.lane.b32.xlu0 %v326, 4
  %v392 = vpop.permute.xlu0 %391
  %393 = vrot.lane.b32.xlu0 %v327, 4
  %v394 = vpop.permute.xlu0 %393
  %395 = vrot.lane.b32.xlu0 %v328, 4
  %v396 = vpop.permute.xlu0 %395
  %397 = vrot.lane.b32.xlu0 %v329, 4
  %v398 = vpop.permute.xlu0 %397
  %399 = vrot.lane.b32.xlu0 %v330, 4
  %v400 = vpop.permute.xlu0 %399
  %401 = vrot.lane.b32.xlu0 %v331, 4
  %v402 = vpop.permute.xlu0 %401
  %403 = vrot.lane.b32.xlu0 %v332, 4
  %v404 = vpop.permute.xlu0 %403
  %405 = vrot.lane.b32.xlu0 %v333, 4
  %v406 = vpop.permute.xlu0 %405
  %407 = vrot.lane.b32.xlu0 %v334, 4
  %v408 = vpop.permute.xlu0 %407
  %409 = vrot.lane.b32.xlu0 %v335, 4
  %v410 = vpop.permute.xlu0 %409
  %vm436 = vcmask 64544
  %437 = vst.msk [vmem:[#allocation4] sm:$0xff] %vm436, %v362
  %438 = vst.msk [vmem:[#allocation4 + $0x8] sm:$0xff] %vm436, %v364
  %439 = vst.msk [vmem:[#allocation4 + $0x10] sm:$0xff] %vm436, %v366
  %440 = vst.msk [vmem:[#allocation4 + $0x18] sm:$0xff] %vm436, %v368
  %441 = vst.msk [vmem:[#allocation4 + $0x20] sm:$0xff] %vm436, %v370
  %442 = vst.msk [vmem:[#allocation4 + $0x28] sm:$0xff] %vm436, %v372
  %443 = vst.msk [vmem:[#allocation4 + $0x30] sm:$0xff] %vm436, %v374
  %444 = vst.msk [vmem:[#allocation4 + $0x38] sm:$0xff] %vm436, %v376
  %445 = vst.msk [vmem:[#allocation4 + $0x40] sm:$0xff] %vm436, %v378
  %446 = vst.msk [vmem:[#allocation4 + $0x48] sm:$0xff] %vm436, %v380
  %447 = vst.msk [vmem:[#allocation4 + $0x50] sm:$0xff] %vm436, %v382
  %448 = vst.msk [vmem:[#allocation4 + $0x58] sm:$0xff] %vm436, %v384
  %449 = vst.msk [vmem:[#allocation4 + $0x60] sm:$0xff] %vm436, %v386
  %450 = vst.msk [vmem:[#allocation4 + $0x68] sm:$0xff] %vm436, %v388
  %451 = vst.msk [vmem:[#allocation4 + $0x70] sm:$0xff] %vm436, %v390
  %452 = vst.msk [vmem:[#allocation4 + $0x78] sm:$0xff] %vm436, %v392
  %453 = vst.msk [vmem:[#allocation4 + $0x80] sm:$0xff] %vm436, %v394
  %454 = vst.msk [vmem:[#allocation4 + $0x88] sm:$0xff] %vm436, %v396
  %455 = vst.msk [vmem:[#allocation4 + $0x90] sm:$0xff] %vm436, %v398
  %456 = vst.msk [vmem:[#allocation4 + $0x98] sm:$0xff] %vm436, %v400
  %457 = vst.msk [vmem:[#allocation4 + $0xa0] sm:$0xff] %vm436, %v402
  %458 = vst.msk [vmem:[#allocation4 + $0xa8] sm:$0xff] %vm436, %v404
  %459 = vst.msk [vmem:[#allocation4 + $0xb0] sm:$0xff] %vm436, %v406
  %460 = vst.msk [vmem:[#allocation4 + $0xb8] sm:$0xff] %vm436, %v408
  %461 = vst.msk [vmem:[#allocation4 + $0xc0] sm:$0xff] %vm436, %v410
  %v462 = vld [vmem:[#allocation2 + $0x2] sm:$0xff]
  %v463 = vld [vmem:[#allocation2 + $0xa] sm:$0xff]
  %v464 = vld [vmem:[#allocation2 + $0x12] sm:$0xff]
  %v465 = vld [vmem:[#allocation2 + $0x1a] sm:$0xff]
  %v466 = vld [vmem:[#allocation2 + $0x22] sm:$0xff]
  %v467 = vld [vmem:[#allocation2 + $0x2a] sm:$0xff]
  %v468 = vld [vmem:[#allocation2 + $0x32] sm:$0xff]
  %v469 = vld [vmem:[#allocation2 + $0x3a] sm:$0xff]
  %v470 = vld [vmem:[#allocation2 + $0x42] sm:$0xff]
  %v471 = vld [vmem:[#allocation2 + $0x4a] sm:$0xff]
  %v472 = vld [vmem:[#allocation2 + $0x52] sm:$0xff]
  %v473 = vld [vmem:[#allocation2 + $0x5a] sm:$0xff]
  %v474 = vld [vmem:[#allocation2 + $0x62] sm:$0xff]
  %v475 = vld [vmem:[#allocation2 + $0x6a] sm:$0xff]
  %v476 = vld [vmem:[#allocation2 + $0x72] sm:$0xff]
  %v477 = vld [vmem:[#allocation2 + $0x7a] sm:$0xff]
  %v478 = vld [vmem:[#allocation2 + $0x82] sm:$0xff]
  %v479 = vld [vmem:[#allocation2 + $0x8a] sm:$0xff]
  %v480 = vld [vmem:[#allocation2 + $0x92] sm:$0xff]
  %v481 = vld [vmem:[#allocation2 + $0x9a] sm:$0xff]
  %v482 = vld [vmem:[#allocation2 + $0xa2] sm:$0xff]
  %v483 = vld [vmem:[#allocation2 + $0xaa] sm:$0xff]
  %v484 = vld [vmem:[#allocation2 + $0xb2] sm:$0xff]
  %v485 = vld [vmem:[#allocation2 + $0xba] sm:$0xff]
  %v486 = vld [vmem:[#allocation2 + $0xc2] sm:$0xff]
  %512 = vrot.lane.b32.xlu0 %v462, 8
  %v513 = vpop.permute.xlu0 %512
  %514 = vrot.lane.b32.xlu0 %v463, 8
  %v515 = vpop.permute.xlu0 %514
  %516 = vrot.lane.b32.xlu0 %v464, 8
  %v517 = vpop.permute.xlu0 %516
  %518 = vrot.lane.b32.xlu0 %v465, 8
  %v519 = vpop.permute.xlu0 %518
  %520 = vrot.lane.b32.xlu0 %v466, 8
  %v521 = vpop.permute.xlu0 %520
  %522 = vrot.lane.b32.xlu0 %v467, 8
  %v523 = vpop.permute.xlu0 %522
  %524 = vrot.lane.b32.xlu0 %v468, 8
  %v525 = vpop.permute.xlu0 %524
  %526 = vrot.lane.b32.xlu0 %v469, 8
  %v527 = vpop.permute.xlu0 %526
  %528 = vrot.lane.b32.xlu0 %v470, 8
  %v529 = vpop.permute.xlu0 %528
  %530 = vrot.lane.b32.xlu0 %v471, 8
  %v531 = vpop.permute.xlu0 %530
  %532 = vrot.lane.b32.xlu0 %v472, 8
  %v533 = vpop.permute.xlu0 %532
  %534 = vrot.lane.b32.xlu0 %v473, 8
  %v535 = vpop.permute.xlu0 %534
  %536 = vrot.lane.b32.xlu0 %v474, 8
  %v537 = vpop.permute.xlu0 %536
  %538 = vrot.lane.b32.xlu0 %v475, 8
  %v539 = vpop.permute.xlu0 %538
  %540 = vrot.lane.b32.xlu0 %v476, 8
  %v541 = vpop.permute.xlu0 %540
  %542 = vrot.lane.b32.xlu0 %v477, 8
  %v543 = vpop.permute.xlu0 %542
  %544 = vrot.lane.b32.xlu0 %v478, 8
  %v545 = vpop.permute.xlu0 %544
  %546 = vrot.lane.b32.xlu0 %v479, 8
  %v547 = vpop.permute.xlu0 %546
  %548 = vrot.lane.b32.xlu0 %v480, 8
  %v549 = vpop.permute.xlu0 %548
  %550 = vrot.lane.b32.xlu0 %v481, 8
  %v551 = vpop.permute.xlu0 %550
  %552 = vrot.lane.b32.xlu0 %v482, 8
  %v553 = vpop.permute.xlu0 %552
  %554 = vrot.lane.b32.xlu0 %v483, 8
  %v555 = vpop.permute.xlu0 %554
  %556 = vrot.lane.b32.xlu0 %v484, 8
  %v557 = vpop.permute.xlu0 %556
  %558 = vrot.lane.b32.xlu0 %v485, 8
  %v559 = vpop.permute.xlu0 %558
  %560 = vrot.lane.b32.xlu0 %v486, 8
  %v561 = vpop.permute.xlu0 %560
  %vm587 = vcmask 97344
  %588 = vst.msk [vmem:[#allocation4] sm:$0xff] %vm587, %v513
  %589 = vst.msk [vmem:[#allocation4 + $0x8] sm:$0xff] %vm587, %v515
  %590 = vst.msk [vmem:[#allocation4 + $0x10] sm:$0xff] %vm587, %v517
  %591 = vst.msk [vmem:[#allocation4 + $0x18] sm:$0xff] %vm587, %v519
  %592 = vst.msk [vmem:[#allocation4 + $0x20] sm:$0xff] %vm587, %v521
  %593 = vst.msk [vmem:[#allocation4 + $0x28] sm:$0xff] %vm587, %v523
  %594 = vst.msk [vmem:[#allocation4 + $0x30] sm:$0xff] %vm587, %v525
  %595 = vst.msk [vmem:[#allocation4 + $0x38] sm:$0xff] %vm587, %v527
  %596 = vst.msk [vmem:[#allocation4 + $0x40] sm:$0xff] %vm587, %v529
  %597 = vst.msk [vmem:[#allocation4 + $0x48] sm:$0xff] %vm587, %v531
  %598 = vst.msk [vmem:[#allocation4 + $0x50] sm:$0xff] %vm587, %v533
  %599 = vst.msk [vmem:[#allocation4 + $0x58] sm:$0xff] %vm587, %v535
  %600 = vst.msk [vmem:[#allocation4 + $0x60] sm:$0xff] %vm587, %v537
  %601 = vst.msk [vmem:[#allocation4 + $0x68] sm:$0xff] %vm587, %v539
  %602 = vst.msk [vmem:[#allocation4 + $0x70] sm:$0xff] %vm587, %v541
  %603 = vst.msk [vmem:[#allocation4 + $0x78] sm:$0xff] %vm587, %v543
  %604 = vst.msk [vmem:[#allocation4 + $0x80] sm:$0xff] %vm587, %v545
  %605 = vst.msk [vmem:[#allocation4 + $0x88] sm:$0xff] %vm587, %v547
  %606 = vst.msk [vmem:[#allocation4 + $0x90] sm:$0xff] %vm587, %v549
  %607 = vst.msk [vmem:[#allocation4 + $0x98] sm:$0xff] %vm587, %v551
  %608 = vst.msk [vmem:[#allocation4 + $0xa0] sm:$0xff] %vm587, %v553
  %609 = vst.msk [vmem:[#allocation4 + $0xa8] sm:$0xff] %vm587, %v555
  %610 = vst.msk [vmem:[#allocation4 + $0xb0] sm:$0xff] %vm587, %v557
  %611 = vst.msk [vmem:[#allocation4 + $0xb8] sm:$0xff] %vm587, %v559
  %612 = vst.msk [vmem:[#allocation4 + $0xc0] sm:$0xff] %vm587, %v561
  %v613 = vld [vmem:[#allocation2 + $0xa] sm:$0xff]
  %v614 = vld [vmem:[#allocation2 + $0x12] sm:$0xff]
  %v615 = vld [vmem:[#allocation2 + $0x1a] sm:$0xff]
  %v616 = vld [vmem:[#allocation2 + $0x22] sm:$0xff]
  %v617 = vld [vmem:[#allocation2 + $0x2a] sm:$0xff]
  %v618 = vld [vmem:[#allocation2 + $0x32] sm:$0xff]
  %v619 = vld [vmem:[#allocation2 + $0x3a] sm:$0xff]
  %v620 = vld [vmem:[#allocation2 + $0x42] sm:$0xff]
  %v621 = vld [vmem:[#allocation2 + $0x4a] sm:$0xff]
  %v622 = vld [vmem:[#allocation2 + $0x52] sm:$0xff]
  %v623 = vld [vmem:[#allocation2 + $0x5a] sm:$0xff]
  %v624 = vld [vmem:[#allocation2 + $0x62] sm:$0xff]
  %v625 = vld [vmem:[#allocation2 + $0x6a] sm:$0xff]
  %v626 = vld [vmem:[#allocation2 + $0x72] sm:$0xff]
  %v627 = vld [vmem:[#allocation2 + $0x7a] sm:$0xff]
  %v628 = vld [vmem:[#allocation2 + $0x82] sm:$0xff]
  %v629 = vld [vmem:[#allocation2 + $0x8a] sm:$0xff]
  %v630 = vld [vmem:[#allocation2 + $0x92] sm:$0xff]
  %v631 = vld [vmem:[#allocation2 + $0x9a] sm:$0xff]
  %v632 = vld [vmem:[#allocation2 + $0xa2] sm:$0xff]
  %v633 = vld [vmem:[#allocation2 + $0xaa] sm:$0xff]
  %v634 = vld [vmem:[#allocation2 + $0xb2] sm:$0xff]
  %v635 = vld [vmem:[#allocation2 + $0xba] sm:$0xff]
  %v636 = vld [vmem:[#allocation2 + $0xc2] sm:$0xff]
  %v637 = vld [vmem:[#allocation2 + $0xca] sm:$0xff]
  %663 = vrot.lane.b32.xlu0 %v613, 12
  %v664 = vpop.permute.xlu0 %663
  %665 = vrot.lane.b32.xlu0 %v614, 12
  %v666 = vpop.permute.xlu0 %665
  %667 = vrot.lane.b32.xlu0 %v615, 12
  %v668 = vpop.permute.xlu0 %667
  %669 = vrot.lane.b32.xlu0 %v616, 12
  %v670 = vpop.permute.xlu0 %669
  %671 = vrot.lane.b32.xlu0 %v617, 12
  %v672 = vpop.permute.xlu0 %671
  %673 = vrot.lane.b32.xlu0 %v618, 12
  %v674 = vpop.permute.xlu0 %673
  %675 = vrot.lane.b32.xlu0 %v619, 12
  %v676 = vpop.permute.xlu0 %675
  %677 = vrot.lane.b32.xlu0 %v620, 12
  %v678 = vpop.permute.xlu0 %677
  %679 = vrot.lane.b32.xlu0 %v621, 12
  %v680 = vpop.permute.xlu0 %679
  %681 = vrot.lane.b32.xlu0 %v622, 12
  %v682 = vpop.permute.xlu0 %681
  %683 = vrot.lane.b32.xlu0 %v623, 12
  %v684 = vpop.permute.xlu0 %683
  %685 = vrot.lane.b32.xlu0 %v624, 12
  %v686 = vpop.permute.xlu0 %685
  %687 = vrot.lane.b32.xlu0 %v625, 12
  %v688 = vpop.permute.xlu0 %687
  %689 = vrot.lane.b32.xlu0 %v626, 12
  %v690 = vpop.permute.xlu0 %689
  %691 = vrot.lane.b32.xlu0 %v627, 12
  %v692 = vpop.permute.xlu0 %691
  %693 = vrot.lane.b32.xlu0 %v628, 12
  %v694 = vpop.permute.xlu0 %693
  %695 = vrot.lane.b32.xlu0 %v629, 12
  %v696 = vpop.permute.xlu0 %695
  %697 = vrot.lane.b32.xlu0 %v630, 12
  %v698 = vpop.permute.xlu0 %697
  %699 = vrot.lane.b32.xlu0 %v631, 12
  %v700 = vpop.permute.xlu0 %699
  %701 = vrot.lane.b32.xlu0 %v632, 12
  %v702 = vpop.permute.xlu0 %701
  %703 = vrot.lane.b32.xlu0 %v633, 12
  %v704 = vpop.permute.xlu0 %703
  %705 = vrot.lane.b32.xlu0 %v634, 12
  %v706 = vpop.permute.xlu0 %705
  %707 = vrot.lane.b32.xlu0 %v635, 12
  %v708 = vpop.permute.xlu0 %707
  %709 = vrot.lane.b32.xlu0 %v636, 12
  %v710 = vpop.permute.xlu0 %709
  %711 = vrot.lane.b32.xlu0 %v637, 12
  %v712 = vpop.permute.xlu0 %711
  %vm738 = vcmask 130144
  %739 = vst.msk [vmem:[#allocation4] sm:$0xff] %vm738, %v664
  %740 = vst.msk [vmem:[#allocation4 + $0x8] sm:$0xff] %vm738, %v666
  %741 = vst.msk [vmem:[#allocation4 + $0x10] sm:$0xff] %vm738, %v668
  %742 = vst.msk [vmem:[#allocation4 + $0x18] sm:$0xff] %vm738, %v670
  %743 = vst.msk [vmem:[#allocation4 + $0x20] sm:$0xff] %vm738, %v672
  %744 = vst.msk [vmem:[#allocation4 + $0x28] sm:$0xff] %vm738, %v674
  %745 = vst.msk [vmem:[#allocation4 + $0x30] sm:$0xff] %vm738, %v676
  %746 = vst.msk [vmem:[#allocation4 + $0x38] sm:$0xff] %vm738, %v678
  %747 = vst.msk [vmem:[#allocation4 + $0x40] sm:$0xff] %vm738, %v680
  %748 = vst.msk [vmem:[#allocation4 + $0x48] sm:$0xff] %vm738, %v682
  %749 = vst.msk [vmem:[#allocation4 + $0x50] sm:$0xff] %vm738, %v684
  %750 = vst.msk [vmem:[#allocation4 + $0x58] sm:$0xff] %vm738, %v686
  %751 = vst.msk [vmem:[#allocation4 + $0x60] sm:$0xff] %vm738, %v688
  %752 = vst.msk [vmem:[#allocation4 + $0x68] sm:$0xff] %vm738, %v690
  %753 = vst.msk [vmem:[#allocation4 + $0x70] sm:$0xff] %vm738, %v692
  %754 = vst.msk [vmem:[#allocation4 + $0x78] sm:$0xff] %vm738, %v694
  %755 = vst.msk [vmem:[#allocation4 + $0x80] sm:$0xff] %vm738, %v696
  %756 = vst.msk [vmem:[#allocation4 + $0x88] sm:$0xff] %vm738, %v698
  %757 = vst.msk [vmem:[#allocation4 + $0x90] sm:$0xff] %vm738, %v700
  %758 = vst.msk [vmem:[#allocation4 + $0x98] sm:$0xff] %vm738, %v702
  %759 = vst.msk [vmem:[#allocation4 + $0xa0] sm:$0xff] %vm738, %v704
  %760 = vst.msk [vmem:[#allocation4 + $0xa8] sm:$0xff] %vm738, %v706
  %761 = vst.msk [vmem:[#allocation4 + $0xb0] sm:$0xff] %vm738, %v708
  %762 = vst.msk [vmem:[#allocation4 + $0xb8] sm:$0xff] %vm738, %v710
  %763 = vst.msk [vmem:[#allocation4 + $0xc0] sm:$0xff] %vm738, %v712
  %v764 = vld [vmem:[#allocation2 + $0xb] sm:$0xff]
  %v765 = vld [vmem:[#allocation2 + $0x13] sm:$0xff]
  %v766 = vld [vmem:[#allocation2 + $0x1b] sm:$0xff]
  %v767 = vld [vmem:[#allocation2 + $0x23] sm:$0xff]
  %v768 = vld [vmem:[#allocation2 + $0x2b] sm:$0xff]
  %v769 = vld [vmem:[#allocation2 + $0x33] sm:$0xff]
  %v770 = vld [vmem:[#allocation2 + $0x3b] sm:$0xff]
  %v771 = vld [vmem:[#allocation2 + $0x43] sm:$0xff]
  %v772 = vld [vmem:[#allocation2 + $0x4b] sm:$0xff]
  %v773 = vld [vmem:[#allocation2 + $0x53] sm:$0xff]
  %v774 = vld [vmem:[#allocation2 + $0x5b] sm:$0xff]
  %v775 = vld [vmem:[#allocation2 + $0x63] sm:$0xff]
  %v776 = vld [vmem:[#allocation2 + $0x6b] sm:$0xff]
  %v777 = vld [vmem:[#allocation2 + $0x73] sm:$0xff]
  %v778 = vld [vmem:[#allocation2 + $0x7b] sm:$0xff]
  %v779 = vld [vmem:[#allocation2 + $0x83] sm:$0xff]
  %v780 = vld [vmem:[#allocation2 + $0x8b] sm:$0xff]
  %v781 = vld [vmem:[#allocation2 + $0x93] sm:$0xff]
  %v782 = vld [vmem:[#allocation2 + $0x9b] sm:$0xff]
  %v783 = vld [vmem:[#allocation2 + $0xa3] sm:$0xff]
  %v784 = vld [vmem:[#allocation2 + $0xab] sm:$0xff]
  %v785 = vld [vmem:[#allocation2 + $0xb3] sm:$0xff]
  %v786 = vld [vmem:[#allocation2 + $0xbb] sm:$0xff]
  %v787 = vld [vmem:[#allocation2 + $0xc3] sm:$0xff]
  %v788 = vld [vmem:[#allocation2 + $0xcb] sm:$0xff]
  %814 = vrot.lane.b32.xlu0 %v764, 16
  %v815 = vpop.permute.xlu0 %814
  %816 = vrot.lane.b32.xlu0 %v765, 16
  %v817 = vpop.permute.xlu0 %816
  %818 = vrot.lane.b32.xlu0 %v766, 16
  %v819 = vpop.permute.xlu0 %818
  %820 = vrot.lane.b32.xlu0 %v767, 16
  %v821 = vpop.permute.xlu0 %820
  %822 = vrot.lane.b32.xlu0 %v768, 16
  %v823 = vpop.permute.xlu0 %822
  %824 = vrot.lane.b32.xlu0 %v769, 16
  %v825 = vpop.permute.xlu0 %824
  %826 = vrot.lane.b32.xlu0 %v770, 16
  %v827 = vpop.permute.xlu0 %826
  %828 = vrot.lane.b32.xlu0 %v771, 16
  %v829 = vpop.permute.xlu0 %828
  %830 = vrot.lane.b32.xlu0 %v772, 16
  %v831 = vpop.permute.xlu0 %830
  %832 = vrot.lane.b32.xlu0 %v773, 16
  %v833 = vpop.permute.xlu0 %832
  %834 = vrot.lane.b32.xlu0 %v774, 16
  %v835 = vpop.permute.xlu0 %834
  %836 = vrot.lane.b32.xlu0 %v775, 16
  %v837 = vpop.permute.xlu0 %836
  %838 = vrot.lane.b32.xlu0 %v776, 16
  %v839 = vpop.permute.xlu0 %838
  %840 = vrot.lane.b32.xlu0 %v777, 16
  %v841 = vpop.permute.xlu0 %840
  %842 = vrot.lane.b32.xlu0 %v778, 16
  %v843 = vpop.permute.xlu0 %842
  %844 = vrot.lane.b32.xlu0 %v779, 16
  %v845 = vpop.permute.xlu0 %844
  %846 = vrot.lane.b32.xlu0 %v780, 16
  %v847 = vpop.permute.xlu0 %846
  %848 = vrot.lane.b32.xlu0 %v781, 16
  %v849 = vpop.permute.xlu0 %848
  %850 = vrot.lane.b32.xlu0 %v782, 16
  %v851 = vpop.permute.xlu0 %850
  %852 = vrot.lane.b32.xlu0 %v783, 16
  %v853 = vpop.permute.xlu0 %852
  %854 = vrot.lane.b32.xlu0 %v784, 16
  %v855 = vpop.permute.xlu0 %854
  %856 = vrot.lane.b32.xlu0 %v785, 16
  %v857 = vpop.permute.xlu0 %856
  %858 = vrot.lane.b32.xlu0 %v786, 16
  %v859 = vpop.permute.xlu0 %858
  %860 = vrot.lane.b32.xlu0 %v787, 16
  %v861 = vpop.permute.xlu0 %860
  %862 = vrot.lane.b32.xlu0 %v788, 16
  %v863 = vpop.permute.xlu0 %862
  %vm889 = vcmask 162944
  %890 = vst.msk [vmem:[#allocation4] sm:$0xff] %vm889, %v815
  %891 = vst.msk [vmem:[#allocation4 + $0x8] sm:$0xff] %vm889, %v817
  %892 = vst.msk [vmem:[#allocation4 + $0x10] sm:$0xff] %vm889, %v819
  %893 = vst.msk [vmem:[#allocation4 + $0x18] sm:$0xff] %vm889, %v821
  %894 = vst.msk [vmem:[#allocation4 + $0x20] sm:$0xff] %vm889, %v823
  %895 = vst.msk [vmem:[#allocation4 + $0x28] sm:$0xff] %vm889, %v825
  %896 = vst.msk [vmem:[#allocation4 + $0x30] sm:$0xff] %vm889, %v827
  %897 = vst.msk [vmem:[#allocation4 + $0x38] sm:$0xff] %vm889, %v829
  %898 = vst.msk [vmem:[#allocation4 + $0x40] sm:$0xff] %vm889, %v831
  %899 = vst.msk [vmem:[#allocation4 + $0x48] sm:$0xff] %vm889, %v833
  %900 = vst.msk [vmem:[#allocation4 + $0x50] sm:$0xff] %vm889, %v835
  %901 = vst.msk [vmem:[#allocation4 + $0x58] sm:$0xff] %vm889, %v837
  %902 = vst.msk [vmem:[#allocation4 + $0x60] sm:$0xff] %vm889, %v839
  %903 = vst.msk [vmem:[#allocation4 + $0x68] sm:$0xff] %vm889, %v841
  %904 = vst.msk [vmem:[#allocation4 + $0x70] sm:$0xff] %vm889, %v843
  %905 = vst.msk [vmem:[#allocation4 + $0x78] sm:$0xff] %vm889, %v845
  %906 = vst.msk [vmem:[#allocation4 + $0x80] sm:$0xff] %vm889, %v847
  %907 = vst.msk [vmem:[#allocation4 + $0x88] sm:$0xff] %vm889, %v849
  %908 = vst.msk [vmem:[#allocation4 + $0x90] sm:$0xff] %vm889, %v851
  %909 = vst.msk [vmem:[#allocation4 + $0x98] sm:$0xff] %vm889, %v853
  %910 = vst.msk [vmem:[#allocation4 + $0xa0] sm:$0xff] %vm889, %v855
  %911 = vst.msk [vmem:[#allocation4 + $0xa8] sm:$0xff] %vm889, %v857
  %912 = vst.msk [vmem:[#allocation4 + $0xb0] sm:$0xff] %vm889, %v859
  %913 = vst.msk [vmem:[#allocation4 + $0xb8] sm:$0xff] %vm889, %v861
  %914 = vst.msk [vmem:[#allocation4 + $0xc0] sm:$0xff] %vm889, %v863
  %v915 = vld [vmem:[#allocation2 + $0xc] sm:$0xff]
  %v916 = vld [vmem:[#allocation2 + $0x14] sm:$0xff]
  %v917 = vld [vmem:[#allocation2 + $0x1c] sm:$0xff]
  %v918 = vld [vmem:[#allocation2 + $0x24] sm:$0xff]
  %v919 = vld [vmem:[#allocation2 + $0x2c] sm:$0xff]
  %v920 = vld [vmem:[#allocation2 + $0x34] sm:$0xff]
  %v921 = vld [vmem:[#allocation2 + $0x3c] sm:$0xff]
  %v922 = vld [vmem:[#allocation2 + $0x44] sm:$0xff]
  %v923 = vld [vmem:[#allocation2 + $0x4c] sm:$0xff]
  %v924 = vld [vmem:[#allocation2 + $0x54] sm:$0xff]
  %v925 = vld [vmem:[#allocation2 + $0x5c] sm:$0xff]
  %v926 = vld [vmem:[#allocation2 + $0x64] sm:$0xff]
  %v927 = vld [vmem:[#allocation2 + $0x6c] sm:$0xff]
  %v928 = vld [vmem:[#allocation2 + $0x74] sm:$0xff]
  %v929 = vld [vmem:[#allocation2 + $0x7c] sm:$0xff]
  %v930 = vld [vmem:[#allocation2 + $0x84] sm:$0xff]
  %v931 = vld [vmem:[#allocation2 + $0x8c] sm:$0xff]
  %v932 = vld [vmem:[#allocation2 + $0x94] sm:$0xff]
  %v933 = vld [vmem:[#allocation2 + $0x9c] sm:$0xff]
  %v934 = vld [vmem:[#allocation2 + $0xa4] sm:$0xff]
  %v935 = vld [vmem:[#allocation2 + $0xac] sm:$0xff]
  %v936 = vld [vmem:[#allocation2 + $0xb4] sm:$0xff]
  %v937 = vld [vmem:[#allocation2 + $0xbc] sm:$0xff]
  %v938 = vld [vmem:[#allocation2 + $0xc4] sm:$0xff]
  %v939 = vld [vmem:[#allocation2 + $0xcc] sm:$0xff]
  %965 = vrot.lane.b32.xlu0 %v915, 20
  %v966 = vpop.permute.xlu0 %965
  %967 = vrot.lane.b32.xlu0 %v916, 20
  %v968 = vpop.permute.xlu0 %967
  %969 = vrot.lane.b32.xlu0 %v917, 20
  %v970 = vpop.permute.xlu0 %969
  %971 = vrot.lane.b32.xlu0 %v918, 20
  %v972 = vpop.permute.xlu0 %971
  %973 = vrot.lane.b32.xlu0 %v919, 20
  %v974 = vpop.permute.xlu0 %973
  %975 = vrot.lane.b32.xlu0 %v920, 20
  %v976 = vpop.permute.xlu0 %975
  %977 = vrot.lane.b32.xlu0 %v921, 20
  %v978 = vpop.permute.xlu0 %977
  %979 = vrot.lane.b32.xlu0 %v922, 20
  %v980 = vpop.permute.xlu0 %979
  %981 = vrot.lane.b32.xlu0 %v923, 20
  %v982 = vpop.permute.xlu0 %981
  %983 = vrot.lane.b32.xlu0 %v924, 20
  %v984 = vpop.permute.xlu0 %983
  %985 = vrot.lane.b32.xlu0 %v925, 20
  %v986 = vpop.permute.xlu0 %985
  %987 = vrot.lane.b32.xlu0 %v926, 20
  %v988 = vpop.permute.xlu0 %987
  %989 = vrot.lane.b32.xlu0 %v927, 20
  %v990 = vpop.permute.xlu0 %989
  %991 = vrot.lane.b32.xlu0 %v928, 20
  %v992 = vpop.permute.xlu0 %991
  %993 = vrot.lane.b32.xlu0 %v929, 20
  %v994 = vpop.permute.xlu0 %993
  %995 = vrot.lane.b32.xlu0 %v930, 20
  %v996 = vpop.permute.xlu0 %995
  %997 = vrot.lane.b32.xlu0 %v931, 20
  %v998 = vpop.permute.xlu0 %997
  %999 = vrot.lane.b32.xlu0 %v932, 20
  %v1000 = vpop.permute.xlu0 %999
  %1001 = vrot.lane.b32.xlu0 %v933, 20
  %v1002 = vpop.permute.xlu0 %1001
  %1003 = vrot.lane.b32.xlu0 %v934, 20
  %v1004 = vpop.permute.xlu0 %1003
  %1005 = vrot.lane.b32.xlu0 %v935, 20
  %v1006 = vpop.permute.xlu0 %1005
  %1007 = vrot.lane.b32.xlu0 %v936, 20
  %v1008 = vpop.permute.xlu0 %1007
  %1009 = vrot.lane.b32.xlu0 %v937, 20
  %v1010 = vpop.permute.xlu0 %1009
  %1011 = vrot.lane.b32.xlu0 %v938, 20
  %v1012 = vpop.permute.xlu0 %1011
  %1013 = vrot.lane.b32.xlu0 %v939, 20
  %v1014 = vpop.permute.xlu0 %1013
  %vm1040 = vcmask 195744
  %1041 = vst.msk [vmem:[#allocation4] sm:$0xff] %vm1040, %v966
  %1042 = vst.msk [vmem:[#allocation4 + $0x8] sm:$0xff] %vm1040, %v968
  %1043 = vst.msk [vmem:[#allocation4 + $0x10] sm:$0xff] %vm1040, %v970
  %1044 = vst.msk [vmem:[#allocation4 + $0x18] sm:$0xff] %vm1040, %v972
  %1045 = vst.msk [vmem:[#allocation4 + $0x20] sm:$0xff] %vm1040, %v974
  %1046 = vst.msk [vmem:[#allocation4 + $0x28] sm:$0xff] %vm1040, %v976
  %1047 = vst.msk [vmem:[#allocation4 + $0x30] sm:$0xff] %vm1040, %v978
  %1048 = vst.msk [vmem:[#allocation4 + $0x38] sm:$0xff] %vm1040, %v980
  %1049 = vst.msk [vmem:[#allocation4 + $0x40] sm:$0xff] %vm1040, %v982
  %1050 = vst.msk [vmem:[#allocation4 + $0x48] sm:$0xff] %vm1040, %v984
  %1051 = vst.msk [vmem:[#allocation4 + $0x50] sm:$0xff] %vm1040, %v986
  %1052 = vst.msk [vmem:[#allocation4 + $0x58] sm:$0xff] %vm1040, %v988
  %1053 = vst.msk [vmem:[#allocation4 + $0x60] sm:$0xff] %vm1040, %v990
  %1054 = vst.msk [vmem:[#allocation4 + $0x68] sm:$0xff] %vm1040, %v992
  %1055 = vst.msk [vmem:[#allocation4 + $0x70] sm:$0xff] %vm1040, %v994
  %1056 = vst.msk [vmem:[#allocation4 + $0x78] sm:$0xff] %vm1040, %v996
  %1057 = vst.msk [vmem:[#allocation4 + $0x80] sm:$0xff] %vm1040, %v998
  %1058 = vst.msk [vmem:[#allocation4 + $0x88] sm:$0xff] %vm1040, %v1000
  %1059 = vst.msk [vmem:[#allocation4 + $0x90] sm:$0xff] %vm1040, %v1002
  %1060 = vst.msk [vmem:[#allocation4 + $0x98] sm:$0xff] %vm1040, %v1004
  %1061 = vst.msk [vmem:[#allocation4 + $0xa0] sm:$0xff] %vm1040, %v1006
  %1062 = vst.msk [vmem:[#allocation4 + $0xa8] sm:$0xff] %vm1040, %v1008
  %1063 = vst.msk [vmem:[#allocation4 + $0xb0] sm:$0xff] %vm1040, %v1010
  %1064 = vst.msk [vmem:[#allocation4 + $0xb8] sm:$0xff] %vm1040, %v1012
  %1065 = vst.msk [vmem:[#allocation4 + $0xc0] sm:$0xff] %vm1040, %v1014
  %v1066 = vld [vmem:[#allocation2 + $0x14] sm:$0xff]
  %v1067 = vld [vmem:[#allocation2 + $0x1c] sm:$0xff]
  %v1068 = vld [vmem:[#allocation2 + $0x24] sm:$0xff]
  %v1069 = vld [vmem:[#allocation2 + $0x2c] sm:$0xff]
  %v1070 = vld [vmem:[#allocation2 + $0x34] sm:$0xff]
  %v1071 = vld [vmem:[#allocation2 + $0x3c] sm:$0xff]
  %v1072 = vld [vmem:[#allocation2 + $0x44] sm:$0xff]
  %v1073 = vld [vmem:[#allocation2 + $0x4c] sm:$0xff]
  %v1074 = vld [vmem:[#allocation2 + $0x54] sm:$0xff]
  %v1075 = vld [vmem:[#allocation2 + $0x5c] sm:$0xff]
  %v1076 = vld [vmem:[#allocation2 + $0x64] sm:$0xff]
  %v1077 = vld [vmem:[#allocation2 + $0x6c] sm:$0xff]
  %v1078 = vld [vmem:[#allocation2 + $0x74] sm:$0xff]
  %v1079 = vld [vmem:[#allocation2 + $0x7c] sm:$0xff]
  %v1080 = vld [vmem:[#allocation2 + $0x84] sm:$0xff]
  %v1081 = vld [vmem:[#allocation2 + $0x8c] sm:$0xff]
  %v1082 = vld [vmem:[#allocation2 + $0x94] sm:$0xff]
  %v1083 = vld [vmem:[#allocation2 + $0x9c] sm:$0xff]
  %v1084 = vld [vmem:[#allocation2 + $0xa4] sm:$0xff]
  %v1085 = vld [vmem:[#allocation2 + $0xac] sm:$0xff]
  %v1086 = vld [vmem:[#allocation2 + $0xb4] sm:$0xff]
  %v1087 = vld [vmem:[#allocation2 + $0xbc] sm:$0xff]
  %v1088 = vld [vmem:[#allocation2 + $0xc4] sm:$0xff]
  %v1089 = vld [vmem:[#allocation2 + $0xcc] sm:$0xff]
  %v1090 = vld [vmem:[#allocation2 + $0xd4] sm:$0xff]
  %1116 = vrot.lane.b32.xlu0 %v1066, 24
  %v1117 = vpop.permute.xlu0 %1116
  %1118 = vrot.lane.b32.xlu0 %v1067, 24
  %v1119 = vpop.permute.xlu0 %1118
  %1120 = vrot.lane.b32.xlu0 %v1068, 24
  %v1121 = vpop.permute.xlu0 %1120
  %1122 = vrot.lane.b32.xlu0 %v1069, 24
  %v1123 = vpop.permute.xlu0 %1122
  %1124 = vrot.lane.b32.xlu0 %v1070, 24
  %v1125 = vpop.permute.xlu0 %1124
  %1126 = vrot.lane.b32.xlu0 %v1071, 24
  %v1127 = vpop.permute.xlu0 %1126
  %1128 = vrot.lane.b32.xlu0 %v1072, 24
  %v1129 = vpop.permute.xlu0 %1128
  %1130 = vrot.lane.b32.xlu0 %v1073, 24
  %v1131 = vpop.permute.xlu0 %1130
  %1132 = vrot.lane.b32.xlu0 %v1074, 24
  %v1133 = vpop.permute.xlu0 %1132
  %1134 = vrot.lane.b32.xlu0 %v1075, 24
  %v1135 = vpop.permute.xlu0 %1134
  %1136 = vrot.lane.b32.xlu0 %v1076, 24
  %v1137 = vpop.permute.xlu0 %1136
  %1138 = vrot.lane.b32.xlu0 %v1077, 24
  %v1139 = vpop.permute.xlu0 %1138
  %1140 = vrot.lane.b32.xlu0 %v1078, 24
  %v1141 = vpop.permute.xlu0 %1140
  %1142 = vrot.lane.b32.xlu0 %v1079, 24
  %v1143 = vpop.permute.xlu0 %1142
  %1144 = vrot.lane.b32.xlu0 %v1080, 24
  %v1145 = vpop.permute.xlu0 %1144
  %1146 = vrot.lane.b32.xlu0 %v1081, 24
  %v1147 = vpop.permute.xlu0 %1146
  %1148 = vrot.lane.b32.xlu0 %v1082, 24
  %v1149 = vpop.permute.xlu0 %1148
  %1150 = vrot.lane.b32.xlu0 %v1083, 24
  %v1151 = vpop.permute.xlu0 %1150
  %1152 = vrot.lane.b32.xlu0 %v1084, 24
  %v1153 = vpop.permute.xlu0 %1152
  %1154 = vrot.lane.b32.xlu0 %v1085, 24
  %v1155 = vpop.permute.xlu0 %1154
  %1156 = vrot.lane.b32.xlu0 %v1086, 24
  %v1157 = vpop.permute.xlu0 %1156
  %1158 = vrot.lane.b32.xlu0 %v1087, 24
  %v1159 = vpop.permute.xlu0 %1158
  %1160 = vrot.lane.b32.xlu0 %v1088, 24
  %v1161 = vpop.permute.xlu0 %1160
  %1162 = vrot.lane.b32.xlu0 %v1089, 24
  %v1163 = vpop.permute.xlu0 %1162
  %1164 = vrot.lane.b32.xlu0 %v1090, 24
  %v1165 = vpop.permute.xlu0 %1164
  %vm1191 = vcmask 228544
  %1192 = vst.msk [vmem:[#allocation4] sm:$0xff] %vm1191, %v1117
  %1193 = vst.msk [vmem:[#allocation4 + $0x8] sm:$0xff] %vm1191, %v1119
  %1194 = vst.msk [vmem:[#allocation4 + $0x10] sm:$0xff] %vm1191, %v1121
  %1195 = vst.msk [vmem:[#allocation4 + $0x18] sm:$0xff] %vm1191, %v1123
  %1196 = vst.msk [vmem:[#allocation4 + $0x20] sm:$0xff] %vm1191, %v1125
  %1197 = vst.msk [vmem:[#allocation4 + $0x28] sm:$0xff] %vm1191, %v1127
  %1198 = vst.msk [vmem:[#allocation4 + $0x30] sm:$0xff] %vm1191, %v1129
  %1199 = vst.msk [vmem:[#allocation4 + $0x38] sm:$0xff] %vm1191, %v1131
  %1200 = vst.msk [vmem:[#allocation4 + $0x40] sm:$0xff] %vm1191, %v1133
  %1201 = vst.msk [vmem:[#allocation4 + $0x48] sm:$0xff] %vm1191, %v1135
  %1202 = vst.msk [vmem:[#allocation4 + $0x50] sm:$0xff] %vm1191, %v1137
  %1203 = vst.msk [vmem:[#allocation4 + $0x58] sm:$0xff] %vm1191, %v1139
  %1204 = vst.msk [vmem:[#allocation4 + $0x60] sm:$0xff] %vm1191, %v1141
  %1205 = vst.msk [vmem:[#allocation4 + $0x68] sm:$0xff] %vm1191, %v1143
  %1206 = vst.msk [vmem:[#allocation4 + $0x70] sm:$0xff] %vm1191, %v1145
  %1207 = vst.msk [vmem:[#allocation4 + $0x78] sm:$0xff] %vm1191, %v1147
  %1208 = vst.msk [vmem:[#allocation4 + $0x80] sm:$0xff] %vm1191, %v1149
  %1209 = vst.msk [vmem:[#allocation4 + $0x88] sm:$0xff] %vm1191, %v1151
  %1210 = vst.msk [vmem:[#allocation4 + $0x90] sm:$0xff] %vm1191, %v1153
  %1211 = vst.msk [vmem:[#allocation4 + $0x98] sm:$0xff] %vm1191, %v1155
  %1212 = vst.msk [vmem:[#allocation4 + $0xa0] sm:$0xff] %vm1191, %v1157
  %1213 = vst.msk [vmem:[#allocation4 + $0xa8] sm:$0xff] %vm1191, %v1159
  %1214 = vst.msk [vmem:[#allocation4 + $0xb0] sm:$0xff] %vm1191, %v1161
  %1215 = vst.msk [vmem:[#allocation4 + $0xb8] sm:$0xff] %vm1191, %v1163
  %1216 = vst.msk [vmem:[#allocation4 + $0xc0] sm:$0xff] %vm1191, %v1165
  %v1217 = vld [vmem:[#allocation2 + $0x15] sm:$0xff]
  %v1218 = vld [vmem:[#allocation2 + $0x1d] sm:$0xff]
  %v1219 = vld [vmem:[#allocation2 + $0x25] sm:$0xff]
  %v1220 = vld [vmem:[#allocation2 + $0x2d] sm:$0xff]
  %v1221 = vld [vmem:[#allocation2 + $0x35] sm:$0xff]
  %v1222 = vld [vmem:[#allocation2 + $0x3d] sm:$0xff]
  %v1223 = vld [vmem:[#allocation2 + $0x45] sm:$0xff]
  %v1224 = vld [vmem:[#allocation2 + $0x4d] sm:$0xff]
  %v1225 = vld [vmem:[#allocation2 + $0x55] sm:$0xff]
  %v1226 = vld [vmem:[#allocation2 + $0x5d] sm:$0xff]
  %v1227 = vld [vmem:[#allocation2 + $0x65] sm:$0xff]
  %v1228 = vld [vmem:[#allocation2 + $0x6d] sm:$0xff]
  %v1229 = vld [vmem:[#allocation2 + $0x75] sm:$0xff]
  %v1230 = vld [vmem:[#allocation2 + $0x7d] sm:$0xff]
  %v1231 = vld [vmem:[#allocation2 + $0x85] sm:$0xff]
  %v1232 = vld [vmem:[#allocation2 + $0x8d] sm:$0xff]
  %v1233 = vld [vmem:[#allocation2 + $0x95] sm:$0xff]
  %v1234 = vld [vmem:[#allocation2 + $0x9d] sm:$0xff]
  %v1235 = vld [vmem:[#allocation2 + $0xa5] sm:$0xff]
  %v1236 = vld [vmem:[#allocation2 + $0xad] sm:$0xff]
  %v1237 = vld [vmem:[#allocation2 + $0xb5] sm:$0xff]
  %v1238 = vld [vmem:[#allocation2 + $0xbd] sm:$0xff]
  %v1239 = vld [vmem:[#allocation2 + $0xc5] sm:$0xff]
  %v1240 = vld [vmem:[#allocation2 + $0xcd] sm:$0xff]
  %v1241 = vld [vmem:[#allocation2 + $0xd5] sm:$0xff]
  %1267 = vrot.lane.b32.xlu0 %v1217, 28
  %v1268 = vpop.permute.xlu0 %1267
  %1269 = vrot.lane.b32.xlu0 %v1218, 28
  %v1270 = vpop.permute.xlu0 %1269
  %1271 = vrot.lane.b32.xlu0 %v1219, 28
  %v1272 = vpop.permute.xlu0 %1271
  %1273 = vrot.lane.b32.xlu0 %v1220, 28
  %v1274 = vpop.permute.xlu0 %1273
  %1275 = vrot.lane.b32.xlu0 %v1221, 28
  %v1276 = vpop.permute.xlu0 %1275
  %1277 = vrot.lane.b32.xlu0 %v1222, 28
  %v1278 = vpop.permute.xlu0 %1277
  %1279 = vrot.lane.b32.xlu0 %v1223, 28
  %v1280 = vpop.permute.xlu0 %1279
  %1281 = vrot.lane.b32.xlu0 %v1224, 28
  %v1282 = vpop.permute.xlu0 %1281
  %1283 = vrot.lane.b32.xlu0 %v1225, 28
  %v1284 = vpop.permute.xlu0 %1283
  %1285 = vrot.lane.b32.xlu0 %v1226, 28
  %v1286 = vpop.permute.xlu0 %1285
  %1287 = vrot.lane.b32.xlu0 %v1227, 28
  %v1288 = vpop.permute.xlu0 %1287
  %1289 = vrot.lane.b32.xlu0 %v1228, 28
  %v1290 = vpop.permute.xlu0 %1289
  %1291 = vrot.lane.b32.xlu0 %v1229, 28
  %v1292 = vpop.permute.xlu0 %1291
  %1293 = vrot.lane.b32.xlu0 %v1230, 28
  %v1294 = vpop.permute.xlu0 %1293
  %1295 = vrot.lane.b32.xlu0 %v1231, 28
  %v1296 = vpop.permute.xlu0 %1295
  %1297 = vrot.lane.b32.xlu0 %v1232, 28
  %v1298 = vpop.permute.xlu0 %1297
  %1299 = vrot.lane.b32.xlu0 %v1233, 28
  %v1300 = vpop.permute.xlu0 %1299
  %1301 = vrot.lane.b32.xlu0 %v1234, 28
  %v1302 = vpop.permute.xlu0 %1301
  %1303 = vrot.lane.b32.xlu0 %v1235, 28
  %v1304 = vpop.permute.xlu0 %1303
  %1305 = vrot.lane.b32.xlu0 %v1236, 28
  %v1306 = vpop.permute.xlu0 %1305
  %1307 = vrot.lane.b32.xlu0 %v1237, 28
  %v1308 = vpop.permute.xlu0 %1307
  %1309 = vrot.lane.b32.xlu0 %v1238, 28
  %v1310 = vpop.permute.xlu0 %1309
  %1311 = vrot.lane.b32.xlu0 %v1239, 28
  %v1312 = vpop.permute.xlu0 %1311
  %1313 = vrot.lane.b32.xlu0 %v1240, 28
  %v1314 = vpop.permute.xlu0 %1313
  %1315 = vrot.lane.b32.xlu0 %v1241, 28
  %v1316 = vpop.permute.xlu0 %1315
  %vm1342 = vcmask 261344
  %1343 = vst.msk [vmem:[#allocation4] sm:$0xff] %vm1342, %v1268
  %1344 = vst.msk [vmem:[#allocation4 + $0x8] sm:$0xff] %vm1342, %v1270
  %1345 = vst.msk [vmem:[#allocation4 + $0x10] sm:$0xff] %vm1342, %v1272
  %1346 = vst.msk [vmem:[#allocation4 + $0x18] sm:$0xff] %vm1342, %v1274
  %1347 = vst.msk [vmem:[#allocation4 + $0x20] sm:$0xff] %vm1342, %v1276
  %1348 = vst.msk [vmem:[#allocation4 + $0x28] sm:$0xff] %vm1342, %v1278
  %1349 = vst.msk [vmem:[#allocation4 + $0x30] sm:$0xff] %vm1342, %v1280
  %1350 = vst.msk [vmem:[#allocation4 + $0x38] sm:$0xff] %vm1342, %v1282
  %1351 = vst.msk [vmem:[#allocation4 + $0x40] sm:$0xff] %vm1342, %v1284
  %1352 = vst.msk [vmem:[#allocation4 + $0x48] sm:$0xff] %vm1342, %v1286
  %1353 = vst.msk [vmem:[#allocation4 + $0x50] sm:$0xff] %vm1342, %v1288
  %1354 = vst.msk [vmem:[#allocation4 + $0x58] sm:$0xff] %vm1342, %v1290
  %1355 = vst.msk [vmem:[#allocation4 + $0x60] sm:$0xff] %vm1342, %v1292
  %1356 = vst.msk [vmem:[#allocation4 + $0x68] sm:$0xff] %vm1342, %v1294
  %1357 = vst.msk [vmem:[#allocation4 + $0x70] sm:$0xff] %vm1342, %v1296
  %1358 = vst.msk [vmem:[#allocation4 + $0x78] sm:$0xff] %vm1342, %v1298
  %1359 = vst.msk [vmem:[#allocation4 + $0x80] sm:$0xff] %vm1342, %v1300
  %1360 = vst.msk [vmem:[#allocation4 + $0x88] sm:$0xff] %vm1342, %v1302
  %1361 = vst.msk [vmem:[#allocation4 + $0x90] sm:$0xff] %vm1342, %v1304
  %1362 = vst.msk [vmem:[#allocation4 + $0x98] sm:$0xff] %vm1342, %v1306
  %1363 = vst.msk [vmem:[#allocation4 + $0xa0] sm:$0xff] %vm1342, %v1308
  %1364 = vst.msk [vmem:[#allocation4 + $0xa8] sm:$0xff] %vm1342, %v1310
  %1365 = vst.msk [vmem:[#allocation4 + $0xb0] sm:$0xff] %vm1342, %v1312
  %1366 = vst.msk [vmem:[#allocation4 + $0xb8] sm:$0xff] %vm1342, %v1314
  %1367 = vst.msk [vmem:[#allocation4 + $0xc0] sm:$0xff] %vm1342, %v1316
  %v1368 = vld [vmem:[#allocation2 + $0x16] sm:$0xff]
  %v1369 = vld [vmem:[#allocation2 + $0x1e] sm:$0xff]
  %v1370 = vld [vmem:[#allocation2 + $0x26] sm:$0xff]
  %v1371 = vld [vmem:[#allocation2 + $0x2e] sm:$0xff]
  %v1372 = vld [vmem:[#allocation2 + $0x36] sm:$0xff]
  %v1373 = vld [vmem:[#allocation2 + $0x3e] sm:$0xff]
  %v1374 = vld [vmem:[#allocation2 + $0x46] sm:$0xff]
  %v1375 = vld [vmem:[#allocation2 + $0x4e] sm:$0xff]
  %v1376 = vld [vmem:[#allocation2 + $0x56] sm:$0xff]
  %v1377 = vld [vmem:[#allocation2 + $0x5e] sm:$0xff]
  %v1378 = vld [vmem:[#allocation2 + $0x66] sm:$0xff]
  %v1379 = vld [vmem:[#allocation2 + $0x6e] sm:$0xff]
  %v1380 = vld [vmem:[#allocation2 + $0x76] sm:$0xff]
  %v1381 = vld [vmem:[#allocation2 + $0x7e] sm:$0xff]
  %v1382 = vld [vmem:[#allocation2 + $0x86] sm:$0xff]
  %v1383 = vld [vmem:[#allocation2 + $0x8e] sm:$0xff]
  %v1384 = vld [vmem:[#allocation2 + $0x96] sm:$0xff]
  %v1385 = vld [vmem:[#allocation2 + $0x9e] sm:$0xff]
  %v1386 = vld [vmem:[#allocation2 + $0xa6] sm:$0xff]
  %v1387 = vld [vmem:[#allocation2 + $0xae] sm:$0xff]
  %v1388 = vld [vmem:[#allocation2 + $0xb6] sm:$0xff]
  %v1389 = vld [vmem:[#allocation2 + $0xbe] sm:$0xff]
  %v1390 = vld [vmem:[#allocation2 + $0xc6] sm:$0xff]
  %v1391 = vld [vmem:[#allocation2 + $0xce] sm:$0xff]
  %v1392 = vld [vmem:[#allocation2 + $0xd6] sm:$0xff]
  %1418 = vrot.lane.b32.xlu0 %v1368, 32
  %v1419 = vpop.permute.xlu0 %1418
  %1420 = vrot.lane.b32.xlu0 %v1369, 32
  %v1421 = vpop.permute.xlu0 %1420
  %1422 = vrot.lane.b32.xlu0 %v1370, 32
  %v1423 = vpop.permute.xlu0 %1422
  %1424 = vrot.lane.b32.xlu0 %v1371, 32
  %v1425 = vpop.permute.xlu0 %1424
  %1426 = vrot.lane.b32.xlu0 %v1372, 32
  %v1427 = vpop.permute.xlu0 %1426
  %1428 = vrot.lane.b32.xlu0 %v1373, 32
  %v1429 = vpop.permute.xlu0 %1428
  %1430 = vrot.lane.b32.xlu0 %v1374, 32
  %v1431 = vpop.permute.xlu0 %1430
  %1432 = vrot.lane.b32.xlu0 %v1375, 32
  %v1433 = vpop.permute.xlu0 %1432
  %1434 = vrot.lane.b32.xlu0 %v1376, 32
  %v1435 = vpop.permute.xlu0 %1434
  %1436 = vrot.lane.b32.xlu0 %v1377, 32
  %v1437 = vpop.permute.xlu0 %1436
  %1438 = vrot.lane.b32.xlu0 %v1378, 32
  %v1439 = vpop.permute.xlu0 %1438
  %1440 = vrot.lane.b32.xlu0 %v1379, 32
  %v1441 = vpop.permute.xlu0 %1440
  %1442 = vrot.lane.b32.xlu0 %v1380, 32
  %v1443 = vpop.permute.xlu0 %1442
  %1444 = vrot.lane.b32.xlu0 %v1381, 32
  %v1445 = vpop.permute.xlu0 %1444
  %1446 = vrot.lane.b32.xlu0 %v1382, 32
  %v1447 = vpop.permute.xlu0 %1446
  %1448 = vrot.lane.b32.xlu0 %v1383, 32
  %v1449 = vpop.permute.xlu0 %1448
  %1450 = vrot.lane.b32.xlu0 %v1384, 32
  %v1451 = vpop.permute.xlu0 %1450
  %1452 = vrot.lane.b32.xlu0 %v1385, 32
  %v1453 = vpop.permute.xlu0 %1452
  %1454 = vrot.lane.b32.xlu0 %v1386, 32
  %v1455 = vpop.permute.xlu0 %1454
  %1456 = vrot.lane.b32.xlu0 %v1387, 32
  %v1457 = vpop.permute.xlu0 %1456
  %1458 = vrot.lane.b32.xlu0 %v1388, 32
  %v1459 = vpop.permute.xlu0 %1458
  %1460 = vrot.lane.b32.xlu0 %v1389, 32
  %v1461 = vpop.permute.xlu0 %1460
  %1462 = vrot.lane.b32.xlu0 %v1390, 32
  %v1463 = vpop.permute.xlu0 %1462
  %1464 = vrot.lane.b32.xlu0 %v1391, 32
  %v1465 = vpop.permute.xlu0 %1464
  %1466 = vrot.lane.b32.xlu0 %v1392, 32
  %v1467 = vpop.permute.xlu0 %1466
  %vm1493 = vcmask 294144
  %1494 = vst.msk [vmem:[#allocation4] sm:$0xff] %vm1493, %v1419
  %1495 = vst.msk [vmem:[#allocation4 + $0x8] sm:$0xff] %vm1493, %v1421
  %1496 = vst.msk [vmem:[#allocation4 + $0x10] sm:$0xff] %vm1493, %v1423
  %1497 = vst.msk [vmem:[#allocation4 + $0x18] sm:$0xff] %vm1493, %v1425
  %1498 = vst.msk [vmem:[#allocation4 + $0x20] sm:$0xff] %vm1493, %v1427
  %1499 = vst.msk [vmem:[#allocation4 + $0x28] sm:$0xff] %vm1493, %v1429
  %1500 = vst.msk [vmem:[#allocation4 + $0x30] sm:$0xff] %vm1493, %v1431
  %1501 = vst.msk [vmem:[#allocation4 + $0x38] sm:$0xff] %vm1493, %v1433
  %1502 = vst.msk [vmem:[#allocation4 + $0x40] sm:$0xff] %vm1493, %v1435
  %1503 = vst.msk [vmem:[#allocation4 + $0x48] sm:$0xff] %vm1493, %v1437
  %1504 = vst.msk [vmem:[#allocation4 + $0x50] sm:$0xff] %vm1493, %v1439
  %1505 = vst.msk [vmem:[#allocation4 + $0x58] sm:$0xff] %vm1493, %v1441
  %1506 = vst.msk [vmem:[#allocation4 + $0x60] sm:$0xff] %vm1493, %v1443
  %1507 = vst.msk [vmem:[#allocation4 + $0x68] sm:$0xff] %vm1493, %v1445
  %1508 = vst.msk [vmem:[#allocation4 + $0x70] sm:$0xff] %vm1493, %v1447
  %1509 = vst.msk [vmem:[#allocation4 + $0x78] sm:$0xff] %vm1493, %v1449
  %1510 = vst.msk [vmem:[#allocation4 + $0x80] sm:$0xff] %vm1493, %v1451
  %1511 = vst.msk [vmem:[#allocation4 + $0x88] sm:$0xff] %vm1493, %v1453
  %1512 = vst.msk [vmem:[#allocation4 + $0x90] sm:$0xff] %vm1493, %v1455
  %1513 = vst.msk [vmem:[#allocation4 + $0x98] sm:$0xff] %vm1493, %v1457
  %1514 = vst.msk [vmem:[#allocation4 + $0xa0] sm:$0xff] %vm1493, %v1459
  %1515 = vst.msk [vmem:[#allocation4 + $0xa8] sm:$0xff] %vm1493, %v1461
  %1516 = vst.msk [vmem:[#allocation4 + $0xb0] sm:$0xff] %vm1493, %v1463
  %1517 = vst.msk [vmem:[#allocation4 + $0xb8] sm:$0xff] %vm1493, %v1465
  %1518 = vst.msk [vmem:[#allocation4 + $0xc0] sm:$0xff] %vm1493, %v1467
  %v1519 = vld [vmem:[#allocation4] sm:$0xff]
  %v1520 = vld [vmem:[#allocation4 + $0x8] sm:$0xff]
  %v1521 = vld [vmem:[#allocation4 + $0x10] sm:$0xff]
  %v1522 = vld [vmem:[#allocation4 + $0x18] sm:$0xff]
  %v1523 = vld [vmem:[#allocation4 + $0x20] sm:$0xff]
  %v1524 = vld [vmem:[#allocation4 + $0x28] sm:$0xff]
  %v1525 = vld [vmem:[#allocation4 + $0x30] sm:$0xff]
  %v1526 = vld [vmem:[#allocation4 + $0x38] sm:$0xff]
  %v1527 = vld [vmem:[#allocation4 + $0x40] sm:$0xff]
  %v1528 = vld [vmem:[#allocation4 + $0x48] sm:$0xff]
  %v1529 = vld [vmem:[#allocation4 + $0x50] sm:$0xff]
  %v1530 = vld [vmem:[#allocation4 + $0x58] sm:$0xff]
  %v1531 = vld [vmem:[#allocation4 + $0x60] sm:$0xff]
  %v1532 = vld [vmem:[#allocation4 + $0x68] sm:$0xff]
  %v1533 = vld [vmem:[#allocation4 + $0x70] sm:$0xff]
  %v1534 = vld [vmem:[#allocation4 + $0x78] sm:$0xff]
  %v1535 = vld [vmem:[#allocation4 + $0x80] sm:$0xff]
  %v1536 = vld [vmem:[#allocation4 + $0x88] sm:$0xff]
  %v1537 = vld [vmem:[#allocation4 + $0x90] sm:$0xff]
  %v1538 = vld [vmem:[#allocation4 + $0x98] sm:$0xff]
  %v1539 = vld [vmem:[#allocation4 + $0xa0] sm:$0xff]
  %v1540 = vld [vmem:[#allocation4 + $0xa8] sm:$0xff]
  %v1541 = vld [vmem:[#allocation4 + $0xb0] sm:$0xff]
  %v1542 = vld [vmem:[#allocation4 + $0xb8] sm:$0xff]
  %v1543 = vld [vmem:[#allocation4 + $0xc0] sm:$0xff]
  %v1544 = vld [vmem:[%s1] sm:$0xff]
  %v1545 = vld [vmem:[%s1 + $0x8] sm:$0xff]
  %v1546 = vld [vmem:[%s1 + $0x10] sm:$0xff]
  %v1547 = vld [vmem:[%s1 + $0x18] sm:$0xff]
  %v1548 = vld [vmem:[%s1 + $0x20] sm:$0xf]
  %v1549 = vld [vmem:[%s2] sm:$0x1]
  %v1551 = vlaneseq
  %v1552 = vshrl.u32 %v1551, 7
  %v1553 = vsub.s32 0, %v1552
  %v1554 = vrot.slane %v1549, %v1553
  %vm1556 = vcmask 293888
  %v1558 = vsel %vm1556, %v1519, 0
  %v1561 = vsel %vm1556, %v1520, 0
  %v1564 = vsel %vm1556, %v1521, 0
  %v1567 = vsel %vm1556, %v1522, 0
  %v1570 = vsel %vm1556, %v1523, 0
  %v1573 = vsel %vm1556, %v1524, 0
  %v1576 = vsel %vm1556, %v1525, 0
  %v1579 = vsel %vm1556, %v1526, 0
  %v1582 = vsel %vm1556, %v1527, 0
  %v1585 = vsel %vm1556, %v1528, 0
  %v1588 = vsel %vm1556, %v1529, 0
  %v1591 = vsel %vm1556, %v1530, 0
  %v1594 = vsel %vm1556, %v1531, 0
  %v1597 = vsel %vm1556, %v1532, 0
  %v1600 = vsel %vm1556, %v1533, 0
  %v1603 = vsel %vm1556, %v1534, 0
  %v1606 = vsel %vm1556, %v1535, 0
  %v1609 = vsel %vm1556, %v1536, 0
  %v1612 = vsel %vm1556, %v1537, 0
  %v1615 = vsel %vm1556, %v1538, 0
  %v1618 = vsel %vm1556, %v1539, 0
  %v1621 = vsel %vm1556, %v1540, 0
  %v1624 = vsel %vm1556, %v1541, 0
  %v1627 = vsel %vm1556, %v1542, 0
  %v1630 = vsel %vm1556, %v1543, 0
  %vm1632 = vcmask 1043456
  %v1634 = vsel %vm1632, %v1548, 0
  %1636 = vmatprep.subr.mxu0 0.0
  %1637 = vmatpush1.msra.mxu0 %v1544
  %1638 = vmatprep.subr.mxu0 0.0
  %1639 = vmatpush1.msra.mxu0 %v1545
  %1640 = vmatprep.subr.mxu0 0.0
  %1641 = vmatpush1.msra.mxu0 %v1546
  %1642 = vmatprep.subr.mxu0 0.0
  %1643 = vmatpush1.msra.mxu0 %v1547
  %1644 = vmatprep.subr.mxu0 0.0
  %1645 = vmatpush1.msra.mxu0 %v1634
  %1646 = vmatprep.subr.mxu0 0.0
  %1647 = vmatpush1.msra.mxu0 0.0
  %1648 = vmatprep.subr.mxu0 0.0
  %1649 = vmatpush1.msra.mxu0 0.0
  %1650 = vmatprep.subr.mxu0 0.0
  %1651 = vmatpush1.msra.mxu0 0.0
  %1652 = vmatprep.subr.mxu0 0.0
  %1653 = vmatpush1.msra.mxu0 0.0
  %1654 = vmatprep.subr.mxu0 0.0
  %1655 = vmatpush1.msra.mxu0 0.0
  %1656 = vmatprep.subr.mxu0 0.0
  %1657 = vmatpush1.msra.mxu0 0.0
  %1658 = vmatprep.subr.mxu0 0.0
  %1659 = vmatpush1.msra.mxu0 0.0
  %1660 = vmatprep.subr.mxu0 0.0
  %1661 = vmatpush1.msra.mxu0 0.0
  %1662 = vmatprep.subr.mxu0 0.0
  %1663 = vmatpush1.msra.mxu0 0.0
  %1664 = vmatprep.subr.mxu0 0.0
  %1665 = vmatpush1.msra.mxu0 0.0
  %1666 = vmatprep.subr.mxu0 0.0
  %1667 = vmatpush1.msra.mxu0 0.0
  %1668 = vmatprep.subr.mxu0 0.0
  %1669 = vmatpush1.msra.mxu0 0.0
  %1670 = vmatprep.subr.mxu0 0.0
  %1671 = vmatpush1.msra.mxu0 0.0
  %1672 = vmatprep.subr.mxu0 0.0
  %1673 = vmatpush1.msra.mxu0 0.0
  %1674 = vmatprep.subr.mxu0 0.0
  %1675 = vmatpush1.msra.mxu0 0.0
  %1676 = vmatprep.subr.mxu0 0.0
  %1677 = vmatpush1.msra.mxu0 0.0
  %1678 = vmatprep.subr.mxu0 0.0
  %1679 = vmatpush1.msra.mxu0 0.0
  %1680 = vmatprep.subr.mxu0 0.0
  %1681 = vmatpush1.msra.mxu0 0.0
  %1682 = vmatprep.subr.mxu0 0.0
  %1683 = vmatpush1.msra.mxu0 0.0
  %1684 = vmatprep.subr.mxu0 0.0
  %1685 = vmatpush1.msra.mxu0 0.0
  %1686 = vmatprep.subr.mxu0 0.0
  %1687 = vmatpush1.msra.mxu0 0.0
  %1688 = vmatprep.subr.mxu0 0.0
  %1689 = vmatpush1.msra.mxu0 0.0
  %1690 = vmatprep.subr.mxu0 0.0
  %1691 = vmatpush1.msra.mxu0 0.0
  %1692 = vmatprep.subr.mxu0 0.0
  %1693 = vmatpush1.msra.mxu0 0.0
  %1694 = vmatprep.subr.mxu0 0.0
  %1695 = vmatpush1.msra.mxu0 0.0
  %1696 = vmatprep.subr.mxu0 0.0
  %1697 = vmatpush1.msra.mxu0 0.0
  %1698 = vmatprep.subr.mxu0 0.0
  %1699 = vmatpush1.msra.mxu0 0.0
  %1700 = vmatprep.mubr.f32.mxu0 0.0
  %1701 = vmatmul.mubr.f32.gmra.mrb[0].mxu0 %v1558
  %v1702 = vpop.f32.mrb[0].mxu0
  %v1703 = vadd.f32 %v1554, %v1702
  %v1704 = vpop.f32.mrb[0].mxu0
  %1705 = vmatprep.mubr.f32.mxu0 0.0
  %1706 = vmatmul.mubr.f32.gmra.mrb[0].mxu0 %v1561
  %v1707 = vpop.f32.mrb[0].mxu0
  %v1708 = vadd.f32 %v1554, %v1707
  %v1709 = vpop.f32.mrb[0].mxu0
  %1710 = vmatprep.mubr.f32.mxu0 0.0
  %1711 = vmatmul.mubr.f32.gmra.mrb[0].mxu0 %v1564
  %v1712 = vpop.f32.mrb[0].mxu0
  %v1713 = vadd.f32 %v1554, %v1712
  %v1714 = vpop.f32.mrb[0].mxu0
  %1715 = vmatprep.mubr.f32.mxu0 0.0
  %1716 = vmatmul.mubr.f32.gmra.mrb[0].mxu0 %v1567
  %v1717 = vpop.f32.mrb[0].mxu0
  %v1718 = vadd.f32 %v1554, %v1717
  %v1719 = vpop.f32.mrb[0].mxu0
  %1720 = vmatprep.mubr.f32.mxu0 0.0
  %1721 = vmatmul.mubr.f32.gmra.mrb[0].mxu0 %v1570
  %v1722 = vpop.f32.mrb[0].mxu0
  %v1723 = vadd.f32 %v1554, %v1722
  %v1724 = vpop.f32.mrb[0].mxu0
  %1725 = vmatprep.mubr.f32.mxu0 0.0
  %1726 = vmatmul.mubr.f32.gmra.mrb[0].mxu0 %v1573
  %v1727 = vpop.f32.mrb[0].mxu0
  %v1728 = vadd.f32 %v1554, %v1727
  %v1729 = vpop.f32.mrb[0].mxu0
  %1730 = vmatprep.mubr.f32.mxu0 0.0
  %1731 = vmatmul.mubr.f32.gmra.mrb[0].mxu0 %v1576
  %v1732 = vpop.f32.mrb[0].mxu0
  %v1733 = vadd.f32 %v1554, %v1732
  %v1734 = vpop.f32.mrb[0].mxu0
  %1735 = vmatprep.mubr.f32.mxu0 0.0
  %1736 = vmatmul.mubr.f32.gmra.mrb[0].mxu0 %v1579
  %v1737 = vpop.f32.mrb[0].mxu0
  %v1738 = vadd.f32 %v1554, %v1737
  %v1739 = vpop.f32.mrb[0].mxu0
  %1740 = vmatprep.mubr.f32.mxu0 0.0
  %1741 = vmatmul.mubr.f32.gmra.mrb[0].mxu0 %v1582
  %v1742 = vpop.f32.mrb[0].mxu0
  %v1743 = vadd.f32 %v1554, %v1742
  %v1744 = vpop.f32.mrb[0].mxu0
  %1745 = vmatprep.mubr.f32.mxu0 0.0
  %1746 = vmatmul.mubr.f32.gmra.mrb[0].mxu0 %v1585
  %v1747 = vpop.f32.mrb[0].mxu0
  %v1748 = vadd.f32 %v1554, %v1747
  %v1749 = vpop.f32.mrb[0].mxu0
  %1750 = vmatprep.mubr.f32.mxu0 0.0
  %1751 = vmatmul.mubr.f32.gmra.mrb[0].mxu0 %v1588
  %v1752 = vpop.f32.mrb[0].mxu0
  %v1753 = vadd.f32 %v1554, %v1752
  %v1754 = vpop.f32.mrb[0].mxu0
  %1755 = vmatprep.mubr.f32.mxu0 0.0
  %1756 = vmatmul.mubr.f32.gmra.mrb[0].mxu0 %v1591
  %v1757 = vpop.f32.mrb[0].mxu0
  %v1758 = vadd.f32 %v1554, %v1757
  %v1759 = vpop.f32.mrb[0].mxu0
  %1760 = vmatprep.mubr.f32.mxu0 0.0
  %1761 = vmatmul.mubr.f32.gmra.mrb[0].mxu0 %v1594
  %v1762 = vpop.f32.mrb[0].mxu0
  %v1763 = vadd.f32 %v1554, %v1762
  %v1764 = vpop.f32.mrb[0].mxu0
  %1765 = vmatprep.mubr.f32.mxu0 0.0
  %1766 = vmatmul.mubr.f32.gmra.mrb[0].mxu0 %v1597
  %v1767 = vpop.f32.mrb[0].mxu0
  %v1768 = vadd.f32 %v1554, %v1767
  %v1769 = vpop.f32.mrb[0].mxu0
  %1770 = vmatprep.mubr.f32.mxu0 0.0
  %1771 = vmatmul.mubr.f32.gmra.mrb[0].mxu0 %v1600
  %v1772 = vpop.f32.mrb[0].mxu0
  %v1773 = vadd.f32 %v1554, %v1772
  %v1774 = vpop.f32.mrb[0].mxu0
  %1775 = vmatprep.mubr.f32.mxu0 0.0
  %1776 = vmatmul.mubr.f32.gmra.mrb[0].mxu0 %v1603
  %v1777 = vpop.f32.mrb[0].mxu0
  %v1778 = vadd.f32 %v1554, %v1777
  %v1779 = vpop.f32.mrb[0].mxu0
  %1780 = vmatprep.mubr.f32.mxu0 0.0
  %1781 = vmatmul.mubr.f32.gmra.mrb[0].mxu0 %v1606
  %v1782 = vpop.f32.mrb[0].mxu0
  %v1783 = vadd.f32 %v1554, %v1782
  %v1784 = vpop.f32.mrb[0].mxu0
  %1785 = vmatprep.mubr.f32.mxu0 0.0
  %1786 = vmatmul.mubr.f32.gmra.mrb[0].mxu0 %v1609
  %v1787 = vpop.f32.mrb[0].mxu0
  %v1788 = vadd.f32 %v1554, %v1787
  %v1789 = vpop.f32.mrb[0].mxu0
  %1790 = vmatprep.mubr.f32.mxu0 0.0
  %1791 = vmatmul.mubr.f32.gmra.mrb[0].mxu0 %v1612
  %v1792 = vpop.f32.mrb[0].mxu0
  %v1793 = vadd.f32 %v1554, %v1792
  %v1794 = vpop.f32.mrb[0].mxu0
  %1795 = vmatprep.mubr.f32.mxu0 0.0
  %1796 = vmatmul.mubr.f32.gmra.mrb[0].mxu0 %v1615
  %v1797 = vpop.f32.mrb[0].mxu0
  %v1798 = vadd.f32 %v1554, %v1797
  %v1799 = vpop.f32.mrb[0].mxu0
  %1800 = vmatprep.mubr.f32.mxu0 0.0
  %1801 = vmatmul.mubr.f32.gmra.mrb[0].mxu0 %v1618
  %v1802 = vpop.f32.mrb[0].mxu0
  %v1803 = vadd.f32 %v1554, %v1802
  %v1804 = vpop.f32.mrb[0].mxu0
  %1805 = vmatprep.mubr.f32.mxu0 0.0
  %1806 = vmatmul.mubr.f32.gmra.mrb[0].mxu0 %v1621
  %v1807 = vpop.f32.mrb[0].mxu0
  %v1808 = vadd.f32 %v1554, %v1807
  %v1809 = vpop.f32.mrb[0].mxu0
  %1810 = vmatprep.mubr.f32.mxu0 0.0
  %1811 = vmatmul.mubr.f32.gmra.mrb[0].mxu0 %v1624
  %v1812 = vpop.f32.mrb[0].mxu0
  %v1813 = vadd.f32 %v1554, %v1812
  %v1814 = vpop.f32.mrb[0].mxu0
  %1815 = vmatprep.mubr.f32.mxu0 0.0
  %1816 = vmatmul.mubr.f32.gmra.mrb[0].mxu0 %v1627
  %v1817 = vpop.f32.mrb[0].mxu0
  %v1818 = vadd.f32 %v1554, %v1817
  %v1819 = vpop.f32.mrb[0].mxu0
  %1820 = vmatprep.mubr.f32.mxu0 0.0
  %1821 = vmatmul.mubr.f32.gmra.mrb[0].mxu0 %v1630
  %v1822 = vpop.f32.mrb[0].mxu0
  %v1823 = vadd.f32 %v1554, %v1822
  %v1824 = vpop.f32.mrb[0].mxu0
  %1825 = vdwg.mxu0
  %v1826 = vmax.f32 %v1703, 0.0
  %v1827 = vmax.f32 %v1708, 0.0
  %v1828 = vmax.f32 %v1713, 0.0
  %v1829 = vmax.f32 %v1718, 0.0
  %v1830 = vmax.f32 %v1723, 0.0
  %v1831 = vmax.f32 %v1728, 0.0
  %v1832 = vmax.f32 %v1733, 0.0
  %v1833 = vmax.f32 %v1738, 0.0
  %v1834 = vmax.f32 %v1743, 0.0
  %v1835 = vmax.f32 %v1748, 0.0
  %v1836 = vmax.f32 %v1753, 0.0
  %v1837 = vmax.f32 %v1758, 0.0
  %v1838 = vmax.f32 %v1763, 0.0
  %v1839 = vmax.f32 %v1768, 0.0
  %v1840 = vmax.f32 %v1773, 0.0
  %v1841 = vmax.f32 %v1778, 0.0
  %v1842 = vmax.f32 %v1783, 0.0
  %v1843 = vmax.f32 %v1788, 0.0
  %v1844 = vmax.f32 %v1793, 0.0
  %v1845 = vmax.f32 %v1798, 0.0
  %v1846 = vmax.f32 %v1803, 0.0
  %v1847 = vmax.f32 %v1808, 0.0
  %v1848 = vmax.f32 %v1813, 0.0
  %v1849 = vmax.f32 %v1818, 0.0
  %v1850 = vmax.f32 %v1823, 0.0
  %v1851 = vld [vmem:[%s5] sm:$0xff]
  %v1852 = vld [vmem:[%s5 + $0x8] sm:$0xff]
  %v1853 = vld [vmem:[%s5 + $0x10] sm:$0xff]
  %v1854 = vld [vmem:[%s5 + $0x18] sm:$0xff]
  %v1855 = vld [vmem:[%s5 + $0x20] sm:$0xff]
  %v1856 = vld [vmem:[%s5 + $0x28] sm:$0xff]
  %v1857 = vld [vmem:[%s5 + $0x30] sm:$0xff]
  %v1858 = vld [vmem:[%s5 + $0x38] sm:$0xff]
  %v1859 = vld [vmem:[%s5 + $0x40] sm:$0xff]
  %v1860 = vld [vmem:[%s5 + $0x48] sm:$0xff]
  %v1861 = vld [vmem:[%s5 + $0x50] sm:$0xff]
  %v1862 = vld [vmem:[%s5 + $0x58] sm:$0xff]
  %v1863 = vld [vmem:[%s5 + $0x60] sm:$0xff]
  %v1864 = vld [vmem:[%s5 + $0x68] sm:$0xff]
  %v1865 = vld [vmem:[%s5 + $0x70] sm:$0xff]
  %v1866 = vld [vmem:[%s5 + $0x78] sm:$0xff]
  %v1867 = vld [vmem:[%s5 + $0x80] sm:$0xff]
  %v1868 = vld [vmem:[%s5 + $0x88] sm:$0xff]
  %v1869 = vld [vmem:[%s5 + $0x90] sm:$0xff]
  %v1870 = vld [vmem:[%s5 + $0x98] sm:$0xff]
  %v1871 = vld [vmem:[%s5 + $0xa0] sm:$0xff]
  %v1872 = vld [vmem:[%s5 + $0xa8] sm:$0xff]
  %v1873 = vld [vmem:[%s5 + $0xb0] sm:$0xff]
  %v1874 = vld [vmem:[%s5 + $0xb8] sm:$0xff]
  %v1875 = vld [vmem:[%s5 + $0xc0] sm:$0xff]
  %1877 = vset.pattern.permute.xlu0 0
  %1878 = vperm.xlu0 %1877, %v1851
  %v1879 = vpop.permute.xlu0 %1878
  %1882 = vset.pattern.permute.xlu0 0
  %1883 = vperm.xlu0 %1882, %v1852
  %v1884 = vpop.permute.xlu0 %1883
  %1887 = vset.pattern.permute.xlu0 0
  %1888 = vperm.xlu0 %1887, %v1853
  %v1889 = vpop.permute.xlu0 %1888
  %1892 = vset.pattern.permute.xlu0 0
  %1893 = vperm.xlu0 %1892, %v1854
  %v1894 = vpop.permute.xlu0 %1893
  %1897 = vset.pattern.permute.xlu0 0
  %1898 = vperm.xlu0 %1897, %v1855
  %v1899 = vpop.permute.xlu0 %1898
  %1902 = vset.pattern.permute.xlu0 0
  %1903 = vperm.xlu0 %1902, %v1856
  %v1904 = vpop.permute.xlu0 %1903
  %1907 = vset.pattern.permute.xlu0 0
  %1908 = vperm.xlu0 %1907, %v1857
  %v1909 = vpop.permute.xlu0 %1908
  %1912 = vset.pattern.permute.xlu0 0
  %1913 = vperm.xlu0 %1912, %v1858
  %v1914 = vpop.permute.xlu0 %1913
  %1917 = vset.pattern.permute.xlu0 0
  %1918 = vperm.xlu0 %1917, %v1859
  %v1919 = vpop.permute.xlu0 %1918
  %1922 = vset.pattern.permute.xlu0 0
  %1923 = vperm.xlu0 %1922, %v1860
  %v1924 = vpop.permute.xlu0 %1923
  %1927 = vset.pattern.permute.xlu0 0
  %1928 = vperm.xlu0 %1927, %v1861
  %v1929 = vpop.permute.xlu0 %1928
  %1932 = vset.pattern.permute.xlu0 0
  %1933 = vperm.xlu0 %1932, %v1862
  %v1934 = vpop.permute.xlu0 %1933
  %1937 = vset.pattern.permute.xlu0 0
  %1938 = vperm.xlu0 %1937, %v1863
  %v1939 = vpop.permute.xlu0 %1938
  %1942 = vset.pattern.permute.xlu0 0
  %1943 = vperm.xlu0 %1942, %v1864
  %v1944 = vpop.permute.xlu0 %1943
  %1947 = vset.pattern.permute.xlu0 0
  %1948 = vperm.xlu0 %1947, %v1865
  %v1949 = vpop.permute.xlu0 %1948
  %1952 = vset.pattern.permute.xlu0 0
  %1953 = vperm.xlu0 %1952, %v1866
  %v1954 = vpop.permute.xlu0 %1953
  %1957 = vset.pattern.permute.xlu0 0
  %1958 = vperm.xlu0 %1957, %v1867
  %v1959 = vpop.permute.xlu0 %1958
  %1962 = vset.pattern.permute.xlu0 0
  %1963 = vperm.xlu0 %1962, %v1868
  %v1964 = vpop.permute.xlu0 %1963
  %1967 = vset.pattern.permute.xlu0 0
  %1968 = vperm.xlu0 %1967, %v1869
  %v1969 = vpop.permute.xlu0 %1968
  %1972 = vset.pattern.permute.xlu0 0
  %1973 = vperm.xlu0 %1972, %v1870
  %v1974 = vpop.permute.xlu0 %1973
  %1977 = vset.pattern.permute.xlu0 0
  %1978 = vperm.xlu0 %1977, %v1871
  %v1979 = vpop.permute.xlu0 %1978
  %1982 = vset.pattern.permute.xlu0 0
  %1983 = vperm.xlu0 %1982, %v1872
  %v1984 = vpop.permute.xlu0 %1983
  %1987 = vset.pattern.permute.xlu0 0
  %1988 = vperm.xlu0 %1987, %v1873
  %v1989 = vpop.permute.xlu0 %1988
  %1992 = vset.pattern.permute.xlu0 0
  %1993 = vperm.xlu0 %1992, %v1874
  %v1994 = vpop.permute.xlu0 %1993
  %1997 = vset.pattern.permute.xlu0 0
  %1998 = vperm.xlu0 %1997, %v1875
  %v1999 = vpop.permute.xlu0 %1998
  %v2001 = vmul.f32 %v1826, %v1879
  %v2002 = vmul.f32 %v1827, %v1884
  %v2003 = vmul.f32 %v1828, %v1889
  %v2004 = vmul.f32 %v1829, %v1894
  %v2005 = vmul.f32 %v1830, %v1899
  %v2006 = vmul.f32 %v1831, %v1904
  %v2007 = vmul.f32 %v1832, %v1909
  %v2008 = vmul.f32 %v1833, %v1914
  %v2009 = vmul.f32 %v1834, %v1919
  %v2010 = vmul.f32 %v1835, %v1924
  %v2011 = vmul.f32 %v1836, %v1929
  %v2012 = vmul.f32 %v1837, %v1934
  %v2013 = vmul.f32 %v1838, %v1939
  %v2014 = vmul.f32 %v1839, %v1944
  %v2015 = vmul.f32 %v1840, %v1949
  %v2016 = vmul.f32 %v1841, %v1954
  %v2017 = vmul.f32 %v1842, %v1959
  %v2018 = vmul.f32 %v1843, %v1964
  %v2019 = vmul.f32 %v1844, %v1969
  %v2020 = vmul.f32 %v1845, %v1974
  %v2021 = vmul.f32 %v1846, %v1979
  %v2022 = vmul.f32 %v1847, %v1984
  %v2023 = vmul.f32 %v1848, %v1989
  %v2024 = vmul.f32 %v1849, %v1994
  %v2025 = vmul.f32 %v1850, %v1999
  %vm2026 = vcmask 64512
  %2027 = vst.msk [vmem:[#allocation3 + $0xb] sm:$0xff] %vm2026, %v2001
  %2028 = vst.msk [vmem:[#allocation3 + $0x13] sm:$0xff] %vm2026, %v2002
  %2029 = vst.msk [vmem:[#allocation3 + $0x1b] sm:$0xff] %vm2026, %v2003
  %2030 = vst.msk [vmem:[#allocation3 + $0x23] sm:$0xff] %vm2026, %v2004
  %2031 = vst.msk [vmem:[#allocation3 + $0x2b] sm:$0xff] %vm2026, %v2005
  %2032 = vst.msk [vmem:[#allocation3 + $0x33] sm:$0xff] %vm2026, %v2006
  %2033 = vst.msk [vmem:[#allocation3 + $0x3b] sm:$0xff] %vm2026, %v2007
  %2034 = vst.msk [vmem:[#allocation3 + $0x43] sm:$0xff] %vm2026, %v2008
  %2035 = vst.msk [vmem:[#allocation3 + $0x4b] sm:$0xff] %vm2026, %v2009
  %2036 = vst.msk [vmem:[#allocation3 + $0x53] sm:$0xff] %vm2026, %v2010
  %2037 = vst.msk [vmem:[#allocation3 + $0x5b] sm:$0xff] %vm2026, %v2011
  %2038 = vst.msk [vmem:[#allocation3 + $0x63] sm:$0xff] %vm2026, %v2012
  %2039 = vst.msk [vmem:[#allocation3 + $0x6b] sm:$0xff] %vm2026, %v2013
  %2040 = vst.msk [vmem:[#allocation3 + $0x73] sm:$0xff] %vm2026, %v2014
  %2041 = vst.msk [vmem:[#allocation3 + $0x7b] sm:$0xff] %vm2026, %v2015
  %2042 = vst.msk [vmem:[#allocation3 + $0x83] sm:$0xff] %vm2026, %v2016
  %2043 = vst.msk [vmem:[#allocation3 + $0x8b] sm:$0xff] %vm2026, %v2017
  %2044 = vst.msk [vmem:[#allocation3 + $0x93] sm:$0xff] %vm2026, %v2018
  %2045 = vst.msk [vmem:[#allocation3 + $0x9b] sm:$0xff] %vm2026, %v2019
  %2046 = vst.msk [vmem:[#allocation3 + $0xa3] sm:$0xff] %vm2026, %v2020
  %2047 = vst.msk [vmem:[#allocation3 + $0xab] sm:$0xff] %vm2026, %v2021
  %2048 = vst.msk [vmem:[#allocation3 + $0xb3] sm:$0xff] %vm2026, %v2022
  %2049 = vst.msk [vmem:[#allocation3 + $0xbb] sm:$0xff] %vm2026, %v2023
  %2050 = vst.msk [vmem:[#allocation3 + $0xc3] sm:$0xff] %vm2026, %v2024
  %2051 = vst.msk [vmem:[#allocation3 + $0xcb] sm:$0xff] %vm2026, %v2025
  %v2052 = vld [vmem:[#allocation3] sm:$0xff]
  %v2053 = vld [vmem:[#allocation3 + $0x8] sm:$0xff]
  %v2054 = vld [vmem:[#allocation3 + $0x10] sm:$0xff]
  %v2055 = vld [vmem:[#allocation3 + $0x18] sm:$0xff]
  %v2056 = vld [vmem:[#allocation3 + $0x20] sm:$0xff]
  %v2057 = vld [vmem:[#allocation3 + $0x28] sm:$0xff]
  %v2058 = vld [vmem:[#allocation3 + $0x30] sm:$0xff]
  %v2059 = vld [vmem:[#allocation3 + $0x38] sm:$0xff]
  %v2060 = vld [vmem:[#allocation3 + $0x40] sm:$0xff]
  %v2061 = vld [vmem:[#allocation3 + $0x48] sm:$0xff]
  %v2062 = vld [vmem:[#allocation3 + $0x50] sm:$0xff]
  %v2063 = vld [vmem:[#allocation3 + $0x58] sm:$0xff]
  %v2064 = vld [vmem:[#allocation3 + $0x60] sm:$0xff]
  %v2065 = vld [vmem:[#allocation3 + $0x68] sm:$0xff]
  %v2066 = vld [vmem:[#allocation3 + $0x70] sm:$0xff]
  %v2067 = vld [vmem:[#allocation3 + $0x78] sm:$0xff]
  %v2068 = vld [vmem:[#allocation3 + $0x80] sm:$0xff]
  %v2069 = vld [vmem:[#allocation3 + $0x88] sm:$0xff]
  %v2070 = vld [vmem:[#allocation3 + $0x90] sm:$0xff]
  %v2071 = vld [vmem:[#allocation3 + $0x98] sm:$0xff]
  %v2072 = vld [vmem:[#allocation3 + $0xa0] sm:$0xff]
  %v2073 = vld [vmem:[#allocation3 + $0xa8] sm:$0xff]
  %v2074 = vld [vmem:[#allocation3 + $0xb0] sm:$0xff]
  %v2075 = vld [vmem:[#allocation3 + $0xb8] sm:$0xff]
  %v2076 = vld [vmem:[#allocation3 + $0xc0] sm:$0xff]
  %v2077 = vld [vmem:[%s3] sm:$0xff]
  %v2078 = vld [vmem:[#allocation3 + $0x1] sm:$0xff]
  %v2079 = vld [vmem:[#allocation3 + $0x9] sm:$0xff]
  %v2080 = vld [vmem:[#allocation3 + $0x11] sm:$0xff]
  %v2081 = vld [vmem:[#allocation3 + $0x19] sm:$0xff]
  %v2082 = vld [vmem:[#allocation3 + $0x21] sm:$0xff]
  %v2083 = vld [vmem:[#allocation3 + $0x29] sm:$0xff]
  %v2084 = vld [vmem:[#allocation3 + $0x31] sm:$0xff]
  %v2085 = vld [vmem:[#allocation3 + $0x39] sm:$0xff]
  %v2086 = vld [vmem:[#allocation3 + $0x41] sm:$0xff]
  %v2087 = vld [vmem:[#allocation3 + $0x49] sm:$0xff]
  %v2088 = vld [vmem:[#allocation3 + $0x51] sm:$0xff]
  %v2089 = vld [vmem:[#allocation3 + $0x59] sm:$0xff]
  %v2090 = vld [vmem:[#allocation3 + $0x61] sm:$0xff]
  %v2091 = vld [vmem:[#allocation3 + $0x69] sm:$0xff]
  %v2092 = vld [vmem:[#allocation3 + $0x71] sm:$0xff]
  %v2093 = vld [vmem:[#allocation3 + $0x79] sm:$0xff]
  %v2094 = vld [vmem:[#allocation3 + $0x81] sm:$0xff]
  %v2095 = vld [vmem:[#allocation3 + $0x89] sm:$0xff]
  %v2096 = vld [vmem:[#allocation3 + $0x91] sm:$0xff]
  %v2097 = vld [vmem:[#allocation3 + $0x99] sm:$0xff]
  %v2098 = vld [vmem:[#allocation3 + $0xa1] sm:$0xff]
  %v2099 = vld [vmem:[#allocation3 + $0xa9] sm:$0xff]
  %v2100 = vld [vmem:[#allocation3 + $0xb1] sm:$0xff]
  %v2101 = vld [vmem:[#allocation3 + $0xb9] sm:$0xff]
  %v2102 = vld [vmem:[#allocation3 + $0xc1] sm:$0xff]
  %s2103 = scalar_lea.vmem %s3, 8
  %v2104 = vld [vmem:[%s2103] sm:$0xff]
  %v2106 = vsel %vm2026, %v2078, 0
  %v2109 = vsel %vm2026, %v2079, 0
  %v2112 = vsel %vm2026, %v2080, 0
  %v2115 = vsel %vm2026, %v2081, 0
  %v2118 = vsel %vm2026, %v2082, 0
  %v2121 = vsel %vm2026, %v2083, 0
  %v2124 = vsel %vm2026, %v2084, 0
  %v2127 = vsel %vm2026, %v2085, 0
  %v2130 = vsel %vm2026, %v2086, 0
  %v2133 = vsel %vm2026, %v2087, 0
  %v2136 = vsel %vm2026, %v2088, 0
  %v2139 = vsel %vm2026, %v2089, 0
  %v2142 = vsel %vm2026, %v2090, 0
  %v2145 = vsel %vm2026, %v2091, 0
  %v2148 = vsel %vm2026, %v2092, 0
  %v2151 = vsel %vm2026, %v2093, 0
  %v2154 = vsel %vm2026, %v2094, 0
  %v2157 = vsel %vm2026, %v2095, 0
  %v2160 = vsel %vm2026, %v2096, 0
  %v2163 = vsel %vm2026, %v2097, 0
  %v2166 = vsel %vm2026, %v2098, 0
  %v2169 = vsel %vm2026, %v2099, 0
  %v2172 = vsel %vm2026, %v2100, 0
  %v2175 = vsel %vm2026, %v2101, 0
  %v2178 = vsel %vm2026, %v2102, 0
  %2180 = vmatprep.subr.mxu0 0.0
  %2181 = vmatpush1.msra.mxu0 %v2104
  %2182 = vmatprep.subr.mxu0 0.0
  %2183 = vmatpush1.msra.mxu0 0.0
  %2184 = vmatprep.subr.mxu0 0.0
  %2185 = vmatpush1.msra.mxu0 0.0
  %2186 = vmatprep.subr.mxu0 0.0
  %2187 = vmatpush1.msra.mxu0 0.0
  %2188 = vmatprep.subr.mxu0 0.0
  %2189 = vmatpush1.msra.mxu0 0.0
  %2190 = vmatprep.subr.mxu0 0.0
  %2191 = vmatpush1.msra.mxu0 0.0
  %2192 = vmatprep.subr.mxu0 0.0
  %2193 = vmatpush1.msra.mxu0 0.0
  %2194 = vmatprep.subr.mxu0 0.0
  %2195 = vmatpush1.msra.mxu0 0.0
  %2196 = vmatprep.subr.mxu0 0.0
  %2197 = vmatpush1.msra.mxu0 0.0
  %2198 = vmatprep.subr.mxu0 0.0
  %2199 = vmatpush1.msra.mxu0 0.0
  %2200 = vmatprep.subr.mxu0 0.0
  %2201 = vmatpush1.msra.mxu0 0.0
  %2202 = vmatprep.subr.mxu0 0.0
  %2203 = vmatpush1.msra.mxu0 0.0
  %2204 = vmatprep.subr.mxu0 0.0
  %2205 = vmatpush1.msra.mxu0 0.0
  %2206 = vmatprep.subr.mxu0 0.0
  %2207 = vmatpush1.msra.mxu0 0.0
  %2208 = vmatprep.subr.mxu0 0.0
  %2209 = vmatpush1.msra.mxu0 0.0
  %2210 = vmatprep.subr.mxu0 0.0
  %2211 = vmatpush1.msra.mxu0 0.0
  %2212 = vmatprep.subr.mxu0 0.0
  %2213 = vmatpush1.msra.mxu0 0.0
  %2214 = vmatprep.subr.mxu0 0.0
  %2215 = vmatpush1.msra.mxu0 0.0
  %2216 = vmatprep.subr.mxu0 0.0
  %2217 = vmatpush1.msra.mxu0 0.0
  %2218 = vmatprep.subr.mxu0 0.0
  %2219 = vmatpush1.msra.mxu0 0.0
  %2220 = vmatprep.subr.mxu0 0.0
  %2221 = vmatpush1.msra.mxu0 0.0
  %2222 = vmatprep.subr.mxu0 0.0
  %2223 = vmatpush1.msra.mxu0 0.0
  %2224 = vmatprep.subr.mxu0 0.0
  %2225 = vmatpush1.msra.mxu0 0.0
  %2226 = vmatprep.subr.mxu0 0.0
  %2227 = vmatpush1.msra.mxu0 0.0
  %2228 = vmatprep.subr.mxu0 0.0
  %2229 = vmatpush1.msra.mxu0 0.0
  %2230 = vmatprep.subr.mxu0 0.0
  %2231 = vmatpush1.msra.mxu0 0.0
  %2232 = vmatprep.subr.mxu0 0.0
  %2233 = vmatpush1.msra.mxu0 0.0
  %2234 = vmatprep.subr.mxu0 0.0
  %2235 = vmatpush1.msra.mxu0 0.0
  %2236 = vmatprep.subr.mxu0 0.0
  %2237 = vmatpush1.msra.mxu0 0.0
  %2238 = vmatprep.subr.mxu0 0.0
  %2239 = vmatpush1.msra.mxu0 0.0
  %2240 = vmatprep.subr.mxu0 0.0
  %2241 = vmatpush1.msra.mxu0 0.0
  %2242 = vmatprep.subr.mxu0 0.0
  %2243 = vmatpush1.msra.mxu0 0.0
  %2244 = vmatprep.mubr.f32.mxu0 0.0
  %2245 = vmatmul.mubr.f32.gmra.mrb[0].mxu0 %v2106
  %v2246 = vpop.f32.mrb[0].mxu0
  %v2247 = vadd.f32 0.0, %v2246
  %v2248 = vpop.f32.mrb[0].mxu0
  %2249 = vmatprep.mubr.f32.mxu0 0.0
  %2250 = vmatmul.mubr.f32.gmra.mrb[0].mxu0 %v2109
  %v2251 = vpop.f32.mrb[0].mxu0
  %v2252 = vadd.f32 0.0, %v2251
  %v2253 = vpop.f32.mrb[0].mxu0
  %2254 = vmatprep.mubr.f32.mxu0 0.0
  %2255 = vmatmul.mubr.f32.gmra.mrb[0].mxu0 %v2112
  %v2256 = vpop.f32.mrb[0].mxu0
  %v2257 = vadd.f32 0.0, %v2256
  %v2258 = vpop.f32.mrb[0].mxu0
  %2259 = vmatprep.mubr.f32.mxu0 0.0
  %2260 = vmatmul.mubr.f32.gmra.mrb[0].mxu0 %v2115
  %v2261 = vpop.f32.mrb[0].mxu0
  %v2262 = vadd.f32 0.0, %v2261
  %v2263 = vpop.f32.mrb[0].mxu0
  %2264 = vmatprep.mubr.f32.mxu0 0.0
  %2265 = vmatmul.mubr.f32.gmra.mrb[0].mxu0 %v2118
  %v2266 = vpop.f32.mrb[0].mxu0
  %v2267 = vadd.f32 0.0, %v2266
  %v2268 = vpop.f32.mrb[0].mxu0
  %2269 = vmatprep.mubr.f32.mxu0 0.0
  %2270 = vmatmul.mubr.f32.gmra.mrb[0].mxu0 %v2121
  %v2271 = vpop.f32.mrb[0].mxu0
  %v2272 = vadd.f32 0.0, %v2271
  %v2273 = vpop.f32.mrb[0].mxu0
  %2274 = vmatprep.mubr.f32.mxu0 0.0
  %2275 = vmatmul.mubr.f32.gmra.mrb[0].mxu0 %v2124
  %v2276 = vpop.f32.mrb[0].mxu0
  %v2277 = vadd.f32 0.0, %v2276
  %v2278 = vpop.f32.mrb[0].mxu0
  %2279 = vmatprep.mubr.f32.mxu0 0.0
  %2280 = vmatmul.mubr.f32.gmra.mrb[0].mxu0 %v2127
  %v2281 = vpop.f32.mrb[0].mxu0
  %v2282 = vadd.f32 0.0, %v2281
  %v2283 = vpop.f32.mrb[0].mxu0
  %2284 = vmatprep.mubr.f32.mxu0 0.0
  %2285 = vmatmul.mubr.f32.gmra.mrb[0].mxu0 %v2130
  %v2286 = vpop.f32.mrb[0].mxu0
  %v2287 = vadd.f32 0.0, %v2286
  %v2288 = vpop.f32.mrb[0].mxu0
  %2289 = vmatprep.mubr.f32.mxu0 0.0
  %2290 = vmatmul.mubr.f32.gmra.mrb[0].mxu0 %v2133
  %v2291 = vpop.f32.mrb[0].mxu0
  %v2292 = vadd.f32 0.0, %v2291
  %v2293 = vpop.f32.mrb[0].mxu0
  %2294 = vmatprep.mubr.f32.mxu0 0.0
  %2295 = vmatmul.mubr.f32.gmra.mrb[0].mxu0 %v2136
  %v2296 = vpop.f32.mrb[0].mxu0
  %v2297 = vadd.f32 0.0, %v2296
  %v2298 = vpop.f32.mrb[0].mxu0
  %2299 = vmatprep.mubr.f32.mxu0 0.0
  %2300 = vmatmul.mubr.f32.gmra.mrb[0].mxu0 %v2139
  %v2301 = vpop.f32.mrb[0].mxu0
  %v2302 = vadd.f32 0.0, %v2301
  %v2303 = vpop.f32.mrb[0].mxu0
  %2304 = vmatprep.mubr.f32.mxu0 0.0
  %2305 = vmatmul.mubr.f32.gmra.mrb[0].mxu0 %v2142
  %v2306 = vpop.f32.mrb[0].mxu0
  %v2307 = vadd.f32 0.0, %v2306
  %v2308 = vpop.f32.mrb[0].mxu0
  %2309 = vmatprep.mubr.f32.mxu0 0.0
  %2310 = vmatmul.mubr.f32.gmra.mrb[0].mxu0 %v2145
  %v2311 = vpop.f32.mrb[0].mxu0
  %v2312 = vadd.f32 0.0, %v2311
  %v2313 = vpop.f32.mrb[0].mxu0
  %2314 = vmatprep.mubr.f32.mxu0 0.0
  %2315 = vmatmul.mubr.f32.gmra.mrb[0].mxu0 %v2148
  %v2316 = vpop.f32.mrb[0].mxu0
  %v2317 = vadd.f32 0.0, %v2316
  %v2318 = vpop.f32.mrb[0].mxu0
  %2319 = vmatprep.mubr.f32.mxu0 0.0
  %2320 = vmatmul.mubr.f32.gmra.mrb[0].mxu0 %v2151
  %v2321 = vpop.f32.mrb[0].mxu0
  %v2322 = vadd.f32 0.0, %v2321
  %v2323 = vpop.f32.mrb[0].mxu0
  %2324 = vmatprep.mubr.f32.mxu0 0.0
  %2325 = vmatmul.mubr.f32.gmra.mrb[0].mxu0 %v2154
  %v2326 = vpop.f32.mrb[0].mxu0
  %v2327 = vadd.f32 0.0, %v2326
  %v2328 = vpop.f32.mrb[0].mxu0
  %2329 = vmatprep.mubr.f32.mxu0 0.0
  %2330 = vmatmul.mubr.f32.gmra.mrb[0].mxu0 %v2157
  %v2331 = vpop.f32.mrb[0].mxu0
  %v2332 = vadd.f32 0.0, %v2331
  %v2333 = vpop.f32.mrb[0].mxu0
  %2334 = vmatprep.mubr.f32.mxu0 0.0
  %2335 = vmatmul.mubr.f32.gmra.mrb[0].mxu0 %v2160
  %v2336 = vpop.f32.mrb[0].mxu0
  %v2337 = vadd.f32 0.0, %v2336
  %v2338 = vpop.f32.mrb[0].mxu0
  %2339 = vmatprep.mubr.f32.mxu0 0.0
  %2340 = vmatmul.mubr.f32.gmra.mrb[0].mxu0 %v2163
  %v2341 = vpop.f32.mrb[0].mxu0
  %v2342 = vadd.f32 0.0, %v2341
  %v2343 = vpop.f32.mrb[0].mxu0
  %2344 = vmatprep.mubr.f32.mxu0 0.0
  %2345 = vmatmul.mubr.f32.gmra.mrb[0].mxu0 %v2166
  %v2346 = vpop.f32.mrb[0].mxu0
  %v2347 = vadd.f32 0.0, %v2346
  %v2348 = vpop.f32.mrb[0].mxu0
  %2349 = vmatprep.mubr.f32.mxu0 0.0
  %2350 = vmatmul.mubr.f32.gmra.mrb[0].mxu0 %v2169
  %v2351 = vpop.f32.mrb[0].mxu0
  %v2352 = vadd.f32 0.0, %v2351
  %v2353 = vpop.f32.mrb[0].mxu0
  %2354 = vmatprep.mubr.f32.mxu0 0.0
  %2355 = vmatmul.mubr.f32.gmra.mrb[0].mxu0 %v2172
  %v2356 = vpop.f32.mrb[0].mxu0
  %v2357 = vadd.f32 0.0, %v2356
  %v2358 = vpop.f32.mrb[0].mxu0
  %2359 = vmatprep.mubr.f32.mxu0 0.0
  %2360 = vmatmul.mubr.f32.gmra.mrb[0].mxu0 %v2175
  %v2361 = vpop.f32.mrb[0].mxu0
  %v2362 = vadd.f32 0.0, %v2361
  %v2363 = vpop.f32.mrb[0].mxu0
  %2364 = vmatprep.mubr.f32.mxu0 0.0
  %2365 = vmatmul.mubr.f32.gmra.mrb[0].mxu0 %v2178
  %v2366 = vpop.f32.mrb[0].mxu0
  %v2367 = vadd.f32 0.0, %v2366
  %v2368 = vpop.f32.mrb[0].mxu0
  %2369 = vdwg.mxu0
  %v2371 = vsel %vm2026, %v2052, 0
  %v2374 = vsel %vm2026, %v2053, 0
  %v2377 = vsel %vm2026, %v2054, 0
  %v2380 = vsel %vm2026, %v2055, 0
  %v2383 = vsel %vm2026, %v2056, 0
  %v2386 = vsel %vm2026, %v2057, 0
  %v2389 = vsel %vm2026, %v2058, 0
  %v2392 = vsel %vm2026, %v2059, 0
  %v2395 = vsel %vm2026, %v2060, 0
  %v2398 = vsel %vm2026, %v2061, 0
  %v2401 = vsel %vm2026, %v2062, 0
  %v2404 = vsel %vm2026, %v2063, 0
  %v2407 = vsel %vm2026, %v2064, 0
  %v2410 = vsel %vm2026, %v2065, 0
  %v2413 = vsel %vm2026, %v2066, 0
  %v2416 = vsel %vm2026, %v2067, 0
  %v2419 = vsel %vm2026, %v2068, 0
  %v2422 = vsel %vm2026, %v2069, 0
  %v2425 = vsel %vm2026, %v2070, 0
  %v2428 = vsel %vm2026, %v2071, 0
  %v2431 = vsel %vm2026, %v2072, 0
  %v2434 = vsel %vm2026, %v2073, 0
  %v2437 = vsel %vm2026, %v2074, 0
  %v2440 = vsel %vm2026, %v2075, 0
  %v2443 = vsel %vm2026, %v2076, 0
  %2445 = vmatprep.subr.mxu0 0.0
  %2446 = vmatpush1.msra.mxu0 %v2077
  %2447 = vmatprep.subr.mxu0 0.0
  %2448 = vmatpush1.msra.mxu0 0.0
  %2449 = vmatprep.subr.mxu0 0.0
  %2450 = vmatpush1.msra.mxu0 0.0
  %2451 = vmatprep.subr.mxu0 0.0
  %2452 = vmatpush1.msra.mxu0 0.0
  %2453 = vmatprep.subr.mxu0 0.0
  %2454 = vmatpush1.msra.mxu0 0.0
  %2455 = vmatprep.subr.mxu0 0.0
  %2456 = vmatpush1.msra.mxu0 0.0
  %2457 = vmatprep.subr.mxu0 0.0
  %2458 = vmatpush1.msra.mxu0 0.0
  %2459 = vmatprep.subr.mxu0 0.0
  %2460 = vmatpush1.msra.mxu0 0.0
  %2461 = vmatprep.subr.mxu0 0.0
  %2462 = vmatpush1.msra.mxu0 0.0
  %2463 = vmatprep.subr.mxu0 0.0
  %2464 = vmatpush1.msra.mxu0 0.0
  %2465 = vmatprep.subr.mxu0 0.0
  %2466 = vmatpush1.msra.mxu0 0.0
  %2467 = vmatprep.subr.mxu0 0.0
  %2468 = vmatpush1.msra.mxu0 0.0
  %2469 = vmatprep.subr.mxu0 0.0
  %2470 = vmatpush1.msra.mxu0 0.0
  %2471 = vmatprep.subr.mxu0 0.0
  %2472 = vmatpush1.msra.mxu0 0.0
  %2473 = vmatprep.subr.mxu0 0.0
  %2474 = vmatpush1.msra.mxu0 0.0
  %2475 = vmatprep.subr.mxu0 0.0
  %2476 = vmatpush1.msra.mxu0 0.0
  %2477 = vmatprep.subr.mxu0 0.0
  %2478 = vmatpush1.msra.mxu0 0.0
  %2479 = vmatprep.subr.mxu0 0.0
  %2480 = vmatpush1.msra.mxu0 0.0
  %2481 = vmatprep.subr.mxu0 0.0
  %2482 = vmatpush1.msra.mxu0 0.0
  %2483 = vmatprep.subr.mxu0 0.0
  %2484 = vmatpush1.msra.mxu0 0.0
  %2485 = vmatprep.subr.mxu0 0.0
  %2486 = vmatpush1.msra.mxu0 0.0
  %2487 = vmatprep.subr.mxu0 0.0
  %2488 = vmatpush1.msra.mxu0 0.0
  %2489 = vmatprep.subr.mxu0 0.0
  %2490 = vmatpush1.msra.mxu0 0.0
  %2491 = vmatprep.subr.mxu0 0.0
  %2492 = vmatpush1.msra.mxu0 0.0
  %2493 = vmatprep.subr.mxu0 0.0
  %2494 = vmatpush1.msra.mxu0 0.0
  %2495 = vmatprep.subr.mxu0 0.0
  %2496 = vmatpush1.msra.mxu0 0.0
  %2497 = vmatprep.subr.mxu0 0.0
  %2498 = vmatpush1.msra.mxu0 0.0
  %2499 = vmatprep.subr.mxu0 0.0
  %2500 = vmatpush1.msra.mxu0 0.0
  %2501 = vmatprep.subr.mxu0 0.0
  %2502 = vmatpush1.msra.mxu0 0.0
  %2503 = vmatprep.subr.mxu0 0.0
  %2504 = vmatpush1.msra.mxu0 0.0
  %2505 = vmatprep.subr.mxu0 0.0
  %2506 = vmatpush1.msra.mxu0 0.0
  %2507 = vmatprep.subr.mxu0 0.0
  %2508 = vmatpush1.msra.mxu0 0.0
  %2509 = vmatprep.mubr.f32.mxu0 0.0
  %2510 = vmatmul.mubr.f32.gmra.mrb[0].mxu0 %v2371
  %v2511 = vpop.f32.mrb[0].mxu0
  %v2512 = vadd.f32 %v2247, %v2511
  %v2513 = vpop.f32.mrb[0].mxu0
  %2514 = vmatprep.mubr.f32.mxu0 0.0
  %2515 = vmatmul.mubr.f32.gmra.mrb[0].mxu0 %v2374
  %v2516 = vpop.f32.mrb[0].mxu0
  %v2517 = vadd.f32 %v2252, %v2516
  %v2518 = vpop.f32.mrb[0].mxu0
  %2519 = vmatprep.mubr.f32.mxu0 0.0
  %2520 = vmatmul.mubr.f32.gmra.mrb[0].mxu0 %v2377
  %v2521 = vpop.f32.mrb[0].mxu0
  %v2522 = vadd.f32 %v2257, %v2521
  %v2523 = vpop.f32.mrb[0].mxu0
  %2524 = vmatprep.mubr.f32.mxu0 0.0
  %2525 = vmatmul.mubr.f32.gmra.mrb[0].mxu0 %v2380
  %v2526 = vpop.f32.mrb[0].mxu0
  %v2527 = vadd.f32 %v2262, %v2526
  %v2528 = vpop.f32.mrb[0].mxu0
  %2529 = vmatprep.mubr.f32.mxu0 0.0
  %2530 = vmatmul.mubr.f32.gmra.mrb[0].mxu0 %v2383
  %v2531 = vpop.f32.mrb[0].mxu0
  %v2532 = vadd.f32 %v2267, %v2531
  %v2533 = vpop.f32.mrb[0].mxu0
  %2534 = vmatprep.mubr.f32.mxu0 0.0
  %2535 = vmatmul.mubr.f32.gmra.mrb[0].mxu0 %v2386
  %v2536 = vpop.f32.mrb[0].mxu0
  %v2537 = vadd.f32 %v2272, %v2536
  %v2538 = vpop.f32.mrb[0].mxu0
  %2539 = vmatprep.mubr.f32.mxu0 0.0
  %2540 = vmatmul.mubr.f32.gmra.mrb[0].mxu0 %v2389
  %v2541 = vpop.f32.mrb[0].mxu0
  %v2542 = vadd.f32 %v2277, %v2541
  %v2543 = vpop.f32.mrb[0].mxu0
  %2544 = vmatprep.mubr.f32.mxu0 0.0
  %2545 = vmatmul.mubr.f32.gmra.mrb[0].mxu0 %v2392
  %v2546 = vpop.f32.mrb[0].mxu0
  %v2547 = vadd.f32 %v2282, %v2546
  %v2548 = vpop.f32.mrb[0].mxu0
  %2549 = vmatprep.mubr.f32.mxu0 0.0
  %2550 = vmatmul.mubr.f32.gmra.mrb[0].mxu0 %v2395
  %v2551 = vpop.f32.mrb[0].mxu0
  %v2552 = vadd.f32 %v2287, %v2551
  %v2553 = vpop.f32.mrb[0].mxu0
  %2554 = vmatprep.mubr.f32.mxu0 0.0
  %2555 = vmatmul.mubr.f32.gmra.mrb[0].mxu0 %v2398
  %v2556 = vpop.f32.mrb[0].mxu0
  %v2557 = vadd.f32 %v2292, %v2556
  %v2558 = vpop.f32.mrb[0].mxu0
  %2559 = vmatprep.mubr.f32.mxu0 0.0
  %2560 = vmatmul.mubr.f32.gmra.mrb[0].mxu0 %v2401
  %v2561 = vpop.f32.mrb[0].mxu0
  %v2562 = vadd.f32 %v2297, %v2561
  %v2563 = vpop.f32.mrb[0].mxu0
  %2564 = vmatprep.mubr.f32.mxu0 0.0
  %2565 = vmatmul.mubr.f32.gmra.mrb[0].mxu0 %v2404
  %v2566 = vpop.f32.mrb[0].mxu0
  %v2567 = vadd.f32 %v2302, %v2566
  %v2568 = vpop.f32.mrb[0].mxu0
  %2569 = vmatprep.mubr.f32.mxu0 0.0
  %2570 = vmatmul.mubr.f32.gmra.mrb[0].mxu0 %v2407
  %v2571 = vpop.f32.mrb[0].mxu0
  %v2572 = vadd.f32 %v2307, %v2571
  %v2573 = vpop.f32.mrb[0].mxu0
  %2574 = vmatprep.mubr.f32.mxu0 0.0
  %2575 = vmatmul.mubr.f32.gmra.mrb[0].mxu0 %v2410
  %v2576 = vpop.f32.mrb[0].mxu0
  %v2577 = vadd.f32 %v2312, %v2576
  %v2578 = vpop.f32.mrb[0].mxu0
  %2579 = vmatprep.mubr.f32.mxu0 0.0
  %2580 = vmatmul.mubr.f32.gmra.mrb[0].mxu0 %v2413
  %v2581 = vpop.f32.mrb[0].mxu0
  %v2582 = vadd.f32 %v2317, %v2581
  %v2583 = vpop.f32.mrb[0].mxu0
  %2584 = vmatprep.mubr.f32.mxu0 0.0
  %2585 = vmatmul.mubr.f32.gmra.mrb[0].mxu0 %v2416
  %v2586 = vpop.f32.mrb[0].mxu0
  %v2587 = vadd.f32 %v2322, %v2586
  %v2588 = vpop.f32.mrb[0].mxu0
  %2589 = vmatprep.mubr.f32.mxu0 0.0
  %2590 = vmatmul.mubr.f32.gmra.mrb[0].mxu0 %v2419
  %v2591 = vpop.f32.mrb[0].mxu0
  %v2592 = vadd.f32 %v2327, %v2591
  %v2593 = vpop.f32.mrb[0].mxu0
  %2594 = vmatprep.mubr.f32.mxu0 0.0
  %2595 = vmatmul.mubr.f32.gmra.mrb[0].mxu0 %v2422
  %v2596 = vpop.f32.mrb[0].mxu0
  %v2597 = vadd.f32 %v2332, %v2596
  %v2598 = vpop.f32.mrb[0].mxu0
  %2599 = vmatprep.mubr.f32.mxu0 0.0
  %2600 = vmatmul.mubr.f32.gmra.mrb[0].mxu0 %v2425
  %v2601 = vpop.f32.mrb[0].mxu0
  %v2602 = vadd.f32 %v2337, %v2601
  %v2603 = vpop.f32.mrb[0].mxu0
  %2604 = vmatprep.mubr.f32.mxu0 0.0
  %2605 = vmatmul.mubr.f32.gmra.mrb[0].mxu0 %v2428
  %v2606 = vpop.f32.mrb[0].mxu0
  %v2607 = vadd.f32 %v2342, %v2606
  %v2608 = vpop.f32.mrb[0].mxu0
  %2609 = vmatprep.mubr.f32.mxu0 0.0
  %2610 = vmatmul.mubr.f32.gmra.mrb[0].mxu0 %v2431
  %v2611 = vpop.f32.mrb[0].mxu0
  %v2612 = vadd.f32 %v2347, %v2611
  %v2613 = vpop.f32.mrb[0].mxu0
  %2614 = vmatprep.mubr.f32.mxu0 0.0
  %2615 = vmatmul.mubr.f32.gmra.mrb[0].mxu0 %v2434
  %v2616 = vpop.f32.mrb[0].mxu0
  %v2617 = vadd.f32 %v2352, %v2616
  %v2618 = vpop.f32.mrb[0].mxu0
  %2619 = vmatprep.mubr.f32.mxu0 0.0
  %2620 = vmatmul.mubr.f32.gmra.mrb[0].mxu0 %v2437
  %v2621 = vpop.f32.mrb[0].mxu0
  %v2622 = vadd.f32 %v2357, %v2621
  %v2623 = vpop.f32.mrb[0].mxu0
  %2624 = vmatprep.mubr.f32.mxu0 0.0
  %2625 = vmatmul.mubr.f32.gmra.mrb[0].mxu0 %v2440
  %v2626 = vpop.f32.mrb[0].mxu0
  %v2627 = vadd.f32 %v2362, %v2626
  %v2628 = vpop.f32.mrb[0].mxu0
  %2629 = vmatprep.mubr.f32.mxu0 0.0
  %2630 = vmatmul.mubr.f32.gmra.mrb[0].mxu0 %v2443
  %v2631 = vpop.f32.mrb[0].mxu0
  %v2632 = vadd.f32 %v2367, %v2631
  %v2633 = vpop.f32.mrb[0].mxu0
  %2634 = vdwg.mxu0
  %v2635 = vld [vmem:[#allocation3 + $0x2] sm:$0xff]
  %v2636 = vld [vmem:[#allocation3 + $0xa] sm:$0xff]
  %v2637 = vld [vmem:[#allocation3 + $0x12] sm:$0xff]
  %v2638 = vld [vmem:[#allocation3 + $0x1a] sm:$0xff]
  %v2639 = vld [vmem:[#allocation3 + $0x22] sm:$0xff]
  %v2640 = vld [vmem:[#allocation3 + $0x2a] sm:$0xff]
  %v2641 = vld [vmem:[#allocation3 + $0x32] sm:$0xff]
  %v2642 = vld [vmem:[#allocation3 + $0x3a] sm:$0xff]
  %v2643 = vld [vmem:[#allocation3 + $0x42] sm:$0xff]
  %v2644 = vld [vmem:[#allocation3 + $0x4a] sm:$0xff]
  %v2645 = vld [vmem:[#allocation3 + $0x52] sm:$0xff]
  %v2646 = vld [vmem:[#allocation3 + $0x5a] sm:$0xff]
  %v2647 = vld [vmem:[#allocation3 + $0x62] sm:$0xff]
  %v2648 = vld [vmem:[#allocation3 + $0x6a] sm:$0xff]
  %v2649 = vld [vmem:[#allocation3 + $0x72] sm:$0xff]
  %v2650 = vld [vmem:[#allocation3 + $0x7a] sm:$0xff]
  %v2651 = vld [vmem:[#allocation3 + $0x82] sm:$0xff]
  %v2652 = vld [vmem:[#allocation3 + $0x8a] sm:$0xff]
  %v2653 = vld [vmem:[#allocation3 + $0x92] sm:$0xff]
  %v2654 = vld [vmem:[#allocation3 + $0x9a] sm:$0xff]
  %v2655 = vld [vmem:[#allocation3 + $0xa2] sm:$0xff]
  %v2656 = vld [vmem:[#allocation3 + $0xaa] sm:$0xff]
  %v2657 = vld [vmem:[#allocation3 + $0xb2] sm:$0xff]
  %v2658 = vld [vmem:[#allocation3 + $0xba] sm:$0xff]
  %v2659 = vld [vmem:[#allocation3 + $0xc2] sm:$0xff]
  %s2660 = scalar_lea.vmem %s3, 16
  %v2661 = vld [vmem:[%s2660] sm:$0xff]
  %v2663 = vsel %vm2026, %v2635, 0
  %v2666 = vsel %vm2026, %v2636, 0
  %v2669 = vsel %vm2026, %v2637, 0
  %v2672 = vsel %vm2026, %v2638, 0
  %v2675 = vsel %vm2026, %v2639, 0
  %v2678 = vsel %vm2026, %v2640, 0
  %v2681 = vsel %vm2026, %v2641, 0
  %v2684 = vsel %vm2026, %v2642, 0
  %v2687 = vsel %vm2026, %v2643, 0
  %v2690 = vsel %vm2026, %v2644, 0
  %v2693 = vsel %vm2026, %v2645, 0
  %v2696 = vsel %vm2026, %v2646, 0
  %v2699 = vsel %vm2026, %v2647, 0
  %v2702 = vsel %vm2026, %v2648, 0
  %v2705 = vsel %vm2026, %v2649, 0
  %v2708 = vsel %vm2026, %v2650, 0
  %v2711 = vsel %vm2026, %v2651, 0
  %v2714 = vsel %vm2026, %v2652, 0
  %v2717 = vsel %vm2026, %v2653, 0
  %v2720 = vsel %vm2026, %v2654, 0
  %v2723 = vsel %vm2026, %v2655, 0
  %v2726 = vsel %vm2026, %v2656, 0
  %v2729 = vsel %vm2026, %v2657, 0
  %v2732 = vsel %vm2026, %v2658, 0
  %v2735 = vsel %vm2026, %v2659, 0
  %2737 = vmatprep.subr.mxu0 0.0
  %2738 = vmatpush1.msra.mxu0 %v2661
  %2739 = vmatprep.subr.mxu0 0.0
  %2740 = vmatpush1.msra.mxu0 0.0
  %2741 = vmatprep.subr.mxu0 0.0
  %2742 = vmatpush1.msra.mxu0 0.0
  %2743 = vmatprep.subr.mxu0 0.0
  %2744 = vmatpush1.msra.mxu0 0.0
  %2745 = vmatprep.subr.mxu0 0.0
  %2746 = vmatpush1.msra.mxu0 0.0
  %2747 = vmatprep.subr.mxu0 0.0
  %2748 = vmatpush1.msra.mxu0 0.0
  %2749 = vmatprep.subr.mxu0 0.0
  %2750 = vmatpush1.msra.mxu0 0.0
  %2751 = vmatprep.subr.mxu0 0.0
  %2752 = vmatpush1.msra.mxu0 0.0
  %2753 = vmatprep.subr.mxu0 0.0
  %2754 = vmatpush1.msra.mxu0 0.0
  %2755 = vmatprep.subr.mxu0 0.0
  %2756 = vmatpush1.msra.mxu0 0.0
  %2757 = vmatprep.subr.mxu0 0.0
  %2758 = vmatpush1.msra.mxu0 0.0
  %2759 = vmatprep.subr.mxu0 0.0
  %2760 = vmatpush1.msra.mxu0 0.0
  %2761 = vmatprep.subr.mxu0 0.0
  %2762 = vmatpush1.msra.mxu0 0.0
  %2763 = vmatprep.subr.mxu0 0.0
  %2764 = vmatpush1.msra.mxu0 0.0
  %2765 = vmatprep.subr.mxu0 0.0
  %2766 = vmatpush1.msra.mxu0 0.0
  %2767 = vmatprep.subr.mxu0 0.0
  %2768 = vmatpush1.msra.mxu0 0.0
  %2769 = vmatprep.subr.mxu0 0.0
  %2770 = vmatpush1.msra.mxu0 0.0
  %2771 = vmatprep.subr.mxu0 0.0
  %2772 = vmatpush1.msra.mxu0 0.0
  %2773 = vmatprep.subr.mxu0 0.0
  %2774 = vmatpush1.msra.mxu0 0.0
  %2775 = vmatprep.subr.mxu0 0.0
  %2776 = vmatpush1.msra.mxu0 0.0
  %2777 = vmatprep.subr.mxu0 0.0
  %2778 = vmatpush1.msra.mxu0 0.0
  %2779 = vmatprep.subr.mxu0 0.0
  %2780 = vmatpush1.msra.mxu0 0.0
  %2781 = vmatprep.subr.mxu0 0.0
  %2782 = vmatpush1.msra.mxu0 0.0
  %2783 = vmatprep.subr.mxu0 0.0
  %2784 = vmatpush1.msra.mxu0 0.0
  %2785 = vmatprep.subr.mxu0 0.0
  %2786 = vmatpush1.msra.mxu0 0.0
  %2787 = vmatprep.subr.mxu0 0.0
  %2788 = vmatpush1.msra.mxu0 0.0
  %2789 = vmatprep.subr.mxu0 0.0
  %2790 = vmatpush1.msra.mxu0 0.0
  %2791 = vmatprep.subr.mxu0 0.0
  %2792 = vmatpush1.msra.mxu0 0.0
  %2793 = vmatprep.subr.mxu0 0.0
  %2794 = vmatpush1.msra.mxu0 0.0
  %2795 = vmatprep.subr.mxu0 0.0
  %2796 = vmatpush1.msra.mxu0 0.0
  %2797 = vmatprep.subr.mxu0 0.0
  %2798 = vmatpush1.msra.mxu0 0.0
  %2799 = vmatprep.subr.mxu0 0.0
  %2800 = vmatpush1.msra.mxu0 0.0
  %2801 = vmatprep.mubr.f32.mxu0 0.0
  %2802 = vmatmul.mubr.f32.gmra.mrb[0].mxu0 %v2663
  %v2803 = vpop.f32.mrb[0].mxu0
  %v2804 = vadd.f32 0.0, %v2803
  %v2805 = vpop.f32.mrb[0].mxu0
  %2806 = vmatprep.mubr.f32.mxu0 0.0
  %2807 = vmatmul.mubr.f32.gmra.mrb[0].mxu0 %v2666
  %v2808 = vpop.f32.mrb[0].mxu0
  %v2809 = vadd.f32 0.0, %v2808
  %v2810 = vpop.f32.mrb[0].mxu0
  %2811 = vmatprep.mubr.f32.mxu0 0.0
  %2812 = vmatmul.mubr.f32.gmra.mrb[0].mxu0 %v2669
  %v2813 = vpop.f32.mrb[0].mxu0
  %v2814 = vadd.f32 0.0, %v2813
  %v2815 = vpop.f32.mrb[0].mxu0
  %2816 = vmatprep.mubr.f32.mxu0 0.0
  %2817 = vmatmul.mubr.f32.gmra.mrb[0].mxu0 %v2672
  %v2818 = vpop.f32.mrb[0].mxu0
  %v2819 = vadd.f32 0.0, %v2818
  %v2820 = vpop.f32.mrb[0].mxu0
  %2821 = vmatprep.mubr.f32.mxu0 0.0
  %2822 = vmatmul.mubr.f32.gmra.mrb[0].mxu0 %v2675
  %v2823 = vpop.f32.mrb[0].mxu0
  %v2824 = vadd.f32 0.0, %v2823
  %v2825 = vpop.f32.mrb[0].mxu0
  %2826 = vmatprep.mubr.f32.mxu0 0.0
  %2827 = vmatmul.mubr.f32.gmra.mrb[0].mxu0 %v2678
  %v2828 = vpop.f32.mrb[0].mxu0
  %v2829 = vadd.f32 0.0, %v2828
  %v2830 = vpop.f32.mrb[0].mxu0
  %2831 = vmatprep.mubr.f32.mxu0 0.0
  %2832 = vmatmul.mubr.f32.gmra.mrb[0].mxu0 %v2681
  %v2833 = vpop.f32.mrb[0].mxu0
  %v2834 = vadd.f32 0.0, %v2833
  %v2835 = vpop.f32.mrb[0].mxu0
  %2836 = vmatprep.mubr.f32.mxu0 0.0
  %2837 = vmatmul.mubr.f32.gmra.mrb[0].mxu0 %v2684
  %v2838 = vpop.f32.mrb[0].mxu0
  %v2839 = vadd.f32 0.0, %v2838
  %v2840 = vpop.f32.mrb[0].mxu0
  %2841 = vmatprep.mubr.f32.mxu0 0.0
  %2842 = vmatmul.mubr.f32.gmra.mrb[0].mxu0 %v2687
  %v2843 = vpop.f32.mrb[0].mxu0
  %v2844 = vadd.f32 0.0, %v2843
  %v2845 = vpop.f32.mrb[0].mxu0
  %2846 = vmatprep.mubr.f32.mxu0 0.0
  %2847 = vmatmul.mubr.f32.gmra.mrb[0].mxu0 %v2690
  %v2848 = vpop.f32.mrb[0].mxu0
  %v2849 = vadd.f32 0.0, %v2848
  %v2850 = vpop.f32.mrb[0].mxu0
  %2851 = vmatprep.mubr.f32.mxu0 0.0
  %2852 = vmatmul.mubr.f32.gmra.mrb[0].mxu0 %v2693
  %v2853 = vpop.f32.mrb[0].mxu0
  %v2854 = vadd.f32 0.0, %v2853
  %v2855 = vpop.f32.mrb[0].mxu0
  %2856 = vmatprep.mubr.f32.mxu0 0.0
  %2857 = vmatmul.mubr.f32.gmra.mrb[0].mxu0 %v2696
  %v2858 = vpop.f32.mrb[0].mxu0
  %v2859 = vadd.f32 0.0, %v2858
  %v2860 = vpop.f32.mrb[0].mxu0
  %2861 = vmatprep.mubr.f32.mxu0 0.0
  %2862 = vmatmul.mubr.f32.gmra.mrb[0].mxu0 %v2699
  %v2863 = vpop.f32.mrb[0].mxu0
  %v2864 = vadd.f32 0.0, %v2863
  %v2865 = vpop.f32.mrb[0].mxu0
  %2866 = vmatprep.mubr.f32.mxu0 0.0
  %2867 = vmatmul.mubr.f32.gmra.mrb[0].mxu0 %v2702
  %v2868 = vpop.f32.mrb[0].mxu0
  %v2869 = vadd.f32 0.0, %v2868
  %v2870 = vpop.f32.mrb[0].mxu0
  %2871 = vmatprep.mubr.f32.mxu0 0.0
  %2872 = vmatmul.mubr.f32.gmra.mrb[0].mxu0 %v2705
  %v2873 = vpop.f32.mrb[0].mxu0
  %v2874 = vadd.f32 0.0, %v2873
  %v2875 = vpop.f32.mrb[0].mxu0
  %2876 = vmatprep.mubr.f32.mxu0 0.0
  %2877 = vmatmul.mubr.f32.gmra.mrb[0].mxu0 %v2708
  %v2878 = vpop.f32.mrb[0].mxu0
  %v2879 = vadd.f32 0.0, %v2878
  %v2880 = vpop.f32.mrb[0].mxu0
  %2881 = vmatprep.mubr.f32.mxu0 0.0
  %2882 = vmatmul.mubr.f32.gmra.mrb[0].mxu0 %v2711
  %v2883 = vpop.f32.mrb[0].mxu0
  %v2884 = vadd.f32 0.0, %v2883
  %v2885 = vpop.f32.mrb[0].mxu0
  %2886 = vmatprep.mubr.f32.mxu0 0.0
  %2887 = vmatmul.mubr.f32.gmra.mrb[0].mxu0 %v2714
  %v2888 = vpop.f32.mrb[0].mxu0
  %v2889 = vadd.f32 0.0, %v2888
  %v2890 = vpop.f32.mrb[0].mxu0
  %2891 = vmatprep.mubr.f32.mxu0 0.0
  %2892 = vmatmul.mubr.f32.gmra.mrb[0].mxu0 %v2717
  %v2893 = vpop.f32.mrb[0].mxu0
  %v2894 = vadd.f32 0.0, %v2893
  %v2895 = vpop.f32.mrb[0].mxu0
  %2896 = vmatprep.mubr.f32.mxu0 0.0
  %2897 = vmatmul.mubr.f32.gmra.mrb[0].mxu0 %v2720
  %v2898 = vpop.f32.mrb[0].mxu0
  %v2899 = vadd.f32 0.0, %v2898
  %v2900 = vpop.f32.mrb[0].mxu0
  %2901 = vmatprep.mubr.f32.mxu0 0.0
  %2902 = vmatmul.mubr.f32.gmra.mrb[0].mxu0 %v2723
  %v2903 = vpop.f32.mrb[0].mxu0
  %v2904 = vadd.f32 0.0, %v2903
  %v2905 = vpop.f32.mrb[0].mxu0
  %2906 = vmatprep.mubr.f32.mxu0 0.0
  %2907 = vmatmul.mubr.f32.gmra.mrb[0].mxu0 %v2726
  %v2908 = vpop.f32.mrb[0].mxu0
  %v2909 = vadd.f32 0.0, %v2908
  %v2910 = vpop.f32.mrb[0].mxu0
  %2911 = vmatprep.mubr.f32.mxu0 0.0
  %2912 = vmatmul.mubr.f32.gmra.mrb[0].mxu0 %v2729
  %v2913 = vpop.f32.mrb[0].mxu0
  %v2914 = vadd.f32 0.0, %v2913
  %v2915 = vpop.f32.mrb[0].mxu0
  %2916 = vmatprep.mubr.f32.mxu0 0.0
  %2917 = vmatmul.mubr.f32.gmra.mrb[0].mxu0 %v2732
  %v2918 = vpop.f32.mrb[0].mxu0
  %v2919 = vadd.f32 0.0, %v2918
  %v2920 = vpop.f32.mrb[0].mxu0
  %2921 = vmatprep.mubr.f32.mxu0 0.0
  %2922 = vmatmul.mubr.f32.gmra.mrb[0].mxu0 %v2735
  %v2923 = vpop.f32.mrb[0].mxu0
  %v2924 = vadd.f32 0.0, %v2923
  %v2925 = vpop.f32.mrb[0].mxu0
  %2926 = vdwg.mxu0
  %v2927 = vadd.f32 %v2512, %v2804
  %v2928 = vadd.f32 %v2517, %v2809
  %v2929 = vadd.f32 %v2522, %v2814
  %v2930 = vadd.f32 %v2527, %v2819
  %v2931 = vadd.f32 %v2532, %v2824
  %v2932 = vadd.f32 %v2537, %v2829
  %v2933 = vadd.f32 %v2542, %v2834
  %v2934 = vadd.f32 %v2547, %v2839
  %v2935 = vadd.f32 %v2552, %v2844
  %v2936 = vadd.f32 %v2557, %v2849
  %v2937 = vadd.f32 %v2562, %v2854
  %v2938 = vadd.f32 %v2567, %v2859
  %v2939 = vadd.f32 %v2572, %v2864
  %v2940 = vadd.f32 %v2577, %v2869
  %v2941 = vadd.f32 %v2582, %v2874
  %v2942 = vadd.f32 %v2587, %v2879
  %v2943 = vadd.f32 %v2592, %v2884
  %v2944 = vadd.f32 %v2597, %v2889
  %v2945 = vadd.f32 %v2602, %v2894
  %v2946 = vadd.f32 %v2607, %v2899
  %v2947 = vadd.f32 %v2612, %v2904
  %v2948 = vadd.f32 %v2617, %v2909
  %v2949 = vadd.f32 %v2622, %v2914
  %v2950 = vadd.f32 %v2627, %v2919
  %v2951 = vadd.f32 %v2632, %v2924
  %v2952 = vld [vmem:[#allocation3 + $0xa] sm:$0xff]
  %v2953 = vld [vmem:[#allocation3 + $0x12] sm:$0xff]
  %v2954 = vld [vmem:[#allocation3 + $0x1a] sm:$0xff]
  %v2955 = vld [vmem:[#allocation3 + $0x22] sm:$0xff]
  %v2956 = vld [vmem:[#allocation3 + $0x2a] sm:$0xff]
  %v2957 = vld [vmem:[#allocation3 + $0x32] sm:$0xff]
  %v2958 = vld [vmem:[#allocation3 + $0x3a] sm:$0xff]
  %v2959 = vld [vmem:[#allocation3 + $0x42] sm:$0xff]
  %v2960 = vld [vmem:[#allocation3 + $0x4a] sm:$0xff]
  %v2961 = vld [vmem:[#allocation3 + $0x52] sm:$0xff]
  %v2962 = vld [vmem:[#allocation3 + $0x5a] sm:$0xff]
  %v2963 = vld [vmem:[#allocation3 + $0x62] sm:$0xff]
  %v2964 = vld [vmem:[#allocation3 + $0x6a] sm:$0xff]
  %v2965 = vld [vmem:[#allocation3 + $0x72] sm:$0xff]
  %v2966 = vld [vmem:[#allocation3 + $0x7a] sm:$0xff]
  %v2967 = vld [vmem:[#allocation3 + $0x82] sm:$0xff]
  %v2968 = vld [vmem:[#allocation3 + $0x8a] sm:$0xff]
  %v2969 = vld [vmem:[#allocation3 + $0x92] sm:$0xff]
  %v2970 = vld [vmem:[#allocation3 + $0x9a] sm:$0xff]
  %v2971 = vld [vmem:[#allocation3 + $0xa2] sm:$0xff]
  %v2972 = vld [vmem:[#allocation3 + $0xaa] sm:$0xff]
  %v2973 = vld [vmem:[#allocation3 + $0xb2] sm:$0xff]
  %v2974 = vld [vmem:[#allocation3 + $0xba] sm:$0xff]
  %v2975 = vld [vmem:[#allocation3 + $0xc2] sm:$0xff]
  %v2976 = vld [vmem:[#allocation3 + $0xca] sm:$0xff]
  %s2977 = scalar_lea.vmem %s3, 24
  %v2978 = vld [vmem:[%s2977] sm:$0xff]
  %v2980 = vsel %vm2026, %v2952, 0
  %v2983 = vsel %vm2026, %v2953, 0
  %v2986 = vsel %vm2026, %v2954, 0
  %v2989 = vsel %vm2026, %v2955, 0
  %v2992 = vsel %vm2026, %v2956, 0
  %v2995 = vsel %vm2026, %v2957, 0
  %v2998 = vsel %vm2026, %v2958, 0
  %v3001 = vsel %vm2026, %v2959, 0
  %v3004 = vsel %vm2026, %v2960, 0
  %v3007 = vsel %vm2026, %v2961, 0
  %v3010 = vsel %vm2026, %v2962, 0
  %v3013 = vsel %vm2026, %v2963, 0
  %v3016 = vsel %vm2026, %v2964, 0
  %v3019 = vsel %vm2026, %v2965, 0
  %v3022 = vsel %vm2026, %v2966, 0
  %v3025 = vsel %vm2026, %v2967, 0
  %v3028 = vsel %vm2026, %v2968, 0
  %v3031 = vsel %vm2026, %v2969, 0
  %v3034 = vsel %vm2026, %v2970, 0
  %v3037 = vsel %vm2026, %v2971, 0
  %v3040 = vsel %vm2026, %v2972, 0
  %v3043 = vsel %vm2026, %v2973, 0
  %v3046 = vsel %vm2026, %v2974, 0
  %v3049 = vsel %vm2026, %v2975, 0
  %v3052 = vsel %vm2026, %v2976, 0
  %3054 = vmatprep.subr.mxu0 0.0
  %3055 = vmatpush1.msra.mxu0 %v2978
  %3056 = vmatprep.subr.mxu0 0.0
  %3057 = vmatpush1.msra.mxu0 0.0
  %3058 = vmatprep.subr.mxu0 0.0
  %3059 = vmatpush1.msra.mxu0 0.0
  %3060 = vmatprep.subr.mxu0 0.0
  %3061 = vmatpush1.msra.mxu0 0.0
  %3062 = vmatprep.subr.mxu0 0.0
  %3063 = vmatpush1.msra.mxu0 0.0
  %3064 = vmatprep.subr.mxu0 0.0
  %3065 = vmatpush1.msra.mxu0 0.0
  %3066 = vmatprep.subr.mxu0 0.0
  %3067 = vmatpush1.msra.mxu0 0.0
  %3068 = vmatprep.subr.mxu0 0.0
  %3069 = vmatpush1.msra.mxu0 0.0
  %3070 = vmatprep.subr.mxu0 0.0
  %3071 = vmatpush1.msra.mxu0 0.0
  %3072 = vmatprep.subr.mxu0 0.0
  %3073 = vmatpush1.msra.mxu0 0.0
  %3074 = vmatprep.subr.mxu0 0.0
  %3075 = vmatpush1.msra.mxu0 0.0
  %3076 = vmatprep.subr.mxu0 0.0
  %3077 = vmatpush1.msra.mxu0 0.0
  %3078 = vmatprep.subr.mxu0 0.0
  %3079 = vmatpush1.msra.mxu0 0.0
  %3080 = vmatprep.subr.mxu0 0.0
  %3081 = vmatpush1.msra.mxu0 0.0
  %3082 = vmatprep.subr.mxu0 0.0
  %3083 = vmatpush1.msra.mxu0 0.0
  %3084 = vmatprep.subr.mxu0 0.0
  %3085 = vmatpush1.msra.mxu0 0.0
  %3086 = vmatprep.subr.mxu0 0.0
  %3087 = vmatpush1.msra.mxu0 0.0
  %3088 = vmatprep.subr.mxu0 0.0
  %3089 = vmatpush1.msra.mxu0 0.0
  %3090 = vmatprep.subr.mxu0 0.0
  %3091 = vmatpush1.msra.mxu0 0.0
  %3092 = vmatprep.subr.mxu0 0.0
  %3093 = vmatpush1.msra.mxu0 0.0
  %3094 = vmatprep.subr.mxu0 0.0
  %3095 = vmatpush1.msra.mxu0 0.0
  %3096 = vmatprep.subr.mxu0 0.0
  %3097 = vmatpush1.msra.mxu0 0.0
  %3098 = vmatprep.subr.mxu0 0.0
  %3099 = vmatpush1.msra.mxu0 0.0
  %3100 = vmatprep.subr.mxu0 0.0
  %3101 = vmatpush1.msra.mxu0 0.0
  %3102 = vmatprep.subr.mxu0 0.0
  %3103 = vmatpush1.msra.mxu0 0.0
  %3104 = vmatprep.subr.mxu0 0.0
  %3105 = vmatpush1.msra.mxu0 0.0
  %3106 = vmatprep.subr.mxu0 0.0
  %3107 = vmatpush1.msra.mxu0 0.0
  %3108 = vmatprep.subr.mxu0 0.0
  %3109 = vmatpush1.msra.mxu0 0.0
  %3110 = vmatprep.subr.mxu0 0.0
  %3111 = vmatpush1.msra.mxu0 0.0
  %3112 = vmatprep.subr.mxu0 0.0
  %3113 = vmatpush1.msra.mxu0 0.0
  %3114 = vmatprep.subr.mxu0 0.0
  %3115 = vmatpush1.msra.mxu0 0.0
  %3116 = vmatprep.subr.mxu0 0.0
  %3117 = vmatpush1.msra.mxu0 0.0
  %3118 = vmatprep.mubr.f32.mxu0 0.0
  %3119 = vmatmul.mubr.f32.gmra.mrb[0].mxu0 %v2980
  %v3120 = vpop.f32.mrb[0].mxu0
  %v3121 = vadd.f32 0.0, %v3120
  %v3122 = vpop.f32.mrb[0].mxu0
  %3123 = vmatprep.mubr.f32.mxu0 0.0
  %3124 = vmatmul.mubr.f32.gmra.mrb[0].mxu0 %v2983
  %v3125 = vpop.f32.mrb[0].mxu0
  %v3126 = vadd.f32 0.0, %v3125
  %v3127 = vpop.f32.mrb[0].mxu0
  %3128 = vmatprep.mubr.f32.mxu0 0.0
  %3129 = vmatmul.mubr.f32.gmra.mrb[0].mxu0 %v2986
  %v3130 = vpop.f32.mrb[0].mxu0
  %v3131 = vadd.f32 0.0, %v3130
  %v3132 = vpop.f32.mrb[0].mxu0
  %3133 = vmatprep.mubr.f32.mxu0 0.0
  %3134 = vmatmul.mubr.f32.gmra.mrb[0].mxu0 %v2989
  %v3135 = vpop.f32.mrb[0].mxu0
  %v3136 = vadd.f32 0.0, %v3135
  %v3137 = vpop.f32.mrb[0].mxu0
  %3138 = vmatprep.mubr.f32.mxu0 0.0
  %3139 = vmatmul.mubr.f32.gmra.mrb[0].mxu0 %v2992
  %v3140 = vpop.f32.mrb[0].mxu0
  %v3141 = vadd.f32 0.0, %v3140
  %v3142 = vpop.f32.mrb[0].mxu0
  %3143 = vmatprep.mubr.f32.mxu0 0.0
  %3144 = vmatmul.mubr.f32.gmra.mrb[0].mxu0 %v2995
  %v3145 = vpop.f32.mrb[0].mxu0
  %v3146 = vadd.f32 0.0, %v3145
  %v3147 = vpop.f32.mrb[0].mxu0
  %3148 = vmatprep.mubr.f32.mxu0 0.0
  %3149 = vmatmul.mubr.f32.gmra.mrb[0].mxu0 %v2998
  %v3150 = vpop.f32.mrb[0].mxu0
  %v3151 = vadd.f32 0.0, %v3150
  %v3152 = vpop.f32.mrb[0].mxu0
  %3153 = vmatprep.mubr.f32.mxu0 0.0
  %3154 = vmatmul.mubr.f32.gmra.mrb[0].mxu0 %v3001
  %v3155 = vpop.f32.mrb[0].mxu0
  %v3156 = vadd.f32 0.0, %v3155
  %v3157 = vpop.f32.mrb[0].mxu0
  %3158 = vmatprep.mubr.f32.mxu0 0.0
  %3159 = vmatmul.mubr.f32.gmra.mrb[0].mxu0 %v3004
  %v3160 = vpop.f32.mrb[0].mxu0
  %v3161 = vadd.f32 0.0, %v3160
  %v3162 = vpop.f32.mrb[0].mxu0
  %3163 = vmatprep.mubr.f32.mxu0 0.0
  %3164 = vmatmul.mubr.f32.gmra.mrb[0].mxu0 %v3007
  %v3165 = vpop.f32.mrb[0].mxu0
  %v3166 = vadd.f32 0.0, %v3165
  %v3167 = vpop.f32.mrb[0].mxu0
  %3168 = vmatprep.mubr.f32.mxu0 0.0
  %3169 = vmatmul.mubr.f32.gmra.mrb[0].mxu0 %v3010
  %v3170 = vpop.f32.mrb[0].mxu0
  %v3171 = vadd.f32 0.0, %v3170
  %v3172 = vpop.f32.mrb[0].mxu0
  %3173 = vmatprep.mubr.f32.mxu0 0.0
  %3174 = vmatmul.mubr.f32.gmra.mrb[0].mxu0 %v3013
  %v3175 = vpop.f32.mrb[0].mxu0
  %v3176 = vadd.f32 0.0, %v3175
  %v3177 = vpop.f32.mrb[0].mxu0
  %3178 = vmatprep.mubr.f32.mxu0 0.0
  %3179 = vmatmul.mubr.f32.gmra.mrb[0].mxu0 %v3016
  %v3180 = vpop.f32.mrb[0].mxu0
  %v3181 = vadd.f32 0.0, %v3180
  %v3182 = vpop.f32.mrb[0].mxu0
  %3183 = vmatprep.mubr.f32.mxu0 0.0
  %3184 = vmatmul.mubr.f32.gmra.mrb[0].mxu0 %v3019
  %v3185 = vpop.f32.mrb[0].mxu0
  %v3186 = vadd.f32 0.0, %v3185
  %v3187 = vpop.f32.mrb[0].mxu0
  %3188 = vmatprep.mubr.f32.mxu0 0.0
  %3189 = vmatmul.mubr.f32.gmra.mrb[0].mxu0 %v3022
  %v3190 = vpop.f32.mrb[0].mxu0
  %v3191 = vadd.f32 0.0, %v3190
  %v3192 = vpop.f32.mrb[0].mxu0
  %3193 = vmatprep.mubr.f32.mxu0 0.0
  %3194 = vmatmul.mubr.f32.gmra.mrb[0].mxu0 %v3025
  %v3195 = vpop.f32.mrb[0].mxu0
  %v3196 = vadd.f32 0.0, %v3195
  %v3197 = vpop.f32.mrb[0].mxu0
  %3198 = vmatprep.mubr.f32.mxu0 0.0
  %3199 = vmatmul.mubr.f32.gmra.mrb[0].mxu0 %v3028
  %v3200 = vpop.f32.mrb[0].mxu0
  %v3201 = vadd.f32 0.0, %v3200
  %v3202 = vpop.f32.mrb[0].mxu0
  %3203 = vmatprep.mubr.f32.mxu0 0.0
  %3204 = vmatmul.mubr.f32.gmra.mrb[0].mxu0 %v3031
  %v3205 = vpop.f32.mrb[0].mxu0
  %v3206 = vadd.f32 0.0, %v3205
  %v3207 = vpop.f32.mrb[0].mxu0
  %3208 = vmatprep.mubr.f32.mxu0 0.0
  %3209 = vmatmul.mubr.f32.gmra.mrb[0].mxu0 %v3034
  %v3210 = vpop.f32.mrb[0].mxu0
  %v3211 = vadd.f32 0.0, %v3210
  %v3212 = vpop.f32.mrb[0].mxu0
  %3213 = vmatprep.mubr.f32.mxu0 0.0
  %3214 = vmatmul.mubr.f32.gmra.mrb[0].mxu0 %v3037
  %v3215 = vpop.f32.mrb[0].mxu0
  %v3216 = vadd.f32 0.0, %v3215
  %v3217 = vpop.f32.mrb[0].mxu0
  %3218 = vmatprep.mubr.f32.mxu0 0.0
  %3219 = vmatmul.mubr.f32.gmra.mrb[0].mxu0 %v3040
  %v3220 = vpop.f32.mrb[0].mxu0
  %v3221 = vadd.f32 0.0, %v3220
  %v3222 = vpop.f32.mrb[0].mxu0
  %3223 = vmatprep.mubr.f32.mxu0 0.0
  %3224 = vmatmul.mubr.f32.gmra.mrb[0].mxu0 %v3043
  %v3225 = vpop.f32.mrb[0].mxu0
  %v3226 = vadd.f32 0.0, %v3225
  %v3227 = vpop.f32.mrb[0].mxu0
  %3228 = vmatprep.mubr.f32.mxu0 0.0
  %3229 = vmatmul.mubr.f32.gmra.mrb[0].mxu0 %v3046
  %v3230 = vpop.f32.mrb[0].mxu0
  %v3231 = vadd.f32 0.0, %v3230
  %v3232 = vpop.f32.mrb[0].mxu0
  %3233 = vmatprep.mubr.f32.mxu0 0.0
  %3234 = vmatmul.mubr.f32.gmra.mrb[0].mxu0 %v3049
  %v3235 = vpop.f32.mrb[0].mxu0
  %v3236 = vadd.f32 0.0, %v3235
  %v3237 = vpop.f32.mrb[0].mxu0
  %3238 = vmatprep.mubr.f32.mxu0 0.0
  %3239 = vmatmul.mubr.f32.gmra.mrb[0].mxu0 %v3052
  %v3240 = vpop.f32.mrb[0].mxu0
  %v3241 = vadd.f32 0.0, %v3240
  %v3242 = vpop.f32.mrb[0].mxu0
  %3243 = vdwg.mxu0
  %v3244 = vadd.f32 %v2927, %v3121
  %v3245 = vadd.f32 %v2928, %v3126
  %v3246 = vadd.f32 %v2929, %v3131
  %v3247 = vadd.f32 %v2930, %v3136
  %v3248 = vadd.f32 %v2931, %v3141
  %v3249 = vadd.f32 %v2932, %v3146
  %v3250 = vadd.f32 %v2933, %v3151
  %v3251 = vadd.f32 %v2934, %v3156
  %v3252 = vadd.f32 %v2935, %v3161
  %v3253 = vadd.f32 %v2936, %v3166
  %v3254 = vadd.f32 %v2937, %v3171
  %v3255 = vadd.f32 %v2938, %v3176
  %v3256 = vadd.f32 %v2939, %v3181
  %v3257 = vadd.f32 %v2940, %v3186
  %v3258 = vadd.f32 %v2941, %v3191
  %v3259 = vadd.f32 %v2942, %v3196
  %v3260 = vadd.f32 %v2943, %v3201
  %v3261 = vadd.f32 %v2944, %v3206
  %v3262 = vadd.f32 %v2945, %v3211
  %v3263 = vadd.f32 %v2946, %v3216
  %v3264 = vadd.f32 %v2947, %v3221
  %v3265 = vadd.f32 %v2948, %v3226
  %v3266 = vadd.f32 %v2949, %v3231
  %v3267 = vadd.f32 %v2950, %v3236
  %v3268 = vadd.f32 %v2951, %v3241
  %v3269 = vld [vmem:[#allocation3 + $0xb] sm:$0xff]
  %v3270 = vld [vmem:[#allocation3 + $0x13] sm:$0xff]
  %v3271 = vld [vmem:[#allocation3 + $0x1b] sm:$0xff]
  %v3272 = vld [vmem:[#allocation3 + $0x23] sm:$0xff]
  %v3273 = vld [vmem:[#allocation3 + $0x2b] sm:$0xff]
  %v3274 = vld [vmem:[#allocation3 + $0x33] sm:$0xff]
  %v3275 = vld [vmem:[#allocation3 + $0x3b] sm:$0xff]
  %v3276 = vld [vmem:[#allocation3 + $0x43] sm:$0xff]
  %v3277 = vld [vmem:[#allocation3 + $0x4b] sm:$0xff]
  %v3278 = vld [vmem:[#allocation3 + $0x53] sm:$0xff]
  %v3279 = vld [vmem:[#allocation3 + $0x5b] sm:$0xff]
  %v3280 = vld [vmem:[#allocation3 + $0x63] sm:$0xff]
  %v3281 = vld [vmem:[#allocation3 + $0x6b] sm:$0xff]
  %v3282 = vld [vmem:[#allocation3 + $0x73] sm:$0xff]
  %v3283 = vld [vmem:[#allocation3 + $0x7b] sm:$0xff]
  %v3284 = vld [vmem:[#allocation3 + $0x83] sm:$0xff]
  %v3285 = vld [vmem:[#allocation3 + $0x8b] sm:$0xff]
  %v3286 = vld [vmem:[#allocation3 + $0x93] sm:$0xff]
  %v3287 = vld [vmem:[#allocation3 + $0x9b] sm:$0xff]
  %v3288 = vld [vmem:[#allocation3 + $0xa3] sm:$0xff]
  %v3289 = vld [vmem:[#allocation3 + $0xab] sm:$0xff]
  %v3290 = vld [vmem:[#allocation3 + $0xb3] sm:$0xff]
  %v3291 = vld [vmem:[#allocation3 + $0xbb] sm:$0xff]
  %v3292 = vld [vmem:[#allocation3 + $0xc3] sm:$0xff]
  %v3293 = vld [vmem:[#allocation3 + $0xcb] sm:$0xff]
  %s3294 = scalar_lea.vmem %s3, 32
  %v3295 = vld [vmem:[%s3294] sm:$0xff]
  %v3297 = vsel %vm2026, %v3269, 0
  %v3300 = vsel %vm2026, %v3270, 0
  %v3303 = vsel %vm2026, %v3271, 0
  %v3306 = vsel %vm2026, %v3272, 0
  %v3309 = vsel %vm2026, %v3273, 0
  %v3312 = vsel %vm2026, %v3274, 0
  %v3315 = vsel %vm2026, %v3275, 0
  %v3318 = vsel %vm2026, %v3276, 0
  %v3321 = vsel %vm2026, %v3277, 0
  %v3324 = vsel %vm2026, %v3278, 0
  %v3327 = vsel %vm2026, %v3279, 0
  %v3330 = vsel %vm2026, %v3280, 0
  %v3333 = vsel %vm2026, %v3281, 0
  %v3336 = vsel %vm2026, %v3282, 0
  %v3339 = vsel %vm2026, %v3283, 0
  %v3342 = vsel %vm2026, %v3284, 0
  %v3345 = vsel %vm2026, %v3285, 0
  %v3348 = vsel %vm2026, %v3286, 0
  %v3351 = vsel %vm2026, %v3287, 0
  %v3354 = vsel %vm2026, %v3288, 0
  %v3357 = vsel %vm2026, %v3289, 0
  %v3360 = vsel %vm2026, %v3290, 0
  %v3363 = vsel %vm2026, %v3291, 0
  %v3366 = vsel %vm2026, %v3292, 0
  %v3369 = vsel %vm2026, %v3293, 0
  %3371 = vmatprep.subr.mxu0 0.0
  %3372 = vmatpush1.msra.mxu0 %v3295
  %3373 = vmatprep.subr.mxu0 0.0
  %3374 = vmatpush1.msra.mxu0 0.0
  %3375 = vmatprep.subr.mxu0 0.0
  %3376 = vmatpush1.msra.mxu0 0.0
  %3377 = vmatprep.subr.mxu0 0.0
  %3378 = vmatpush1.msra.mxu0 0.0
  %3379 = vmatprep.subr.mxu0 0.0
  %3380 = vmatpush1.msra.mxu0 0.0
  %3381 = vmatprep.subr.mxu0 0.0
  %3382 = vmatpush1.msra.mxu0 0.0
  %3383 = vmatprep.subr.mxu0 0.0
  %3384 = vmatpush1.msra.mxu0 0.0
  %3385 = vmatprep.subr.mxu0 0.0
  %3386 = vmatpush1.msra.mxu0 0.0
  %3387 = vmatprep.subr.mxu0 0.0
  %3388 = vmatpush1.msra.mxu0 0.0
  %3389 = vmatprep.subr.mxu0 0.0
  %3390 = vmatpush1.msra.mxu0 0.0
  %3391 = vmatprep.subr.mxu0 0.0
  %3392 = vmatpush1.msra.mxu0 0.0
  %3393 = vmatprep.subr.mxu0 0.0
  %3394 = vmatpush1.msra.mxu0 0.0
  %3395 = vmatprep.subr.mxu0 0.0
  %3396 = vmatpush1.msra.mxu0 0.0
  %3397 = vmatprep.subr.mxu0 0.0
  %3398 = vmatpush1.msra.mxu0 0.0
  %3399 = vmatprep.subr.mxu0 0.0
  %3400 = vmatpush1.msra.mxu0 0.0
  %3401 = vmatprep.subr.mxu0 0.0
  %3402 = vmatpush1.msra.mxu0 0.0
  %3403 = vmatprep.subr.mxu0 0.0
  %3404 = vmatpush1.msra.mxu0 0.0
  %3405 = vmatprep.subr.mxu0 0.0
  %3406 = vmatpush1.msra.mxu0 0.0
  %3407 = vmatprep.subr.mxu0 0.0
  %3408 = vmatpush1.msra.mxu0 0.0
  %3409 = vmatprep.subr.mxu0 0.0
  %3410 = vmatpush1.msra.mxu0 0.0
  %3411 = vmatprep.subr.mxu0 0.0
  %3412 = vmatpush1.msra.mxu0 0.0
  %3413 = vmatprep.subr.mxu0 0.0
  %3414 = vmatpush1.msra.mxu0 0.0
  %3415 = vmatprep.subr.mxu0 0.0
  %3416 = vmatpush1.msra.mxu0 0.0
  %3417 = vmatprep.subr.mxu0 0.0
  %3418 = vmatpush1.msra.mxu0 0.0
  %3419 = vmatprep.subr.mxu0 0.0
  %3420 = vmatpush1.msra.mxu0 0.0
  %3421 = vmatprep.subr.mxu0 0.0
  %3422 = vmatpush1.msra.mxu0 0.0
  %3423 = vmatprep.subr.mxu0 0.0
  %3424 = vmatpush1.msra.mxu0 0.0
  %3425 = vmatprep.subr.mxu0 0.0
  %3426 = vmatpush1.msra.mxu0 0.0
  %3427 = vmatprep.subr.mxu0 0.0
  %3428 = vmatpush1.msra.mxu0 0.0
  %3429 = vmatprep.subr.mxu0 0.0
  %3430 = vmatpush1.msra.mxu0 0.0
  %3431 = vmatprep.subr.mxu0 0.0
  %3432 = vmatpush1.msra.mxu0 0.0
  %3433 = vmatprep.subr.mxu0 0.0
  %3434 = vmatpush1.msra.mxu0 0.0
  %3435 = vmatprep.mubr.f32.mxu0 0.0
  %3436 = vmatmul.mubr.f32.gmra.mrb[0].mxu0 %v3297
  %v3437 = vpop.f32.mrb[0].mxu0
  %v3438 = vadd.f32 0.0, %v3437
  %v3439 = vpop.f32.mrb[0].mxu0
  %3440 = vmatprep.mubr.f32.mxu0 0.0
  %3441 = vmatmul.mubr.f32.gmra.mrb[0].mxu0 %v3300
  %v3442 = vpop.f32.mrb[0].mxu0
  %v3443 = vadd.f32 0.0, %v3442
  %v3444 = vpop.f32.mrb[0].mxu0
  %3445 = vmatprep.mubr.f32.mxu0 0.0
  %3446 = vmatmul.mubr.f32.gmra.mrb[0].mxu0 %v3303
  %v3447 = vpop.f32.mrb[0].mxu0
  %v3448 = vadd.f32 0.0, %v3447
  %v3449 = vpop.f32.mrb[0].mxu0
  %3450 = vmatprep.mubr.f32.mxu0 0.0
  %3451 = vmatmul.mubr.f32.gmra.mrb[0].mxu0 %v3306
  %v3452 = vpop.f32.mrb[0].mxu0
  %v3453 = vadd.f32 0.0, %v3452
  %v3454 = vpop.f32.mrb[0].mxu0
  %3455 = vmatprep.mubr.f32.mxu0 0.0
  %3456 = vmatmul.mubr.f32.gmra.mrb[0].mxu0 %v3309
  %v3457 = vpop.f32.mrb[0].mxu0
  %v3458 = vadd.f32 0.0, %v3457
  %v3459 = vpop.f32.mrb[0].mxu0
  %3460 = vmatprep.mubr.f32.mxu0 0.0
  %3461 = vmatmul.mubr.f32.gmra.mrb[0].mxu0 %v3312
  %v3462 = vpop.f32.mrb[0].mxu0
  %v3463 = vadd.f32 0.0, %v3462
  %v3464 = vpop.f32.mrb[0].mxu0
  %3465 = vmatprep.mubr.f32.mxu0 0.0
  %3466 = vmatmul.mubr.f32.gmra.mrb[0].mxu0 %v3315
  %v3467 = vpop.f32.mrb[0].mxu0
  %v3468 = vadd.f32 0.0, %v3467
  %v3469 = vpop.f32.mrb[0].mxu0
  %3470 = vmatprep.mubr.f32.mxu0 0.0
  %3471 = vmatmul.mubr.f32.gmra.mrb[0].mxu0 %v3318
  %v3472 = vpop.f32.mrb[0].mxu0
  %v3473 = vadd.f32 0.0, %v3472
  %v3474 = vpop.f32.mrb[0].mxu0
  %3475 = vmatprep.mubr.f32.mxu0 0.0
  %3476 = vmatmul.mubr.f32.gmra.mrb[0].mxu0 %v3321
  %v3477 = vpop.f32.mrb[0].mxu0
  %v3478 = vadd.f32 0.0, %v3477
  %v3479 = vpop.f32.mrb[0].mxu0
  %3480 = vmatprep.mubr.f32.mxu0 0.0
  %3481 = vmatmul.mubr.f32.gmra.mrb[0].mxu0 %v3324
  %v3482 = vpop.f32.mrb[0].mxu0
  %v3483 = vadd.f32 0.0, %v3482
  %v3484 = vpop.f32.mrb[0].mxu0
  %3485 = vmatprep.mubr.f32.mxu0 0.0
  %3486 = vmatmul.mubr.f32.gmra.mrb[0].mxu0 %v3327
  %v3487 = vpop.f32.mrb[0].mxu0
  %v3488 = vadd.f32 0.0, %v3487
  %v3489 = vpop.f32.mrb[0].mxu0
  %3490 = vmatprep.mubr.f32.mxu0 0.0
  %3491 = vmatmul.mubr.f32.gmra.mrb[0].mxu0 %v3330
  %v3492 = vpop.f32.mrb[0].mxu0
  %v3493 = vadd.f32 0.0, %v3492
  %v3494 = vpop.f32.mrb[0].mxu0
  %3495 = vmatprep.mubr.f32.mxu0 0.0
  %3496 = vmatmul.mubr.f32.gmra.mrb[0].mxu0 %v3333
  %v3497 = vpop.f32.mrb[0].mxu0
  %v3498 = vadd.f32 0.0, %v3497
  %v3499 = vpop.f32.mrb[0].mxu0
  %3500 = vmatprep.mubr.f32.mxu0 0.0
  %3501 = vmatmul.mubr.f32.gmra.mrb[0].mxu0 %v3336
  %v3502 = vpop.f32.mrb[0].mxu0
  %v3503 = vadd.f32 0.0, %v3502
  %v3504 = vpop.f32.mrb[0].mxu0
  %3505 = vmatprep.mubr.f32.mxu0 0.0
  %3506 = vmatmul.mubr.f32.gmra.mrb[0].mxu0 %v3339
  %v3507 = vpop.f32.mrb[0].mxu0
  %v3508 = vadd.f32 0.0, %v3507
  %v3509 = vpop.f32.mrb[0].mxu0
  %3510 = vmatprep.mubr.f32.mxu0 0.0
  %3511 = vmatmul.mubr.f32.gmra.mrb[0].mxu0 %v3342
  %v3512 = vpop.f32.mrb[0].mxu0
  %v3513 = vadd.f32 0.0, %v3512
  %v3514 = vpop.f32.mrb[0].mxu0
  %3515 = vmatprep.mubr.f32.mxu0 0.0
  %3516 = vmatmul.mubr.f32.gmra.mrb[0].mxu0 %v3345
  %v3517 = vpop.f32.mrb[0].mxu0
  %v3518 = vadd.f32 0.0, %v3517
  %v3519 = vpop.f32.mrb[0].mxu0
  %3520 = vmatprep.mubr.f32.mxu0 0.0
  %3521 = vmatmul.mubr.f32.gmra.mrb[0].mxu0 %v3348
  %v3522 = vpop.f32.mrb[0].mxu0
  %v3523 = vadd.f32 0.0, %v3522
  %v3524 = vpop.f32.mrb[0].mxu0
  %3525 = vmatprep.mubr.f32.mxu0 0.0
  %3526 = vmatmul.mubr.f32.gmra.mrb[0].mxu0 %v3351
  %v3527 = vpop.f32.mrb[0].mxu0
  %v3528 = vadd.f32 0.0, %v3527
  %v3529 = vpop.f32.mrb[0].mxu0
  %3530 = vmatprep.mubr.f32.mxu0 0.0
  %3531 = vmatmul.mubr.f32.gmra.mrb[0].mxu0 %v3354
  %v3532 = vpop.f32.mrb[0].mxu0
  %v3533 = vadd.f32 0.0, %v3532
  %v3534 = vpop.f32.mrb[0].mxu0
  %3535 = vmatprep.mubr.f32.mxu0 0.0
  %3536 = vmatmul.mubr.f32.gmra.mrb[0].mxu0 %v3357
  %v3537 = vpop.f32.mrb[0].mxu0
  %v3538 = vadd.f32 0.0, %v3537
  %v3539 = vpop.f32.mrb[0].mxu0
  %3540 = vmatprep.mubr.f32.mxu0 0.0
  %3541 = vmatmul.mubr.f32.gmra.mrb[0].mxu0 %v3360
  %v3542 = vpop.f32.mrb[0].mxu0
  %v3543 = vadd.f32 0.0, %v3542
  %v3544 = vpop.f32.mrb[0].mxu0
  %3545 = vmatprep.mubr.f32.mxu0 0.0
  %3546 = vmatmul.mubr.f32.gmra.mrb[0].mxu0 %v3363
  %v3547 = vpop.f32.mrb[0].mxu0
  %v3548 = vadd.f32 0.0, %v3547
  %v3549 = vpop.f32.mrb[0].mxu0
  %3550 = vmatprep.mubr.f32.mxu0 0.0
  %3551 = vmatmul.mubr.f32.gmra.mrb[0].mxu0 %v3366
  %v3552 = vpop.f32.mrb[0].mxu0
  %v3553 = vadd.f32 0.0, %v3552
  %v3554 = vpop.f32.mrb[0].mxu0
  %3555 = vmatprep.mubr.f32.mxu0 0.0
  %3556 = vmatmul.mubr.f32.gmra.mrb[0].mxu0 %v3369
  %v3557 = vpop.f32.mrb[0].mxu0
  %v3558 = vadd.f32 0.0, %v3557
  %v3559 = vpop.f32.mrb[0].mxu0
  %3560 = vdwg.mxu0
  %v3561 = vadd.f32 %v3244, %v3438
  %v3562 = vadd.f32 %v3245, %v3443
  %v3563 = vadd.f32 %v3246, %v3448
  %v3564 = vadd.f32 %v3247, %v3453
  %v3565 = vadd.f32 %v3248, %v3458
  %v3566 = vadd.f32 %v3249, %v3463
  %v3567 = vadd.f32 %v3250, %v3468
  %v3568 = vadd.f32 %v3251, %v3473
  %v3569 = vadd.f32 %v3252, %v3478
  %v3570 = vadd.f32 %v3253, %v3483
  %v3571 = vadd.f32 %v3254, %v3488
  %v3572 = vadd.f32 %v3255, %v3493
  %v3573 = vadd.f32 %v3256, %v3498
  %v3574 = vadd.f32 %v3257, %v3503
  %v3575 = vadd.f32 %v3258, %v3508
  %v3576 = vadd.f32 %v3259, %v3513
  %v3577 = vadd.f32 %v3260, %v3518
  %v3578 = vadd.f32 %v3261, %v3523
  %v3579 = vadd.f32 %v3262, %v3528
  %v3580 = vadd.f32 %v3263, %v3533
  %v3581 = vadd.f32 %v3264, %v3538
  %v3582 = vadd.f32 %v3265, %v3543
  %v3583 = vadd.f32 %v3266, %v3548
  %v3584 = vadd.f32 %v3267, %v3553
  %v3585 = vadd.f32 %v3268, %v3558
  %v3586 = vld [vmem:[#allocation3 + $0xc] sm:$0xff]
  %v3587 = vld [vmem:[#allocation3 + $0x14] sm:$0xff]
  %v3588 = vld [vmem:[#allocation3 + $0x1c] sm:$0xff]
  %v3589 = vld [vmem:[#allocation3 + $0x24] sm:$0xff]
  %v3590 = vld [vmem:[#allocation3 + $0x2c] sm:$0xff]
  %v3591 = vld [vmem:[#allocation3 + $0x34] sm:$0xff]
  %v3592 = vld [vmem:[#allocation3 + $0x3c] sm:$0xff]
  %v3593 = vld [vmem:[#allocation3 + $0x44] sm:$0xff]
  %v3594 = vld [vmem:[#allocation3 + $0x4c] sm:$0xff]
  %v3595 = vld [vmem:[#allocation3 + $0x54] sm:$0xff]
  %v3596 = vld [vmem:[#allocation3 + $0x5c] sm:$0xff]
  %v3597 = vld [vmem:[#allocation3 + $0x64] sm:$0xff]
  %v3598 = vld [vmem:[#allocation3 + $0x6c] sm:$0xff]
  %v3599 = vld [vmem:[#allocation3 + $0x74] sm:$0xff]
  %v3600 = vld [vmem:[#allocation3 + $0x7c] sm:$0xff]
  %v3601 = vld [vmem:[#allocation3 + $0x84] sm:$0xff]
  %v3602 = vld [vmem:[#allocation3 + $0x8c] sm:$0xff]
  %v3603 = vld [vmem:[#allocation3 + $0x94] sm:$0xff]
  %v3604 = vld [vmem:[#allocation3 + $0x9c] sm:$0xff]
  %v3605 = vld [vmem:[#allocation3 + $0xa4] sm:$0xff]
  %v3606 = vld [vmem:[#allocation3 + $0xac] sm:$0xff]
  %v3607 = vld [vmem:[#allocation3 + $0xb4] sm:$0xff]
  %v3608 = vld [vmem:[#allocation3 + $0xbc] sm:$0xff]
  %v3609 = vld [vmem:[#allocation3 + $0xc4] sm:$0xff]
  %v3610 = vld [vmem:[#allocation3 + $0xcc] sm:$0xff]
  %s3611 = scalar_lea.vmem %s3, 40
  %v3612 = vld [vmem:[%s3611] sm:$0xff]
  %v3614 = vsel %vm2026, %v3586, 0
  %v3617 = vsel %vm2026, %v3587, 0
  %v3620 = vsel %vm2026, %v3588, 0
  %v3623 = vsel %vm2026, %v3589, 0
  %v3626 = vsel %vm2026, %v3590, 0
  %v3629 = vsel %vm2026, %v3591, 0
  %v3632 = vsel %vm2026, %v3592, 0
  %v3635 = vsel %vm2026, %v3593, 0
  %v3638 = vsel %vm2026, %v3594, 0
  %v3641 = vsel %vm2026, %v3595, 0
  %v3644 = vsel %vm2026, %v3596, 0
  %v3647 = vsel %vm2026, %v3597, 0
  %v3650 = vsel %vm2026, %v3598, 0
  %v3653 = vsel %vm2026, %v3599, 0
  %v3656 = vsel %vm2026, %v3600, 0
  %v3659 = vsel %vm2026, %v3601, 0
  %v3662 = vsel %vm2026, %v3602, 0
  %v3665 = vsel %vm2026, %v3603, 0
  %v3668 = vsel %vm2026, %v3604, 0
  %v3671 = vsel %vm2026, %v3605, 0
  %v3674 = vsel %vm2026, %v3606, 0
  %v3677 = vsel %vm2026, %v3607, 0
  %v3680 = vsel %vm2026, %v3608, 0
  %v3683 = vsel %vm2026, %v3609, 0
  %v3686 = vsel %vm2026, %v3610, 0
  %3688 = vmatprep.subr.mxu0 0.0
  %3689 = vmatpush1.msra.mxu0 %v3612
  %3690 = vmatprep.subr.mxu0 0.0
  %3691 = vmatpush1.msra.mxu0 0.0
  %3692 = vmatprep.subr.mxu0 0.0
  %3693 = vmatpush1.msra.mxu0 0.0
  %3694 = vmatprep.subr.mxu0 0.0
  %3695 = vmatpush1.msra.mxu0 0.0
  %3696 = vmatprep.subr.mxu0 0.0
  %3697 = vmatpush1.msra.mxu0 0.0
  %3698 = vmatprep.subr.mxu0 0.0
  %3699 = vmatpush1.msra.mxu0 0.0
  %3700 = vmatprep.subr.mxu0 0.0
  %3701 = vmatpush1.msra.mxu0 0.0
  %3702 = vmatprep.subr.mxu0 0.0
  %3703 = vmatpush1.msra.mxu0 0.0
  %3704 = vmatprep.subr.mxu0 0.0
  %3705 = vmatpush1.msra.mxu0 0.0
  %3706 = vmatprep.subr.mxu0 0.0
  %3707 = vmatpush1.msra.mxu0 0.0
  %3708 = vmatprep.subr.mxu0 0.0
  %3709 = vmatpush1.msra.mxu0 0.0
  %3710 = vmatprep.subr.mxu0 0.0
  %3711 = vmatpush1.msra.mxu0 0.0
  %3712 = vmatprep.subr.mxu0 0.0
  %3713 = vmatpush1.msra.mxu0 0.0
  %3714 = vmatprep.subr.mxu0 0.0
  %3715 = vmatpush1.msra.mxu0 0.0
  %3716 = vmatprep.subr.mxu0 0.0
  %3717 = vmatpush1.msra.mxu0 0.0
  %3718 = vmatprep.subr.mxu0 0.0
  %3719 = vmatpush1.msra.mxu0 0.0
  %3720 = vmatprep.subr.mxu0 0.0
  %3721 = vmatpush1.msra.mxu0 0.0
  %3722 = vmatprep.subr.mxu0 0.0
  %3723 = vmatpush1.msra.mxu0 0.0
  %3724 = vmatprep.subr.mxu0 0.0
  %3725 = vmatpush1.msra.mxu0 0.0
  %3726 = vmatprep.subr.mxu0 0.0
  %3727 = vmatpush1.msra.mxu0 0.0
  %3728 = vmatprep.subr.mxu0 0.0
  %3729 = vmatpush1.msra.mxu0 0.0
  %3730 = vmatprep.subr.mxu0 0.0
  %3731 = vmatpush1.msra.mxu0 0.0
  %3732 = vmatprep.subr.mxu0 0.0
  %3733 = vmatpush1.msra.mxu0 0.0
  %3734 = vmatprep.subr.mxu0 0.0
  %3735 = vmatpush1.msra.mxu0 0.0
  %3736 = vmatprep.subr.mxu0 0.0
  %3737 = vmatpush1.msra.mxu0 0.0
  %3738 = vmatprep.subr.mxu0 0.0
  %3739 = vmatpush1.msra.mxu0 0.0
  %3740 = vmatprep.subr.mxu0 0.0
  %3741 = vmatpush1.msra.mxu0 0.0
  %3742 = vmatprep.subr.mxu0 0.0
  %3743 = vmatpush1.msra.mxu0 0.0
  %3744 = vmatprep.subr.mxu0 0.0
  %3745 = vmatpush1.msra.mxu0 0.0
  %3746 = vmatprep.subr.mxu0 0.0
  %3747 = vmatpush1.msra.mxu0 0.0
  %3748 = vmatprep.subr.mxu0 0.0
  %3749 = vmatpush1.msra.mxu0 0.0
  %3750 = vmatprep.subr.mxu0 0.0
  %3751 = vmatpush1.msra.mxu0 0.0
  %3752 = vmatprep.mubr.f32.mxu0 0.0
  %3753 = vmatmul.mubr.f32.gmra.mrb[0].mxu0 %v3614
  %v3754 = vpop.f32.mrb[0].mxu0
  %v3755 = vadd.f32 0.0, %v3754
  %v3756 = vpop.f32.mrb[0].mxu0
  %3757 = vmatprep.mubr.f32.mxu0 0.0
  %3758 = vmatmul.mubr.f32.gmra.mrb[0].mxu0 %v3617
  %v3759 = vpop.f32.mrb[0].mxu0
  %v3760 = vadd.f32 0.0, %v3759
  %v3761 = vpop.f32.mrb[0].mxu0
  %3762 = vmatprep.mubr.f32.mxu0 0.0
  %3763 = vmatmul.mubr.f32.gmra.mrb[0].mxu0 %v3620
  %v3764 = vpop.f32.mrb[0].mxu0
  %v3765 = vadd.f32 0.0, %v3764
  %v3766 = vpop.f32.mrb[0].mxu0
  %3767 = vmatprep.mubr.f32.mxu0 0.0
  %3768 = vmatmul.mubr.f32.gmra.mrb[0].mxu0 %v3623
  %v3769 = vpop.f32.mrb[0].mxu0
  %v3770 = vadd.f32 0.0, %v3769
  %v3771 = vpop.f32.mrb[0].mxu0
  %3772 = vmatprep.mubr.f32.mxu0 0.0
  %3773 = vmatmul.mubr.f32.gmra.mrb[0].mxu0 %v3626
  %v3774 = vpop.f32.mrb[0].mxu0
  %v3775 = vadd.f32 0.0, %v3774
  %v3776 = vpop.f32.mrb[0].mxu0
  %3777 = vmatprep.mubr.f32.mxu0 0.0
  %3778 = vmatmul.mubr.f32.gmra.mrb[0].mxu0 %v3629
  %v3779 = vpop.f32.mrb[0].mxu0
  %v3780 = vadd.f32 0.0, %v3779
  %v3781 = vpop.f32.mrb[0].mxu0
  %3782 = vmatprep.mubr.f32.mxu0 0.0
  %3783 = vmatmul.mubr.f32.gmra.mrb[0].mxu0 %v3632
  %v3784 = vpop.f32.mrb[0].mxu0
  %v3785 = vadd.f32 0.0, %v3784
  %v3786 = vpop.f32.mrb[0].mxu0
  %3787 = vmatprep.mubr.f32.mxu0 0.0
  %3788 = vmatmul.mubr.f32.gmra.mrb[0].mxu0 %v3635
  %v3789 = vpop.f32.mrb[0].mxu0
  %v3790 = vadd.f32 0.0, %v3789
  %v3791 = vpop.f32.mrb[0].mxu0
  %3792 = vmatprep.mubr.f32.mxu0 0.0
  %3793 = vmatmul.mubr.f32.gmra.mrb[0].mxu0 %v3638
  %v3794 = vpop.f32.mrb[0].mxu0
  %v3795 = vadd.f32 0.0, %v3794
  %v3796 = vpop.f32.mrb[0].mxu0
  %3797 = vmatprep.mubr.f32.mxu0 0.0
  %3798 = vmatmul.mubr.f32.gmra.mrb[0].mxu0 %v3641
  %v3799 = vpop.f32.mrb[0].mxu0
  %v3800 = vadd.f32 0.0, %v3799
  %v3801 = vpop.f32.mrb[0].mxu0
  %3802 = vmatprep.mubr.f32.mxu0 0.0
  %3803 = vmatmul.mubr.f32.gmra.mrb[0].mxu0 %v3644
  %v3804 = vpop.f32.mrb[0].mxu0
  %v3805 = vadd.f32 0.0, %v3804
  %v3806 = vpop.f32.mrb[0].mxu0
  %3807 = vmatprep.mubr.f32.mxu0 0.0
  %3808 = vmatmul.mubr.f32.gmra.mrb[0].mxu0 %v3647
  %v3809 = vpop.f32.mrb[0].mxu0
  %v3810 = vadd.f32 0.0, %v3809
  %v3811 = vpop.f32.mrb[0].mxu0
  %3812 = vmatprep.mubr.f32.mxu0 0.0
  %3813 = vmatmul.mubr.f32.gmra.mrb[0].mxu0 %v3650
  %v3814 = vpop.f32.mrb[0].mxu0
  %v3815 = vadd.f32 0.0, %v3814
  %v3816 = vpop.f32.mrb[0].mxu0
  %3817 = vmatprep.mubr.f32.mxu0 0.0
  %3818 = vmatmul.mubr.f32.gmra.mrb[0].mxu0 %v3653
  %v3819 = vpop.f32.mrb[0].mxu0
  %v3820 = vadd.f32 0.0, %v3819
  %v3821 = vpop.f32.mrb[0].mxu0
  %3822 = vmatprep.mubr.f32.mxu0 0.0
  %3823 = vmatmul.mubr.f32.gmra.mrb[0].mxu0 %v3656
  %v3824 = vpop.f32.mrb[0].mxu0
  %v3825 = vadd.f32 0.0, %v3824
  %v3826 = vpop.f32.mrb[0].mxu0
  %3827 = vmatprep.mubr.f32.mxu0 0.0
  %3828 = vmatmul.mubr.f32.gmra.mrb[0].mxu0 %v3659
  %v3829 = vpop.f32.mrb[0].mxu0
  %v3830 = vadd.f32 0.0, %v3829
  %v3831 = vpop.f32.mrb[0].mxu0
  %3832 = vmatprep.mubr.f32.mxu0 0.0
  %3833 = vmatmul.mubr.f32.gmra.mrb[0].mxu0 %v3662
  %v3834 = vpop.f32.mrb[0].mxu0
  %v3835 = vadd.f32 0.0, %v3834
  %v3836 = vpop.f32.mrb[0].mxu0
  %3837 = vmatprep.mubr.f32.mxu0 0.0
  %3838 = vmatmul.mubr.f32.gmra.mrb[0].mxu0 %v3665
  %v3839 = vpop.f32.mrb[0].mxu0
  %v3840 = vadd.f32 0.0, %v3839
  %v3841 = vpop.f32.mrb[0].mxu0
  %3842 = vmatprep.mubr.f32.mxu0 0.0
  %3843 = vmatmul.mubr.f32.gmra.mrb[0].mxu0 %v3668
  %v3844 = vpop.f32.mrb[0].mxu0
  %v3845 = vadd.f32 0.0, %v3844
  %v3846 = vpop.f32.mrb[0].mxu0
  %3847 = vmatprep.mubr.f32.mxu0 0.0
  %3848 = vmatmul.mubr.f32.gmra.mrb[0].mxu0 %v3671
  %v3849 = vpop.f32.mrb[0].mxu0
  %v3850 = vadd.f32 0.0, %v3849
  %v3851 = vpop.f32.mrb[0].mxu0
  %3852 = vmatprep.mubr.f32.mxu0 0.0
  %3853 = vmatmul.mubr.f32.gmra.mrb[0].mxu0 %v3674
  %v3854 = vpop.f32.mrb[0].mxu0
  %v3855 = vadd.f32 0.0, %v3854
  %v3856 = vpop.f32.mrb[0].mxu0
  %3857 = vmatprep.mubr.f32.mxu0 0.0
  %3858 = vmatmul.mubr.f32.gmra.mrb[0].mxu0 %v3677
  %v3859 = vpop.f32.mrb[0].mxu0
  %v3860 = vadd.f32 0.0, %v3859
  %v3861 = vpop.f32.mrb[0].mxu0
  %3862 = vmatprep.mubr.f32.mxu0 0.0
  %3863 = vmatmul.mubr.f32.gmra.mrb[0].mxu0 %v3680
  %v3864 = vpop.f32.mrb[0].mxu0
  %v3865 = vadd.f32 0.0, %v3864
  %v3866 = vpop.f32.mrb[0].mxu0
  %3867 = vmatprep.mubr.f32.mxu0 0.0
  %3868 = vmatmul.mubr.f32.gmra.mrb[0].mxu0 %v3683
  %v3869 = vpop.f32.mrb[0].mxu0
  %v3870 = vadd.f32 0.0, %v3869
  %v3871 = vpop.f32.mrb[0].mxu0
  %3872 = vmatprep.mubr.f32.mxu0 0.0
  %3873 = vmatmul.mubr.f32.gmra.mrb[0].mxu0 %v3686
  %v3874 = vpop.f32.mrb[0].mxu0
  %v3875 = vadd.f32 0.0, %v3874
  %v3876 = vpop.f32.mrb[0].mxu0
  %3877 = vdwg.mxu0
  %v3878 = vadd.f32 %v3561, %v3755
  %v3879 = vadd.f32 %v3562, %v3760
  %v3880 = vadd.f32 %v3563, %v3765
  %v3881 = vadd.f32 %v3564, %v3770
  %v3882 = vadd.f32 %v3565, %v3775
  %v3883 = vadd.f32 %v3566, %v3780
  %v3884 = vadd.f32 %v3567, %v3785
  %v3885 = vadd.f32 %v3568, %v3790
  %v3886 = vadd.f32 %v3569, %v3795
  %v3887 = vadd.f32 %v3570, %v3800
  %v3888 = vadd.f32 %v3571, %v3805
  %v3889 = vadd.f32 %v3572, %v3810
  %v3890 = vadd.f32 %v3573, %v3815
  %v3891 = vadd.f32 %v3574, %v3820
  %v3892 = vadd.f32 %v3575, %v3825
  %v3893 = vadd.f32 %v3576, %v3830
  %v3894 = vadd.f32 %v3577, %v3835
  %v3895 = vadd.f32 %v3578, %v3840
  %v3896 = vadd.f32 %v3579, %v3845
  %v3897 = vadd.f32 %v3580, %v3850
  %v3898 = vadd.f32 %v3581, %v3855
  %v3899 = vadd.f32 %v3582, %v3860
  %v3900 = vadd.f32 %v3583, %v3865
  %v3901 = vadd.f32 %v3584, %v3870
  %v3902 = vadd.f32 %v3585, %v3875
  %v3903 = vld [vmem:[#allocation3 + $0x14] sm:$0xff]
  %v3904 = vld [vmem:[#allocation3 + $0x1c] sm:$0xff]
  %v3905 = vld [vmem:[#allocation3 + $0x24] sm:$0xff]
  %v3906 = vld [vmem:[#allocation3 + $0x2c] sm:$0xff]
  %v3907 = vld [vmem:[#allocation3 + $0x34] sm:$0xff]
  %v3908 = vld [vmem:[#allocation3 + $0x3c] sm:$0xff]
  %v3909 = vld [vmem:[#allocation3 + $0x44] sm:$0xff]
  %v3910 = vld [vmem:[#allocation3 + $0x4c] sm:$0xff]
  %v3911 = vld [vmem:[#allocation3 + $0x54] sm:$0xff]
  %v3912 = vld [vmem:[#allocation3 + $0x5c] sm:$0xff]
  %v3913 = vld [vmem:[#allocation3 + $0x64] sm:$0xff]
  %v3914 = vld [vmem:[#allocation3 + $0x6c] sm:$0xff]
  %v3915 = vld [vmem:[#allocation3 + $0x74] sm:$0xff]
  %v3916 = vld [vmem:[#allocation3 + $0x7c] sm:$0xff]
  %v3917 = vld [vmem:[#allocation3 + $0x84] sm:$0xff]
  %v3918 = vld [vmem:[#allocation3 + $0x8c] sm:$0xff]
  %v3919 = vld [vmem:[#allocation3 + $0x94] sm:$0xff]
  %v3920 = vld [vmem:[#allocation3 + $0x9c] sm:$0xff]
  %v3921 = vld [vmem:[#allocation3 + $0xa4] sm:$0xff]
  %v3922 = vld [vmem:[#allocation3 + $0xac] sm:$0xff]
  %v3923 = vld [vmem:[#allocation3 + $0xb4] sm:$0xff]
  %v3924 = vld [vmem:[#allocation3 + $0xbc] sm:$0xff]
  %v3925 = vld [vmem:[#allocation3 + $0xc4] sm:$0xff]
  %v3926 = vld [vmem:[#allocation3 + $0xcc] sm:$0xff]
  %v3927 = vld [vmem:[#allocation3 + $0xd4] sm:$0xff]
  %s3928 = scalar_lea.vmem %s3, 48
  %v3929 = vld [vmem:[%s3928] sm:$0xff]
  %v3931 = vsel %vm2026, %v3903, 0
  %v3934 = vsel %vm2026, %v3904, 0
  %v3937 = vsel %vm2026, %v3905, 0
  %v3940 = vsel %vm2026, %v3906, 0
  %v3943 = vsel %vm2026, %v3907, 0
  %v3946 = vsel %vm2026, %v3908, 0
  %v3949 = vsel %vm2026, %v3909, 0
  %v3952 = vsel %vm2026, %v3910, 0
  %v3955 = vsel %vm2026, %v3911, 0
  %v3958 = vsel %vm2026, %v3912, 0
  %v3961 = vsel %vm2026, %v3913, 0
  %v3964 = vsel %vm2026, %v3914, 0
  %v3967 = vsel %vm2026, %v3915, 0
  %v3970 = vsel %vm2026, %v3916, 0
  %v3973 = vsel %vm2026, %v3917, 0
  %v3976 = vsel %vm2026, %v3918, 0
  %v3979 = vsel %vm2026, %v3919, 0
  %v3982 = vsel %vm2026, %v3920, 0
  %v3985 = vsel %vm2026, %v3921, 0
  %v3988 = vsel %vm2026, %v3922, 0
  %v3991 = vsel %vm2026, %v3923, 0
  %v3994 = vsel %vm2026, %v3924, 0
  %v3997 = vsel %vm2026, %v3925, 0
  %v4000 = vsel %vm2026, %v3926, 0
  %v4003 = vsel %vm2026, %v3927, 0
  %4005 = vmatprep.subr.mxu0 0.0
  %4006 = vmatpush1.msra.mxu0 %v3929
  %4007 = vmatprep.subr.mxu0 0.0
  %4008 = vmatpush1.msra.mxu0 0.0
  %4009 = vmatprep.subr.mxu0 0.0
  %4010 = vmatpush1.msra.mxu0 0.0
  %4011 = vmatprep.subr.mxu0 0.0
  %4012 = vmatpush1.msra.mxu0 0.0
  %4013 = vmatprep.subr.mxu0 0.0
  %4014 = vmatpush1.msra.mxu0 0.0
  %4015 = vmatprep.subr.mxu0 0.0
  %4016 = vmatpush1.msra.mxu0 0.0
  %4017 = vmatprep.subr.mxu0 0.0
  %4018 = vmatpush1.msra.mxu0 0.0
  %4019 = vmatprep.subr.mxu0 0.0
  %4020 = vmatpush1.msra.mxu0 0.0
  %4021 = vmatprep.subr.mxu0 0.0
  %4022 = vmatpush1.msra.mxu0 0.0
  %4023 = vmatprep.subr.mxu0 0.0
  %4024 = vmatpush1.msra.mxu0 0.0
  %4025 = vmatprep.subr.mxu0 0.0
  %4026 = vmatpush1.msra.mxu0 0.0
  %4027 = vmatprep.subr.mxu0 0.0
  %4028 = vmatpush1.msra.mxu0 0.0
  %4029 = vmatprep.subr.mxu0 0.0
  %4030 = vmatpush1.msra.mxu0 0.0
  %4031 = vmatprep.subr.mxu0 0.0
  %4032 = vmatpush1.msra.mxu0 0.0
  %4033 = vmatprep.subr.mxu0 0.0
  %4034 = vmatpush1.msra.mxu0 0.0
  %4035 = vmatprep.subr.mxu0 0.0
  %4036 = vmatpush1.msra.mxu0 0.0
  %4037 = vmatprep.subr.mxu0 0.0
  %4038 = vmatpush1.msra.mxu0 0.0
  %4039 = vmatprep.subr.mxu0 0.0
  %4040 = vmatpush1.msra.mxu0 0.0
  %4041 = vmatprep.subr.mxu0 0.0
  %4042 = vmatpush1.msra.mxu0 0.0
  %4043 = vmatprep.subr.mxu0 0.0
  %4044 = vmatpush1.msra.mxu0 0.0
  %4045 = vmatprep.subr.mxu0 0.0
  %4046 = vmatpush1.msra.mxu0 0.0
  %4047 = vmatprep.subr.mxu0 0.0
  %4048 = vmatpush1.msra.mxu0 0.0
  %4049 = vmatprep.subr.mxu0 0.0
  %4050 = vmatpush1.msra.mxu0 0.0
  %4051 = vmatprep.subr.mxu0 0.0
  %4052 = vmatpush1.msra.mxu0 0.0
  %4053 = vmatprep.subr.mxu0 0.0
  %4054 = vmatpush1.msra.mxu0 0.0
  %4055 = vmatprep.subr.mxu0 0.0
  %4056 = vmatpush1.msra.mxu0 0.0
  %4057 = vmatprep.subr.mxu0 0.0
  %4058 = vmatpush1.msra.mxu0 0.0
  %4059 = vmatprep.subr.mxu0 0.0
  %4060 = vmatpush1.msra.mxu0 0.0
  %4061 = vmatprep.subr.mxu0 0.0
  %4062 = vmatpush1.msra.mxu0 0.0
  %4063 = vmatprep.subr.mxu0 0.0
  %4064 = vmatpush1.msra.mxu0 0.0
  %4065 = vmatprep.subr.mxu0 0.0
  %4066 = vmatpush1.msra.mxu0 0.0
  %4067 = vmatprep.subr.mxu0 0.0
  %4068 = vmatpush1.msra.mxu0 0.0
  %4069 = vmatprep.mubr.f32.mxu0 0.0
  %4070 = vmatmul.mubr.f32.gmra.mrb[0].mxu0 %v3931
  %v4071 = vpop.f32.mrb[0].mxu0
  %v4072 = vadd.f32 0.0, %v4071
  %v4073 = vpop.f32.mrb[0].mxu0
  %4074 = vmatprep.mubr.f32.mxu0 0.0
  %4075 = vmatmul.mubr.f32.gmra.mrb[0].mxu0 %v3934
  %v4076 = vpop.f32.mrb[0].mxu0
  %v4077 = vadd.f32 0.0, %v4076
  %v4078 = vpop.f32.mrb[0].mxu0
  %4079 = vmatprep.mubr.f32.mxu0 0.0
  %4080 = vmatmul.mubr.f32.gmra.mrb[0].mxu0 %v3937
  %v4081 = vpop.f32.mrb[0].mxu0
  %v4082 = vadd.f32 0.0, %v4081
  %v4083 = vpop.f32.mrb[0].mxu0
  %4084 = vmatprep.mubr.f32.mxu0 0.0
  %4085 = vmatmul.mubr.f32.gmra.mrb[0].mxu0 %v3940
  %v4086 = vpop.f32.mrb[0].mxu0
  %v4087 = vadd.f32 0.0, %v4086
  %v4088 = vpop.f32.mrb[0].mxu0
  %4089 = vmatprep.mubr.f32.mxu0 0.0
  %4090 = vmatmul.mubr.f32.gmra.mrb[0].mxu0 %v3943
  %v4091 = vpop.f32.mrb[0].mxu0
  %v4092 = vadd.f32 0.0, %v4091
  %v4093 = vpop.f32.mrb[0].mxu0
  %4094 = vmatprep.mubr.f32.mxu0 0.0
  %4095 = vmatmul.mubr.f32.gmra.mrb[0].mxu0 %v3946
  %v4096 = vpop.f32.mrb[0].mxu0
  %v4097 = vadd.f32 0.0, %v4096
  %v4098 = vpop.f32.mrb[0].mxu0
  %4099 = vmatprep.mubr.f32.mxu0 0.0
  %4100 = vmatmul.mubr.f32.gmra.mrb[0].mxu0 %v3949
  %v4101 = vpop.f32.mrb[0].mxu0
  %v4102 = vadd.f32 0.0, %v4101
  %v4103 = vpop.f32.mrb[0].mxu0
  %4104 = vmatprep.mubr.f32.mxu0 0.0
  %4105 = vmatmul.mubr.f32.gmra.mrb[0].mxu0 %v3952
  %v4106 = vpop.f32.mrb[0].mxu0
  %v4107 = vadd.f32 0.0, %v4106
  %v4108 = vpop.f32.mrb[0].mxu0
  %4109 = vmatprep.mubr.f32.mxu0 0.0
  %4110 = vmatmul.mubr.f32.gmra.mrb[0].mxu0 %v3955
  %v4111 = vpop.f32.mrb[0].mxu0
  %v4112 = vadd.f32 0.0, %v4111
  %v4113 = vpop.f32.mrb[0].mxu0
  %4114 = vmatprep.mubr.f32.mxu0 0.0
  %4115 = vmatmul.mubr.f32.gmra.mrb[0].mxu0 %v3958
  %v4116 = vpop.f32.mrb[0].mxu0
  %v4117 = vadd.f32 0.0, %v4116
  %v4118 = vpop.f32.mrb[0].mxu0
  %4119 = vmatprep.mubr.f32.mxu0 0.0
  %4120 = vmatmul.mubr.f32.gmra.mrb[0].mxu0 %v3961
  %v4121 = vpop.f32.mrb[0].mxu0
  %v4122 = vadd.f32 0.0, %v4121
  %v4123 = vpop.f32.mrb[0].mxu0
  %4124 = vmatprep.mubr.f32.mxu0 0.0
  %4125 = vmatmul.mubr.f32.gmra.mrb[0].mxu0 %v3964
  %v4126 = vpop.f32.mrb[0].mxu0
  %v4127 = vadd.f32 0.0, %v4126
  %v4128 = vpop.f32.mrb[0].mxu0
  %4129 = vmatprep.mubr.f32.mxu0 0.0
  %4130 = vmatmul.mubr.f32.gmra.mrb[0].mxu0 %v3967
  %v4131 = vpop.f32.mrb[0].mxu0
  %v4132 = vadd.f32 0.0, %v4131
  %v4133 = vpop.f32.mrb[0].mxu0
  %4134 = vmatprep.mubr.f32.mxu0 0.0
  %4135 = vmatmul.mubr.f32.gmra.mrb[0].mxu0 %v3970
  %v4136 = vpop.f32.mrb[0].mxu0
  %v4137 = vadd.f32 0.0, %v4136
  %v4138 = vpop.f32.mrb[0].mxu0
  %4139 = vmatprep.mubr.f32.mxu0 0.0
  %4140 = vmatmul.mubr.f32.gmra.mrb[0].mxu0 %v3973
  %v4141 = vpop.f32.mrb[0].mxu0
  %v4142 = vadd.f32 0.0, %v4141
  %v4143 = vpop.f32.mrb[0].mxu0
  %4144 = vmatprep.mubr.f32.mxu0 0.0
  %4145 = vmatmul.mubr.f32.gmra.mrb[0].mxu0 %v3976
  %v4146 = vpop.f32.mrb[0].mxu0
  %v4147 = vadd.f32 0.0, %v4146
  %v4148 = vpop.f32.mrb[0].mxu0
  %4149 = vmatprep.mubr.f32.mxu0 0.0
  %4150 = vmatmul.mubr.f32.gmra.mrb[0].mxu0 %v3979
  %v4151 = vpop.f32.mrb[0].mxu0
  %v4152 = vadd.f32 0.0, %v4151
  %v4153 = vpop.f32.mrb[0].mxu0
  %4154 = vmatprep.mubr.f32.mxu0 0.0
  %4155 = vmatmul.mubr.f32.gmra.mrb[0].mxu0 %v3982
  %v4156 = vpop.f32.mrb[0].mxu0
  %v4157 = vadd.f32 0.0, %v4156
  %v4158 = vpop.f32.mrb[0].mxu0
  %4159 = vmatprep.mubr.f32.mxu0 0.0
  %4160 = vmatmul.mubr.f32.gmra.mrb[0].mxu0 %v3985
  %v4161 = vpop.f32.mrb[0].mxu0
  %v4162 = vadd.f32 0.0, %v4161
  %v4163 = vpop.f32.mrb[0].mxu0
  %4164 = vmatprep.mubr.f32.mxu0 0.0
  %4165 = vmatmul.mubr.f32.gmra.mrb[0].mxu0 %v3988
  %v4166 = vpop.f32.mrb[0].mxu0
  %v4167 = vadd.f32 0.0, %v4166
  %v4168 = vpop.f32.mrb[0].mxu0
  %4169 = vmatprep.mubr.f32.mxu0 0.0
  %4170 = vmatmul.mubr.f32.gmra.mrb[0].mxu0 %v3991
  %v4171 = vpop.f32.mrb[0].mxu0
  %v4172 = vadd.f32 0.0, %v4171
  %v4173 = vpop.f32.mrb[0].mxu0
  %4174 = vmatprep.mubr.f32.mxu0 0.0
  %4175 = vmatmul.mubr.f32.gmra.mrb[0].mxu0 %v3994
  %v4176 = vpop.f32.mrb[0].mxu0
  %v4177 = vadd.f32 0.0, %v4176
  %v4178 = vpop.f32.mrb[0].mxu0
  %4179 = vmatprep.mubr.f32.mxu0 0.0
  %4180 = vmatmul.mubr.f32.gmra.mrb[0].mxu0 %v3997
  %v4181 = vpop.f32.mrb[0].mxu0
  %v4182 = vadd.f32 0.0, %v4181
  %v4183 = vpop.f32.mrb[0].mxu0
  %4184 = vmatprep.mubr.f32.mxu0 0.0
  %4185 = vmatmul.mubr.f32.gmra.mrb[0].mxu0 %v4000
  %v4186 = vpop.f32.mrb[0].mxu0
  %v4187 = vadd.f32 0.0, %v4186
  %v4188 = vpop.f32.mrb[0].mxu0
  %4189 = vmatprep.mubr.f32.mxu0 0.0
  %4190 = vmatmul.mubr.f32.gmra.mrb[0].mxu0 %v4003
  %v4191 = vpop.f32.mrb[0].mxu0
  %v4192 = vadd.f32 0.0, %v4191
  %v4193 = vpop.f32.mrb[0].mxu0
  %4194 = vdwg.mxu0
  %v4195 = vadd.f32 %v3878, %v4072
  %v4196 = vadd.f32 %v3879, %v4077
  %v4197 = vadd.f32 %v3880, %v4082
  %v4198 = vadd.f32 %v3881, %v4087
  %v4199 = vadd.f32 %v3882, %v4092
  %v4200 = vadd.f32 %v3883, %v4097
  %v4201 = vadd.f32 %v3884, %v4102
  %v4202 = vadd.f32 %v3885, %v4107
  %v4203 = vadd.f32 %v3886, %v4112
  %v4204 = vadd.f32 %v3887, %v4117
  %v4205 = vadd.f32 %v3888, %v4122
  %v4206 = vadd.f32 %v3889, %v4127
  %v4207 = vadd.f32 %v3890, %v4132
  %v4208 = vadd.f32 %v3891, %v4137
  %v4209 = vadd.f32 %v3892, %v4142
  %v4210 = vadd.f32 %v3893, %v4147
  %v4211 = vadd.f32 %v3894, %v4152
  %v4212 = vadd.f32 %v3895, %v4157
  %v4213 = vadd.f32 %v3896, %v4162
  %v4214 = vadd.f32 %v3897, %v4167
  %v4215 = vadd.f32 %v3898, %v4172
  %v4216 = vadd.f32 %v3899, %v4177
  %v4217 = vadd.f32 %v3900, %v4182
  %v4218 = vadd.f32 %v3901, %v4187
  %v4219 = vadd.f32 %v3902, %v4192
  %v4220 = vld [vmem:[#allocation3 + $0x15] sm:$0xff]
  %v4221 = vld [vmem:[#allocation3 + $0x1d] sm:$0xff]
  %v4222 = vld [vmem:[#allocation3 + $0x25] sm:$0xff]
  %v4223 = vld [vmem:[#allocation3 + $0x2d] sm:$0xff]
  %v4224 = vld [vmem:[#allocation3 + $0x35] sm:$0xff]
  %v4225 = vld [vmem:[#allocation3 + $0x3d] sm:$0xff]
  %v4226 = vld [vmem:[#allocation3 + $0x45] sm:$0xff]
  %v4227 = vld [vmem:[#allocation3 + $0x4d] sm:$0xff]
  %v4228 = vld [vmem:[#allocation3 + $0x55] sm:$0xff]
  %v4229 = vld [vmem:[#allocation3 + $0x5d] sm:$0xff]
  %v4230 = vld [vmem:[#allocation3 + $0x65] sm:$0xff]
  %v4231 = vld [vmem:[#allocation3 + $0x6d] sm:$0xff]
  %v4232 = vld [vmem:[#allocation3 + $0x75] sm:$0xff]
  %v4233 = vld [vmem:[#allocation3 + $0x7d] sm:$0xff]
  %v4234 = vld [vmem:[#allocation3 + $0x85] sm:$0xff]
  %v4235 = vld [vmem:[#allocation3 + $0x8d] sm:$0xff]
  %v4236 = vld [vmem:[#allocation3 + $0x95] sm:$0xff]
  %v4237 = vld [vmem:[#allocation3 + $0x9d] sm:$0xff]
  %v4238 = vld [vmem:[#allocation3 + $0xa5] sm:$0xff]
  %v4239 = vld [vmem:[#allocation3 + $0xad] sm:$0xff]
  %v4240 = vld [vmem:[#allocation3 + $0xb5] sm:$0xff]
  %v4241 = vld [vmem:[#allocation3 + $0xbd] sm:$0xff]
  %v4242 = vld [vmem:[#allocation3 + $0xc5] sm:$0xff]
  %v4243 = vld [vmem:[#allocation3 + $0xcd] sm:$0xff]
  %v4244 = vld [vmem:[#allocation3 + $0xd5] sm:$0xff]
  %s4245 = scalar_lea.vmem %s3, 56
  %v4246 = vld [vmem:[%s4245] sm:$0xff]
  %v4248 = vsel %vm2026, %v4220, 0
  %v4251 = vsel %vm2026, %v4221, 0
  %v4254 = vsel %vm2026, %v4222, 0
  %v4257 = vsel %vm2026, %v4223, 0
  %v4260 = vsel %vm2026, %v4224, 0
  %v4263 = vsel %vm2026, %v4225, 0
  %v4266 = vsel %vm2026, %v4226, 0
  %v4269 = vsel %vm2026, %v4227, 0
  %v4272 = vsel %vm2026, %v4228, 0
  %v4275 = vsel %vm2026, %v4229, 0
  %v4278 = vsel %vm2026, %v4230, 0
  %v4281 = vsel %vm2026, %v4231, 0
  %v4284 = vsel %vm2026, %v4232, 0
  %v4287 = vsel %vm2026, %v4233, 0
  %v4290 = vsel %vm2026, %v4234, 0
  %v4293 = vsel %vm2026, %v4235, 0
  %v4296 = vsel %vm2026, %v4236, 0
  %v4299 = vsel %vm2026, %v4237, 0
  %v4302 = vsel %vm2026, %v4238, 0
  %v4305 = vsel %vm2026, %v4239, 0
  %v4308 = vsel %vm2026, %v4240, 0
  %v4311 = vsel %vm2026, %v4241, 0
  %v4314 = vsel %vm2026, %v4242, 0
  %v4317 = vsel %vm2026, %v4243, 0
  %v4320 = vsel %vm2026, %v4244, 0
  %4322 = vmatprep.subr.mxu0 0.0
  %4323 = vmatpush1.msra.mxu0 %v4246
  %4324 = vmatprep.subr.mxu0 0.0
  %4325 = vmatpush1.msra.mxu0 0.0
  %4326 = vmatprep.subr.mxu0 0.0
  %4327 = vmatpush1.msra.mxu0 0.0
  %4328 = vmatprep.subr.mxu0 0.0
  %4329 = vmatpush1.msra.mxu0 0.0
  %4330 = vmatprep.subr.mxu0 0.0
  %4331 = vmatpush1.msra.mxu0 0.0
  %4332 = vmatprep.subr.mxu0 0.0
  %4333 = vmatpush1.msra.mxu0 0.0
  %4334 = vmatprep.subr.mxu0 0.0
  %4335 = vmatpush1.msra.mxu0 0.0
  %4336 = vmatprep.subr.mxu0 0.0
  %4337 = vmatpush1.msra.mxu0 0.0
  %4338 = vmatprep.subr.mxu0 0.0
  %4339 = vmatpush1.msra.mxu0 0.0
  %4340 = vmatprep.subr.mxu0 0.0
  %4341 = vmatpush1.msra.mxu0 0.0
  %4342 = vmatprep.subr.mxu0 0.0
  %4343 = vmatpush1.msra.mxu0 0.0
  %4344 = vmatprep.subr.mxu0 0.0
  %4345 = vmatpush1.msra.mxu0 0.0
  %4346 = vmatprep.subr.mxu0 0.0
  %4347 = vmatpush1.msra.mxu0 0.0
  %4348 = vmatprep.subr.mxu0 0.0
  %4349 = vmatpush1.msra.mxu0 0.0
  %4350 = vmatprep.subr.mxu0 0.0
  %4351 = vmatpush1.msra.mxu0 0.0
  %4352 = vmatprep.subr.mxu0 0.0
  %4353 = vmatpush1.msra.mxu0 0.0
  %4354 = vmatprep.subr.mxu0 0.0
  %4355 = vmatpush1.msra.mxu0 0.0
  %4356 = vmatprep.subr.mxu0 0.0
  %4357 = vmatpush1.msra.mxu0 0.0
  %4358 = vmatprep.subr.mxu0 0.0
  %4359 = vmatpush1.msra.mxu0 0.0
  %4360 = vmatprep.subr.mxu0 0.0
  %4361 = vmatpush1.msra.mxu0 0.0
  %4362 = vmatprep.subr.mxu0 0.0
  %4363 = vmatpush1.msra.mxu0 0.0
  %4364 = vmatprep.subr.mxu0 0.0
  %4365 = vmatpush1.msra.mxu0 0.0
  %4366 = vmatprep.subr.mxu0 0.0
  %4367 = vmatpush1.msra.mxu0 0.0
  %4368 = vmatprep.subr.mxu0 0.0
  %4369 = vmatpush1.msra.mxu0 0.0
  %4370 = vmatprep.subr.mxu0 0.0
  %4371 = vmatpush1.msra.mxu0 0.0
  %4372 = vmatprep.subr.mxu0 0.0
  %4373 = vmatpush1.msra.mxu0 0.0
  %4374 = vmatprep.subr.mxu0 0.0
  %4375 = vmatpush1.msra.mxu0 0.0
  %4376 = vmatprep.subr.mxu0 0.0
  %4377 = vmatpush1.msra.mxu0 0.0
  %4378 = vmatprep.subr.mxu0 0.0
  %4379 = vmatpush1.msra.mxu0 0.0
  %4380 = vmatprep.subr.mxu0 0.0
  %4381 = vmatpush1.msra.mxu0 0.0
  %4382 = vmatprep.subr.mxu0 0.0
  %4383 = vmatpush1.msra.mxu0 0.0
  %4384 = vmatprep.subr.mxu0 0.0
  %4385 = vmatpush1.msra.mxu0 0.0
  %4386 = vmatprep.mubr.f32.mxu0 0.0
  %4387 = vmatmul.mubr.f32.gmra.mrb[0].mxu0 %v4248
  %v4388 = vpop.f32.mrb[0].mxu0
  %v4389 = vadd.f32 0.0, %v4388
  %v4390 = vpop.f32.mrb[0].mxu0
  %4391 = vmatprep.mubr.f32.mxu0 0.0
  %4392 = vmatmul.mubr.f32.gmra.mrb[0].mxu0 %v4251
  %v4393 = vpop.f32.mrb[0].mxu0
  %v4394 = vadd.f32 0.0, %v4393
  %v4395 = vpop.f32.mrb[0].mxu0
  %4396 = vmatprep.mubr.f32.mxu0 0.0
  %4397 = vmatmul.mubr.f32.gmra.mrb[0].mxu0 %v4254
  %v4398 = vpop.f32.mrb[0].mxu0
  %v4399 = vadd.f32 0.0, %v4398
  %v4400 = vpop.f32.mrb[0].mxu0
  %4401 = vmatprep.mubr.f32.mxu0 0.0
  %4402 = vmatmul.mubr.f32.gmra.mrb[0].mxu0 %v4257
  %v4403 = vpop.f32.mrb[0].mxu0
  %v4404 = vadd.f32 0.0, %v4403
  %v4405 = vpop.f32.mrb[0].mxu0
  %4406 = vmatprep.mubr.f32.mxu0 0.0
  %4407 = vmatmul.mubr.f32.gmra.mrb[0].mxu0 %v4260
  %v4408 = vpop.f32.mrb[0].mxu0
  %v4409 = vadd.f32 0.0, %v4408
  %v4410 = vpop.f32.mrb[0].mxu0
  %4411 = vmatprep.mubr.f32.mxu0 0.0
  %4412 = vmatmul.mubr.f32.gmra.mrb[0].mxu0 %v4263
  %v4413 = vpop.f32.mrb[0].mxu0
  %v4414 = vadd.f32 0.0, %v4413
  %v4415 = vpop.f32.mrb[0].mxu0
  %4416 = vmatprep.mubr.f32.mxu0 0.0
  %4417 = vmatmul.mubr.f32.gmra.mrb[0].mxu0 %v4266
  %v4418 = vpop.f32.mrb[0].mxu0
  %v4419 = vadd.f32 0.0, %v4418
  %v4420 = vpop.f32.mrb[0].mxu0
  %4421 = vmatprep.mubr.f32.mxu0 0.0
  %4422 = vmatmul.mubr.f32.gmra.mrb[0].mxu0 %v4269
  %v4423 = vpop.f32.mrb[0].mxu0
  %v4424 = vadd.f32 0.0, %v4423
  %v4425 = vpop.f32.mrb[0].mxu0
  %4426 = vmatprep.mubr.f32.mxu0 0.0
  %4427 = vmatmul.mubr.f32.gmra.mrb[0].mxu0 %v4272
  %v4428 = vpop.f32.mrb[0].mxu0
  %v4429 = vadd.f32 0.0, %v4428
  %v4430 = vpop.f32.mrb[0].mxu0
  %4431 = vmatprep.mubr.f32.mxu0 0.0
  %4432 = vmatmul.mubr.f32.gmra.mrb[0].mxu0 %v4275
  %v4433 = vpop.f32.mrb[0].mxu0
  %v4434 = vadd.f32 0.0, %v4433
  %v4435 = vpop.f32.mrb[0].mxu0
  %4436 = vmatprep.mubr.f32.mxu0 0.0
  %4437 = vmatmul.mubr.f32.gmra.mrb[0].mxu0 %v4278
  %v4438 = vpop.f32.mrb[0].mxu0
  %v4439 = vadd.f32 0.0, %v4438
  %v4440 = vpop.f32.mrb[0].mxu0
  %4441 = vmatprep.mubr.f32.mxu0 0.0
  %4442 = vmatmul.mubr.f32.gmra.mrb[0].mxu0 %v4281
  %v4443 = vpop.f32.mrb[0].mxu0
  %v4444 = vadd.f32 0.0, %v4443
  %v4445 = vpop.f32.mrb[0].mxu0
  %4446 = vmatprep.mubr.f32.mxu0 0.0
  %4447 = vmatmul.mubr.f32.gmra.mrb[0].mxu0 %v4284
  %v4448 = vpop.f32.mrb[0].mxu0
  %v4449 = vadd.f32 0.0, %v4448
  %v4450 = vpop.f32.mrb[0].mxu0
  %4451 = vmatprep.mubr.f32.mxu0 0.0
  %4452 = vmatmul.mubr.f32.gmra.mrb[0].mxu0 %v4287
  %v4453 = vpop.f32.mrb[0].mxu0
  %v4454 = vadd.f32 0.0, %v4453
  %v4455 = vpop.f32.mrb[0].mxu0
  %4456 = vmatprep.mubr.f32.mxu0 0.0
  %4457 = vmatmul.mubr.f32.gmra.mrb[0].mxu0 %v4290
  %v4458 = vpop.f32.mrb[0].mxu0
  %v4459 = vadd.f32 0.0, %v4458
  %v4460 = vpop.f32.mrb[0].mxu0
  %4461 = vmatprep.mubr.f32.mxu0 0.0
  %4462 = vmatmul.mubr.f32.gmra.mrb[0].mxu0 %v4293
  %v4463 = vpop.f32.mrb[0].mxu0
  %v4464 = vadd.f32 0.0, %v4463
  %v4465 = vpop.f32.mrb[0].mxu0
  %4466 = vmatprep.mubr.f32.mxu0 0.0
  %4467 = vmatmul.mubr.f32.gmra.mrb[0].mxu0 %v4296
  %v4468 = vpop.f32.mrb[0].mxu0
  %v4469 = vadd.f32 0.0, %v4468
  %v4470 = vpop.f32.mrb[0].mxu0
  %4471 = vmatprep.mubr.f32.mxu0 0.0
  %4472 = vmatmul.mubr.f32.gmra.mrb[0].mxu0 %v4299
  %v4473 = vpop.f32.mrb[0].mxu0
  %v4474 = vadd.f32 0.0, %v4473
  %v4475 = vpop.f32.mrb[0].mxu0
  %4476 = vmatprep.mubr.f32.mxu0 0.0
  %4477 = vmatmul.mubr.f32.gmra.mrb[0].mxu0 %v4302
  %v4478 = vpop.f32.mrb[0].mxu0
  %v4479 = vadd.f32 0.0, %v4478
  %v4480 = vpop.f32.mrb[0].mxu0
  %4481 = vmatprep.mubr.f32.mxu0 0.0
  %4482 = vmatmul.mubr.f32.gmra.mrb[0].mxu0 %v4305
  %v4483 = vpop.f32.mrb[0].mxu0
  %v4484 = vadd.f32 0.0, %v4483
  %v4485 = vpop.f32.mrb[0].mxu0
  %4486 = vmatprep.mubr.f32.mxu0 0.0
  %4487 = vmatmul.mubr.f32.gmra.mrb[0].mxu0 %v4308
  %v4488 = vpop.f32.mrb[0].mxu0
  %v4489 = vadd.f32 0.0, %v4488
  %v4490 = vpop.f32.mrb[0].mxu0
  %4491 = vmatprep.mubr.f32.mxu0 0.0
  %4492 = vmatmul.mubr.f32.gmra.mrb[0].mxu0 %v4311
  %v4493 = vpop.f32.mrb[0].mxu0
  %v4494 = vadd.f32 0.0, %v4493
  %v4495 = vpop.f32.mrb[0].mxu0
  %4496 = vmatprep.mubr.f32.mxu0 0.0
  %4497 = vmatmul.mubr.f32.gmra.mrb[0].mxu0 %v4314
  %v4498 = vpop.f32.mrb[0].mxu0
  %v4499 = vadd.f32 0.0, %v4498
  %v4500 = vpop.f32.mrb[0].mxu0
  %4501 = vmatprep.mubr.f32.mxu0 0.0
  %4502 = vmatmul.mubr.f32.gmra.mrb[0].mxu0 %v4317
  %v4503 = vpop.f32.mrb[0].mxu0
  %v4504 = vadd.f32 0.0, %v4503
  %v4505 = vpop.f32.mrb[0].mxu0
  %4506 = vmatprep.mubr.f32.mxu0 0.0
  %4507 = vmatmul.mubr.f32.gmra.mrb[0].mxu0 %v4320
  %v4508 = vpop.f32.mrb[0].mxu0
  %v4509 = vadd.f32 0.0, %v4508
  %v4510 = vpop.f32.mrb[0].mxu0
  %4511 = vdwg.mxu0
  %v4512 = vadd.f32 %v4195, %v4389
  %v4513 = vadd.f32 %v4196, %v4394
  %v4514 = vadd.f32 %v4197, %v4399
  %v4515 = vadd.f32 %v4198, %v4404
  %v4516 = vadd.f32 %v4199, %v4409
  %v4517 = vadd.f32 %v4200, %v4414
  %v4518 = vadd.f32 %v4201, %v4419
  %v4519 = vadd.f32 %v4202, %v4424
  %v4520 = vadd.f32 %v4203, %v4429
  %v4521 = vadd.f32 %v4204, %v4434
  %v4522 = vadd.f32 %v4205, %v4439
  %v4523 = vadd.f32 %v4206, %v4444
  %v4524 = vadd.f32 %v4207, %v4449
  %v4525 = vadd.f32 %v4208, %v4454
  %v4526 = vadd.f32 %v4209, %v4459
  %v4527 = vadd.f32 %v4210, %v4464
  %v4528 = vadd.f32 %v4211, %v4469
  %v4529 = vadd.f32 %v4212, %v4474
  %v4530 = vadd.f32 %v4213, %v4479
  %v4531 = vadd.f32 %v4214, %v4484
  %v4532 = vadd.f32 %v4215, %v4489
  %v4533 = vadd.f32 %v4216, %v4494
  %v4534 = vadd.f32 %v4217, %v4499
  %v4535 = vadd.f32 %v4218, %v4504
  %v4536 = vadd.f32 %v4219, %v4509
  %v4537 = vld [vmem:[#allocation3 + $0x16] sm:$0xff]
  %v4538 = vld [vmem:[#allocation3 + $0x1e] sm:$0xff]
  %v4539 = vld [vmem:[#allocation3 + $0x26] sm:$0xff]
  %v4540 = vld [vmem:[#allocation3 + $0x2e] sm:$0xff]
  %v4541 = vld [vmem:[#allocation3 + $0x36] sm:$0xff]
  %v4542 = vld [vmem:[#allocation3 + $0x3e] sm:$0xff]
  %v4543 = vld [vmem:[#allocation3 + $0x46] sm:$0xff]
  %v4544 = vld [vmem:[#allocation3 + $0x4e] sm:$0xff]
  %v4545 = vld [vmem:[#allocation3 + $0x56] sm:$0xff]
  %v4546 = vld [vmem:[#allocation3 + $0x5e] sm:$0xff]
  %v4547 = vld [vmem:[#allocation3 + $0x66] sm:$0xff]
  %v4548 = vld [vmem:[#allocation3 + $0x6e] sm:$0xff]
  %v4549 = vld [vmem:[#allocation3 + $0x76] sm:$0xff]
  %v4550 = vld [vmem:[#allocation3 + $0x7e] sm:$0xff]
  %v4551 = vld [vmem:[#allocation3 + $0x86] sm:$0xff]
  %v4552 = vld [vmem:[#allocation3 + $0x8e] sm:$0xff]
  %v4553 = vld [vmem:[#allocation3 + $0x96] sm:$0xff]
  %v4554 = vld [vmem:[#allocation3 + $0x9e] sm:$0xff]
  %v4555 = vld [vmem:[#allocation3 + $0xa6] sm:$0xff]
  %v4556 = vld [vmem:[#allocation3 + $0xae] sm:$0xff]
  %v4557 = vld [vmem:[#allocation3 + $0xb6] sm:$0xff]
  %v4558 = vld [vmem:[#allocation3 + $0xbe] sm:$0xff]
  %v4559 = vld [vmem:[#allocation3 + $0xc6] sm:$0xff]
  %v4560 = vld [vmem:[#allocation3 + $0xce] sm:$0xff]
  %v4561 = vld [vmem:[#allocation3 + $0xd6] sm:$0xff]
  %s4562 = scalar_lea.vmem %s3, 64
  %v4563 = vld [vmem:[%s4562] sm:$0xff]
  %v4565 = vsel %vm2026, %v4537, 0
  %v4568 = vsel %vm2026, %v4538, 0
  %v4571 = vsel %vm2026, %v4539, 0
  %v4574 = vsel %vm2026, %v4540, 0
  %v4577 = vsel %vm2026, %v4541, 0
  %v4580 = vsel %vm2026, %v4542, 0
  %v4583 = vsel %vm2026, %v4543, 0
  %v4586 = vsel %vm2026, %v4544, 0
  %v4589 = vsel %vm2026, %v4545, 0
  %v4592 = vsel %vm2026, %v4546, 0
  %v4595 = vsel %vm2026, %v4547, 0
  %v4598 = vsel %vm2026, %v4548, 0
  %v4601 = vsel %vm2026, %v4549, 0
  %v4604 = vsel %vm2026, %v4550, 0
  %v4607 = vsel %vm2026, %v4551, 0
  %v4610 = vsel %vm2026, %v4552, 0
  %v4613 = vsel %vm2026, %v4553, 0
  %v4616 = vsel %vm2026, %v4554, 0
  %v4619 = vsel %vm2026, %v4555, 0
  %v4622 = vsel %vm2026, %v4556, 0
  %v4625 = vsel %vm2026, %v4557, 0
  %v4628 = vsel %vm2026, %v4558, 0
  %v4631 = vsel %vm2026, %v4559, 0
  %v4634 = vsel %vm2026, %v4560, 0
  %v4637 = vsel %vm2026, %v4561, 0
  %4639 = vmatprep.subr.mxu0 0.0
  %4640 = vmatpush1.msra.mxu0 %v4563
  %4641 = vmatprep.subr.mxu0 0.0
  %4642 = vmatpush1.msra.mxu0 0.0
  %4643 = vmatprep.subr.mxu0 0.0
  %4644 = vmatpush1.msra.mxu0 0.0
  %4645 = vmatprep.subr.mxu0 0.0
  %4646 = vmatpush1.msra.mxu0 0.0
  %4647 = vmatprep.subr.mxu0 0.0
  %4648 = vmatpush1.msra.mxu0 0.0
  %4649 = vmatprep.subr.mxu0 0.0
  %4650 = vmatpush1.msra.mxu0 0.0
  %4651 = vmatprep.subr.mxu0 0.0
  %4652 = vmatpush1.msra.mxu0 0.0
  %4653 = vmatprep.subr.mxu0 0.0
  %4654 = vmatpush1.msra.mxu0 0.0
  %4655 = vmatprep.subr.mxu0 0.0
  %4656 = vmatpush1.msra.mxu0 0.0
  %4657 = vmatprep.subr.mxu0 0.0
  %4658 = vmatpush1.msra.mxu0 0.0
  %4659 = vmatprep.subr.mxu0 0.0
  %4660 = vmatpush1.msra.mxu0 0.0
  %4661 = vmatprep.subr.mxu0 0.0
  %4662 = vmatpush1.msra.mxu0 0.0
  %4663 = vmatprep.subr.mxu0 0.0
  %4664 = vmatpush1.msra.mxu0 0.0
  %4665 = vmatprep.subr.mxu0 0.0
  %4666 = vmatpush1.msra.mxu0 0.0
  %4667 = vmatprep.subr.mxu0 0.0
  %4668 = vmatpush1.msra.mxu0 0.0
  %4669 = vmatprep.subr.mxu0 0.0
  %4670 = vmatpush1.msra.mxu0 0.0
  %4671 = vmatprep.subr.mxu0 0.0
  %4672 = vmatpush1.msra.mxu0 0.0
  %4673 = vmatprep.subr.mxu0 0.0
  %4674 = vmatpush1.msra.mxu0 0.0
  %4675 = vmatprep.subr.mxu0 0.0
  %4676 = vmatpush1.msra.mxu0 0.0
  %4677 = vmatprep.subr.mxu0 0.0
  %4678 = vmatpush1.msra.mxu0 0.0
  %4679 = vmatprep.subr.mxu0 0.0
  %4680 = vmatpush1.msra.mxu0 0.0
  %4681 = vmatprep.subr.mxu0 0.0
  %4682 = vmatpush1.msra.mxu0 0.0
  %4683 = vmatprep.subr.mxu0 0.0
  %4684 = vmatpush1.msra.mxu0 0.0
  %4685 = vmatprep.subr.mxu0 0.0
  %4686 = vmatpush1.msra.mxu0 0.0
  %4687 = vmatprep.subr.mxu0 0.0
  %4688 = vmatpush1.msra.mxu0 0.0
  %4689 = vmatprep.subr.mxu0 0.0
  %4690 = vmatpush1.msra.mxu0 0.0
  %4691 = vmatprep.subr.mxu0 0.0
  %4692 = vmatpush1.msra.mxu0 0.0
  %4693 = vmatprep.subr.mxu0 0.0
  %4694 = vmatpush1.msra.mxu0 0.0
  %4695 = vmatprep.subr.mxu0 0.0
  %4696 = vmatpush1.msra.mxu0 0.0
  %4697 = vmatprep.subr.mxu0 0.0
  %4698 = vmatpush1.msra.mxu0 0.0
  %4699 = vmatprep.subr.mxu0 0.0
  %4700 = vmatpush1.msra.mxu0 0.0
  %4701 = vmatprep.subr.mxu0 0.0
  %4702 = vmatpush1.msra.mxu0 0.0
  %4703 = vmatprep.mubr.f32.mxu0 0.0
  %4704 = vmatmul.mubr.f32.gmra.mrb[0].mxu0 %v4565
  %v4705 = vpop.f32.mrb[0].mxu0
  %v4706 = vadd.f32 0.0, %v4705
  %v4707 = vpop.f32.mrb[0].mxu0
  %4708 = vmatprep.mubr.f32.mxu0 0.0
  %4709 = vmatmul.mubr.f32.gmra.mrb[0].mxu0 %v4568
  %v4710 = vpop.f32.mrb[0].mxu0
  %v4711 = vadd.f32 0.0, %v4710
  %v4712 = vpop.f32.mrb[0].mxu0
  %4713 = vmatprep.mubr.f32.mxu0 0.0
  %4714 = vmatmul.mubr.f32.gmra.mrb[0].mxu0 %v4571
  %v4715 = vpop.f32.mrb[0].mxu0
  %v4716 = vadd.f32 0.0, %v4715
  %v4717 = vpop.f32.mrb[0].mxu0
  %4718 = vmatprep.mubr.f32.mxu0 0.0
  %4719 = vmatmul.mubr.f32.gmra.mrb[0].mxu0 %v4574
  %v4720 = vpop.f32.mrb[0].mxu0
  %v4721 = vadd.f32 0.0, %v4720
  %v4722 = vpop.f32.mrb[0].mxu0
  %4723 = vmatprep.mubr.f32.mxu0 0.0
  %4724 = vmatmul.mubr.f32.gmra.mrb[0].mxu0 %v4577
  %v4725 = vpop.f32.mrb[0].mxu0
  %v4726 = vadd.f32 0.0, %v4725
  %v4727 = vpop.f32.mrb[0].mxu0
  %4728 = vmatprep.mubr.f32.mxu0 0.0
  %4729 = vmatmul.mubr.f32.gmra.mrb[0].mxu0 %v4580
  %v4730 = vpop.f32.mrb[0].mxu0
  %v4731 = vadd.f32 0.0, %v4730
  %v4732 = vpop.f32.mrb[0].mxu0
  %4733 = vmatprep.mubr.f32.mxu0 0.0
  %4734 = vmatmul.mubr.f32.gmra.mrb[0].mxu0 %v4583
  %v4735 = vpop.f32.mrb[0].mxu0
  %v4736 = vadd.f32 0.0, %v4735
  %v4737 = vpop.f32.mrb[0].mxu0
  %4738 = vmatprep.mubr.f32.mxu0 0.0
  %4739 = vmatmul.mubr.f32.gmra.mrb[0].mxu0 %v4586
  %v4740 = vpop.f32.mrb[0].mxu0
  %v4741 = vadd.f32 0.0, %v4740
  %v4742 = vpop.f32.mrb[0].mxu0
  %4743 = vmatprep.mubr.f32.mxu0 0.0
  %4744 = vmatmul.mubr.f32.gmra.mrb[0].mxu0 %v4589
  %v4745 = vpop.f32.mrb[0].mxu0
  %v4746 = vadd.f32 0.0, %v4745
  %v4747 = vpop.f32.mrb[0].mxu0
  %4748 = vmatprep.mubr.f32.mxu0 0.0
  %4749 = vmatmul.mubr.f32.gmra.mrb[0].mxu0 %v4592
  %v4750 = vpop.f32.mrb[0].mxu0
  %v4751 = vadd.f32 0.0, %v4750
  %v4752 = vpop.f32.mrb[0].mxu0
  %4753 = vmatprep.mubr.f32.mxu0 0.0
  %4754 = vmatmul.mubr.f32.gmra.mrb[0].mxu0 %v4595
  %v4755 = vpop.f32.mrb[0].mxu0
  %v4756 = vadd.f32 0.0, %v4755
  %v4757 = vpop.f32.mrb[0].mxu0
  %4758 = vmatprep.mubr.f32.mxu0 0.0
  %4759 = vmatmul.mubr.f32.gmra.mrb[0].mxu0 %v4598
  %v4760 = vpop.f32.mrb[0].mxu0
  %v4761 = vadd.f32 0.0, %v4760
  %v4762 = vpop.f32.mrb[0].mxu0
  %4763 = vmatprep.mubr.f32.mxu0 0.0
  %4764 = vmatmul.mubr.f32.gmra.mrb[0].mxu0 %v4601
  %v4765 = vpop.f32.mrb[0].mxu0
  %v4766 = vadd.f32 0.0, %v4765
  %v4767 = vpop.f32.mrb[0].mxu0
  %4768 = vmatprep.mubr.f32.mxu0 0.0
  %4769 = vmatmul.mubr.f32.gmra.mrb[0].mxu0 %v4604
  %v4770 = vpop.f32.mrb[0].mxu0
  %v4771 = vadd.f32 0.0, %v4770
  %v4772 = vpop.f32.mrb[0].mxu0
  %4773 = vmatprep.mubr.f32.mxu0 0.0
  %4774 = vmatmul.mubr.f32.gmra.mrb[0].mxu0 %v4607
  %v4775 = vpop.f32.mrb[0].mxu0
  %v4776 = vadd.f32 0.0, %v4775
  %v4777 = vpop.f32.mrb[0].mxu0
  %4778 = vmatprep.mubr.f32.mxu0 0.0
  %4779 = vmatmul.mubr.f32.gmra.mrb[0].mxu0 %v4610
  %v4780 = vpop.f32.mrb[0].mxu0
  %v4781 = vadd.f32 0.0, %v4780
  %v4782 = vpop.f32.mrb[0].mxu0
  %4783 = vmatprep.mubr.f32.mxu0 0.0
  %4784 = vmatmul.mubr.f32.gmra.mrb[0].mxu0 %v4613
  %v4785 = vpop.f32.mrb[0].mxu0
  %v4786 = vadd.f32 0.0, %v4785
  %v4787 = vpop.f32.mrb[0].mxu0
  %4788 = vmatprep.mubr.f32.mxu0 0.0
  %4789 = vmatmul.mubr.f32.gmra.mrb[0].mxu0 %v4616
  %v4790 = vpop.f32.mrb[0].mxu0
  %v4791 = vadd.f32 0.0, %v4790
  %v4792 = vpop.f32.mrb[0].mxu0
  %4793 = vmatprep.mubr.f32.mxu0 0.0
  %4794 = vmatmul.mubr.f32.gmra.mrb[0].mxu0 %v4619
  %v4795 = vpop.f32.mrb[0].mxu0
  %v4796 = vadd.f32 0.0, %v4795
  %v4797 = vpop.f32.mrb[0].mxu0
  %4798 = vmatprep.mubr.f32.mxu0 0.0
  %4799 = vmatmul.mubr.f32.gmra.mrb[0].mxu0 %v4622
  %v4800 = vpop.f32.mrb[0].mxu0
  %v4801 = vadd.f32 0.0, %v4800
  %v4802 = vpop.f32.mrb[0].mxu0
  %4803 = vmatprep.mubr.f32.mxu0 0.0
  %4804 = vmatmul.mubr.f32.gmra.mrb[0].mxu0 %v4625
  %v4805 = vpop.f32.mrb[0].mxu0
  %v4806 = vadd.f32 0.0, %v4805
  %v4807 = vpop.f32.mrb[0].mxu0
  %4808 = vmatprep.mubr.f32.mxu0 0.0
  %4809 = vmatmul.mubr.f32.gmra.mrb[0].mxu0 %v4628
  %v4810 = vpop.f32.mrb[0].mxu0
  %v4811 = vadd.f32 0.0, %v4810
  %v4812 = vpop.f32.mrb[0].mxu0
  %4813 = vmatprep.mubr.f32.mxu0 0.0
  %4814 = vmatmul.mubr.f32.gmra.mrb[0].mxu0 %v4631
  %v4815 = vpop.f32.mrb[0].mxu0
  %v4816 = vadd.f32 0.0, %v4815
  %v4817 = vpop.f32.mrb[0].mxu0
  %4818 = vmatprep.mubr.f32.mxu0 0.0
  %4819 = vmatmul.mubr.f32.gmra.mrb[0].mxu0 %v4634
  %v4820 = vpop.f32.mrb[0].mxu0
  %v4821 = vadd.f32 0.0, %v4820
  %v4822 = vpop.f32.mrb[0].mxu0
  %4823 = vmatprep.mubr.f32.mxu0 0.0
  %4824 = vmatmul.mubr.f32.gmra.mrb[0].mxu0 %v4637
  %v4825 = vpop.f32.mrb[0].mxu0
  %v4826 = vadd.f32 0.0, %v4825
  %v4827 = vpop.f32.mrb[0].mxu0
  %4828 = vdwg.mxu0
  %v4829 = vadd.f32 %v4512, %v4706
  %v4830 = vadd.f32 %v4513, %v4711
  %v4831 = vadd.f32 %v4514, %v4716
  %v4832 = vadd.f32 %v4515, %v4721
  %v4833 = vadd.f32 %v4516, %v4726
  %v4834 = vadd.f32 %v4517, %v4731
  %v4835 = vadd.f32 %v4518, %v4736
  %v4836 = vadd.f32 %v4519, %v4741
  %v4837 = vadd.f32 %v4520, %v4746
  %v4838 = vadd.f32 %v4521, %v4751
  %v4839 = vadd.f32 %v4522, %v4756
  %v4840 = vadd.f32 %v4523, %v4761
  %v4841 = vadd.f32 %v4524, %v4766
  %v4842 = vadd.f32 %v4525, %v4771
  %v4843 = vadd.f32 %v4526, %v4776
  %v4844 = vadd.f32 %v4527, %v4781
  %v4845 = vadd.f32 %v4528, %v4786
  %v4846 = vadd.f32 %v4529, %v4791
  %v4847 = vadd.f32 %v4530, %v4796
  %v4848 = vadd.f32 %v4531, %v4801
  %v4849 = vadd.f32 %v4532, %v4806
  %v4850 = vadd.f32 %v4533, %v4811
  %v4851 = vadd.f32 %v4534, %v4816
  %v4852 = vadd.f32 %v4535, %v4821
  %v4853 = vadd.f32 %v4536, %v4826
  %v4854 = vld [vmem:[%s4] sm:$0x1]
  %v4856 = vlaneseq
  %v4857 = vshrl.u32 %v4856, 7
  %v4858 = vsub.s32 0, %v4857
  %v4859 = vrot.slane %v4854, %v4858
  %v4861 = vadd.f32 %v4829, %v4859
  %v4862 = vadd.f32 %v4830, %v4859
  %v4863 = vadd.f32 %v4831, %v4859
  %v4864 = vadd.f32 %v4832, %v4859
  %v4865 = vadd.f32 %v4833, %v4859
  %v4866 = vadd.f32 %v4834, %v4859
  %v4867 = vadd.f32 %v4835, %v4859
  %v4868 = vadd.f32 %v4836, %v4859
  %v4869 = vadd.f32 %v4837, %v4859
  %v4870 = vadd.f32 %v4838, %v4859
  %v4871 = vadd.f32 %v4839, %v4859
  %v4872 = vadd.f32 %v4840, %v4859
  %v4873 = vadd.f32 %v4841, %v4859
  %v4874 = vadd.f32 %v4842, %v4859
  %v4875 = vadd.f32 %v4843, %v4859
  %v4876 = vadd.f32 %v4844, %v4859
  %v4877 = vadd.f32 %v4845, %v4859
  %v4878 = vadd.f32 %v4846, %v4859
  %v4879 = vadd.f32 %v4847, %v4859
  %v4880 = vadd.f32 %v4848, %v4859
  %v4881 = vadd.f32 %v4849, %v4859
  %v4882 = vadd.f32 %v4850, %v4859
  %v4883 = vadd.f32 %v4851, %v4859
  %v4884 = vadd.f32 %v4852, %v4859
  %v4885 = vadd.f32 %v4853, %v4859
  %v4886 = vmax.f32 %v4861, 0.0
  %v4887 = vmax.f32 %v4862, 0.0
  %v4888 = vmax.f32 %v4863, 0.0
  %v4889 = vmax.f32 %v4864, 0.0
  %v4890 = vmax.f32 %v4865, 0.0
  %v4891 = vmax.f32 %v4866, 0.0
  %v4892 = vmax.f32 %v4867, 0.0
  %v4893 = vmax.f32 %v4868, 0.0
  %v4894 = vmax.f32 %v4869, 0.0
  %v4895 = vmax.f32 %v4870, 0.0
  %v4896 = vmax.f32 %v4871, 0.0
  %v4897 = vmax.f32 %v4872, 0.0
  %v4898 = vmax.f32 %v4873, 0.0
  %v4899 = vmax.f32 %v4874, 0.0
  %v4900 = vmax.f32 %v4875, 0.0
  %v4901 = vmax.f32 %v4876, 0.0
  %v4902 = vmax.f32 %v4877, 0.0
  %v4903 = vmax.f32 %v4878, 0.0
  %v4904 = vmax.f32 %v4879, 0.0
  %v4905 = vmax.f32 %v4880, 0.0
  %v4906 = vmax.f32 %v4881, 0.0
  %v4907 = vmax.f32 %v4882, 0.0
  %v4908 = vmax.f32 %v4883, 0.0
  %v4909 = vmax.f32 %v4884, 0.0
  %v4910 = vmax.f32 %v4885, 0.0
  %4911 = vst.msk [vmem:[%s6] sm:$0xff] %vm2026, %v4886
  %4912 = vst.msk [vmem:[%s6 + $0x8] sm:$0xff] %vm2026, %v4887
  %4913 = vst.msk [vmem:[%s6 + $0x10] sm:$0xff] %vm2026, %v4888
  %4914 = vst.msk [vmem:[%s6 + $0x18] sm:$0xff] %vm2026, %v4889
  %4915 = vst.msk [vmem:[%s6 + $0x20] sm:$0xff] %vm2026, %v4890
  %4916 = vst.msk [vmem:[%s6 + $0x28] sm:$0xff] %vm2026, %v4891
  %4917 = vst.msk [vmem:[%s6 + $0x30] sm:$0xff] %vm2026, %v4892
  %4918 = vst.msk [vmem:[%s6 + $0x38] sm:$0xff] %vm2026, %v4893
  %4919 = vst.msk [vmem:[%s6 + $0x40] sm:$0xff] %vm2026, %v4894
  %4920 = vst.msk [vmem:[%s6 + $0x48] sm:$0xff] %vm2026, %v4895
  %4921 = vst.msk [vmem:[%s6 + $0x50] sm:$0xff] %vm2026, %v4896
  %4922 = vst.msk [vmem:[%s6 + $0x58] sm:$0xff] %vm2026, %v4897
  %4923 = vst.msk [vmem:[%s6 + $0x60] sm:$0xff] %vm2026, %v4898
  %4924 = vst.msk [vmem:[%s6 + $0x68] sm:$0xff] %vm2026, %v4899
  %4925 = vst.msk [vmem:[%s6 + $0x70] sm:$0xff] %vm2026, %v4900
  %4926 = vst.msk [vmem:[%s6 + $0x78] sm:$0xff] %vm2026, %v4901
  %4927 = vst.msk [vmem:[%s6 + $0x80] sm:$0xff] %vm2026, %v4902
  %4928 = vst.msk [vmem:[%s6 + $0x88] sm:$0xff] %vm2026, %v4903
  %4929 = vst.msk [vmem:[%s6 + $0x90] sm:$0xff] %vm2026, %v4904
  %4930 = vst.msk [vmem:[%s6 + $0x98] sm:$0xff] %vm2026, %v4905
  %4931 = vst.msk [vmem:[%s6 + $0xa0] sm:$0xff] %vm2026, %v4906
  %4932 = vst.msk [vmem:[%s6 + $0xa8] sm:$0xff] %vm2026, %v4907
  %4933 = vst.msk [vmem:[%s6 + $0xb0] sm:$0xff] %vm2026, %v4908
  %4934 = vst.msk [vmem:[%s6 + $0xb8] sm:$0xff] %vm2026, %v4909
  %4935 = vst.msk [vmem:[%s6 + $0xc0] sm:$0xff] %vm2026, %v4910
  // Predicated region
  $region30: #{tpu_custom_call.1} parent=0 // pred_check
    _
  $region31: #{tpu_custom_call.1} parent=0 // pred_check_branch
    %4937 = sbr.rel (0) target = $region33
  $region32: #{tpu_custom_call.1} parent=0 // pred_region
    _
  $region33: #{tpu_custom_call.1} parent=0 // pred_fallthru
    _
  // Predicated region
  $region34: #{tpu_custom_call.1} parent=0 // pred_check
    _
  $region35: #{tpu_custom_call.1} parent=0 // pred_check_branch
    %4939 = sbr.rel (0) target = $region37
  $region36: #{tpu_custom_call.1} parent=0 // pred_region
    _
  $region37: #{tpu_custom_call.1} parent=0 // pred_fallthru
    _

</llo_original>
